<compile_context>
chip_gen: v7x
topology: tpu7x:2x2x1
jax: 0.10.0
libtpu: 0.0.40
codegen_flags: <defaults>
</compile_context>

<pallas_src>
import functools
import numpy as np
import jax
import jax.numpy as jnp
from jax import lax
from jax.experimental import pallas as pl
from jax.experimental.pallas import tpu as pltpu

LN_EPS = 1e-5  # nn.LayerNorm default


# ----------------------------- kernel helpers --------------------------------

def _layer_norm(x, gamma, beta):
    mean = jnp.mean(x, axis=-1, keepdims=True)
    cent = x - mean
    var = jnp.mean(cent * cent, axis=-1, keepdims=True)
    return cent * lax.rsqrt(var + LN_EPS) * gamma + beta


# ------------------------------- fused kernel --------------------------------

def _transformer_kernel(x_ref, wqkv_ref, bqkv_ref, wo_ref, bo_ref,
                        g1_ref, be1_ref, w1_ref, b1_ref, w2_ref, b2_ref,
                        g2_ref, be2_ref, wfc_ref, bfc_ref, out_ref,
                        *, num_head, num_encoder, scale):
    S, D = x_ref.shape[1], x_ref.shape[2]
    H = num_head
    dh = D // H
    sh = S // H                      # sequence rows owned by each raw-view head
    Hf = w1_ref.shape[1]

    x = x_ref[0]                     # (S, D) activations for this batch element

    # hoist loop-invariant broadcasts out of the encoder-layer loop
    bqkv = jnp.broadcast_to(bqkv_ref[...], (S, 3 * D))
    bo = jnp.broadcast_to(bo_ref[...], (S, D))
    b1 = jnp.broadcast_to(b1_ref[...], (S, Hf))
    b2 = jnp.broadcast_to(b2_ref[...], (S, D))
    g1 = jnp.broadcast_to(g1_ref[...], (S, D))
    be1 = jnp.broadcast_to(be1_ref[...], (S, D))
    g2 = jnp.broadcast_to(g2_ref[...], (S, D))
    be2 = jnp.broadcast_to(be2_ref[...], (S, D))

    def encoder_layer(_, x):
        # ---- fused QKV projection: one (S, D) @ (D, 3D) matmul ----
        qkv = jnp.dot(x, wqkv_ref[...],
                      preferred_element_type=jnp.float32) + bqkv     # (S, 3D)

        # ---- multi-head attention with PyTorch raw .view() head split ----
        # Head h of the raw view owns rows [h*sh, (h+1)*sh) of the (S, D)
        # activation; its (S, dh) matrix is that block re-read flat/row-major.
        # We build it in (chunk, row) order instead — pure static slices and
        # intra-vreg concats, no reshape.  That is a fixed row permutation
        # within the head, applied identically to Q, K and V, so the softmax
        # attention result is only row-permuted; we invert the permutation
        # when scattering the context back.
        ctx_blocks = []
        for h in range(H):
            r0 = h * sh

            def head_mat(base, _r0=r0):
                return jnp.concatenate(
                    [qkv[_r0:_r0 + sh, base + c * dh: base + (c + 1) * dh]
                     for c in range(H)], axis=0)                     # (S, dh)

            qh = head_mat(0)
            kh = head_mat(D)
            vh = head_mat(2 * D)

            s_mat = lax.dot_general(qh, kh, (((1,), (1,)), ((), ())),
                                    preferred_element_type=jnp.float32) * scale
            m = jnp.max(s_mat, axis=-1, keepdims=True)
            p = jnp.exp(s_mat - m)
            p = p * pl.reciprocal(jnp.sum(p, axis=-1, keepdims=True),
                                  approx=False)
            ctxh = jnp.dot(p, vh, preferred_element_type=jnp.float32)  # (S, dh)

            # invert the within-head permutation -> (sh, D) block for rows r0:r0+sh
            ctx_blocks.append(jnp.concatenate(
                [ctxh[c * sh:(c + 1) * sh, :] for c in range(H)], axis=1))
        ctx = jnp.concatenate(ctx_blocks, axis=0)                    # (S, D)

        # ---- output projection + residual + LayerNorm ----
        out = jnp.dot(ctx, wo_ref[...],
                      preferred_element_type=jnp.float32) + bo
        out = _layer_norm(out + x, g1, be1)

        # ---- position-wise feed-forward + residual + LayerNorm ----
        hid = jnp.maximum(
            jnp.dot(out, w1_ref[...], preferred_element_type=jnp.float32) + b1,
            0.0)
        ff = jnp.dot(hid, w2_ref[...], preferred_element_type=jnp.float32) + b2
        return _layer_norm(ff + out, g2, be2)

    # all encoder layers share identical weights (deepcopy of one untrained module)
    x = lax.fori_loop(0, num_encoder, encoder_layer, x)

    # ---- classifier: out.view(B,-1) @ Wfc == sum_s x[s,:] @ Wfc[s*D:(s+1)*D,:]
    # (avoids any wide reshape; weight rows are 32-aligned ref slices; the
    #  output is padded to 128 lanes so the HBM store is lane-dense)
    logits = bfc_ref[...]                                            # (1, Cpad)
    for s in range(S):
        logits = logits + jnp.dot(x[s:s + 1, :],
                                  wfc_ref[s * D:(s + 1) * D, :],
                                  preferred_element_type=jnp.float32)
    out_ref[0] = logits


# --------------------------- pallas wrapper ----------------------------------

def model_forward(tokens, params, *, num_head, num_encoder, num_classes):
    # Embedding lookup: gather, done in plain JAX (glue).
    # TODO(synk): embedding gather left in JAX; a DMA-gather Pallas kernel is overkill here.
    emb = params["embedding"][tokens]                      # [B, S, D]
    x = emb + params["pe"][None, :, :]                     # pos. encoding (dropout p=0 -> identity)
    B, S, D = x.shape
    assert D % num_head == 0
    # TODO(synk): in-kernel head split assumes num_head | pad_size (true here);
    # otherwise fall back to a JAX-side reshape path.
    assert S % num_head == 0
    dh = D // num_head
    scale = float(dh) ** -0.5
    enc = params["encoder"]
    cp = params["fc_w_t_pad"].shape[1]

    def full_spec(a):
        shp = a.shape
        return pl.BlockSpec(shp, lambda b, _n=len(shp): (0,) * _n)

    kernel = functools.partial(_transformer_kernel, num_head=num_head,
                               num_encoder=num_encoder, scale=scale)
    args = (x, enc["wqkv_t"], enc["bqkv"], enc["wo_t"], enc["bo"],
            enc["g1"], enc["be1"], enc["w1_t"], enc["b1"],
            enc["w2_t"], enc["b2"], enc["g2"], enc["be2"],
            params["fc_w_t_pad"], params["fc_b_pad"])
    in_specs = ([pl.BlockSpec((1, S, D), lambda b: (b, 0, 0))]
                + [full_spec(a) for a in args[1:]])

    out = pl.pallas_call(
        kernel,
        grid=(B,),
        in_specs=in_specs,
        out_specs=pl.BlockSpec((1, 1, cp), lambda b: (b, 0, 0)),
        out_shape=jax.ShapeDtypeStruct((B, 1, cp), jnp.float32),
        compiler_params=pltpu.CompilerParams(
            dimension_semantics=("parallel",)),     # v7x: 2 TCs split the batch
    )(*args)
    return out[:, 0, :num_classes]


# ---------------------- pure-JAX reference (PyTorch semantics) ---------------

def reference_forward(tokens, params, *, num_head, num_encoder):
    r = params["ref"]
    enc = params["encoder"]
    hi = lax.Precision.HIGHEST
    emb = params["embedding"][tokens]
    x = emb + params["pe"][None, :, :]
    B, S, D = x.shape
    dh = D // num_head
    scale = float(dh) ** -0.5

    def ln(y, g, b):
        mean = jnp.mean(y, -1, keepdims=True)
        var = jnp.mean((y - mean) ** 2, -1, keepdims=True)
        return (y - mean) * lax.rsqrt(var + LN_EPS) * g + b

    for _ in range(num_encoder):
        q = jnp.einsum("bsd,df->bsf", x, r["wq_t"], precision=hi) + r["bq"]
        k = jnp.einsum("bsd,df->bsf", x, r["wk_t"], precision=hi) + r["bk"]
        v = jnp.einsum("bsd,df->bsf", x, r["wv_t"], precision=hi) + r["bv"]
        qh = q.reshape(B * num_head, -1, dh)          # exact torch .view() semantics
        kh = k.reshape(B * num_head, -1, dh)
        vh = v.reshape(B * num_head, -1, dh)
        att = jnp.einsum("bqd,bkd->bqk", qh, kh, precision=hi) * scale
        att = jax.nn.softmax(att, axis=-1)
        ctx = jnp.einsum("bqk,bkd->bqd", att, vh, precision=hi)
        ctx = ctx.reshape(B, -1, dh * num_head)
        out = jnp.einsum("bsd,df->bsf", ctx, r["wo_t"], precision=hi) + r["bo"]
        out = ln(out + x, enc["g1"], enc["be1"])
        h = jax.nn.relu(jnp.einsum("bsd,df->bsf", out, r["w1_t"], precision=hi) + r["b1"])
        f = jnp.einsum("bsh,hd->bsd", h, r["w2_t"], precision=hi) + r["b2"]
        x = ln(f + out, enc["g2"], enc["be2"])
    flat = x.reshape(B, -1)
    return jnp.einsum("bf,fc->bc", flat, r["fc_w_t"], precision=hi) + r["fc_b"]


# --------------------------- parameter init ----------------------------------

def make_pe(pad_size, embed):
    pe = np.array([[pos / 10000.0 ** (i // 2 * 2.0 / embed) for i in range(embed)]
                   for pos in range(pad_size)], dtype=np.float32)
    pe[:, 0::2] = np.sin(pe[:, 0::2])
    pe[:, 1::2] = np.cos(pe[:, 1::2])
    return jnp.asarray(pe)


def linear_init(key, fan_in, fan_out):
    kw, kb = jax.random.split(key)
    bound = 1.0 / np.sqrt(fan_in)
    w = jax.random.uniform(kw, (fan_out, fan_in), jnp.float32, -bound, bound)
    b = jax.random.uniform(kb, (1, fan_out), jnp.float32, -bound, bound)
    return w.T, b  # pre-transposed to [in, out]


def init_params(key, n_vocab, embed, pad_size, dim_model, num_head, hidden,
                num_classes):
    keys = jax.random.split(key, 8)
    emb = 0.02 * jax.random.normal(keys[0], (n_vocab, embed), jnp.float32)
    emb = emb.at[n_vocab - 1].set(0.0)  # padding_idx = n_vocab - 1

    wq_t, bq = linear_init(keys[1], dim_model, dim_model)
    wk_t, bk = linear_init(keys[2], dim_model, dim_model)
    wv_t, bv = linear_init(keys[3], dim_model, dim_model)
    wo_t, bo = linear_init(keys[4], dim_model, dim_model)
    w1_t, b1 = linear_init(keys[5], dim_model, hidden)
    w2_t, b2 = linear_init(keys[6], hidden, dim_model)
    fc_w_t, fc_b = linear_init(keys[7], pad_size * dim_model, num_classes)

    # fuse QKV weights; pad the classifier out-dim to a lane-dense multiple of 128
    wqkv_t = jnp.concatenate([wq_t, wk_t, wv_t], axis=1)   # (D, 3D)
    bqkv = jnp.concatenate([bq, bk, bv], axis=1)           # (1, 3D)
    cp = ((num_classes + 127) // 128) * 128
    fc_w_t_pad = jnp.zeros((pad_size * dim_model, cp), jnp.float32)
    fc_w_t_pad = fc_w_t_pad.at[:, :num_classes].set(fc_w_t)
    fc_b_pad = jnp.zeros((1, cp), jnp.float32).at[:, :num_classes].set(fc_b)

    encoder = dict(
        wqkv_t=wqkv_t, bqkv=bqkv, wo_t=wo_t, bo=bo,
        g1=jnp.ones((1, dim_model), jnp.float32),
        be1=jnp.zeros((1, dim_model), jnp.float32),
        w1_t=w1_t, b1=b1, w2_t=w2_t, b2=b2,
        g2=jnp.ones((1, dim_model), jnp.float32),
        be2=jnp.zeros((1, dim_model), jnp.float32),
    )
    ref = dict(wq_t=wq_t, bq=bq, wk_t=wk_t, bk=bk, wv_t=wv_t, bv=bv,
               wo_t=wo_t, bo=bo, w1_t=w1_t, b1=b1, w2_t=w2_t, b2=b2,
               fc_w_t=fc_w_t, fc_b=fc_b)
    return dict(embedding=emb, pe=make_pe(pad_size, embed), encoder=encoder,
                fc_w_t_pad=fc_w_t_pad, fc_b_pad=fc_b_pad, ref=ref)


# ------------------------------- main -----------------------------------------

if __name__ == "__main__":
    # small config consistent with the module
    B = 2
    n_vocab = 32
    embed = dim_model = 32
    pad_size = 8
    num_head = 4
    hidden = 64
    num_encoder = 2
    num_classes = 4

    key = jax.random.PRNGKey(0)
    k_tok, k_par = jax.random.split(key)
    tokens = jax.random.randint(k_tok, (B, pad_size), 0, n_vocab, dtype=jnp.int32)
    params = init_params(k_par, n_vocab, embed, pad_size, dim_model, num_head,
                         hidden, num_classes)

    fwd = jax.jit(functools.partial(model_forward, num_head=num_head,
                                    num_encoder=num_encoder,
                                    num_classes=num_classes))
    logits = fwd(tokens, params)
    jax.block_until_ready(logits)
    assert logits.shape == (B, num_classes)

    # pure-JAX reference with the exact PyTorch .view() head-split semantics
    ref = jax.jit(functools.partial(reference_forward, num_head=num_head,
                                    num_encoder=num_encoder))(tokens, params)
    np.testing.assert_allclose(np.asarray(logits), np.asarray(ref),
                               rtol=2e-3, atol=2e-3)
    print("KERNEL_OK")
</pallas_src>

<mosaic_0001>
module attributes {stable_mosaic.version = 11 : i64} {
  func.func @_transformer_kernel(%arg0: i32, %arg1: memref<1x8x32xf32, #tpu.memory_space<vmem>>, %arg2: memref<32x96xf32, #tpu.memory_space<vmem>>, %arg3: memref<1x96xf32, #tpu.memory_space<vmem>>, %arg4: memref<32x32xf32, #tpu.memory_space<vmem>>, %arg5: memref<1x32xf32, #tpu.memory_space<vmem>>, %arg6: memref<1x32xf32, #tpu.memory_space<vmem>>, %arg7: memref<1x32xf32, #tpu.memory_space<vmem>>, %arg8: memref<32x64xf32, #tpu.memory_space<vmem>>, %arg9: memref<1x64xf32, #tpu.memory_space<vmem>>, %arg10: memref<64x32xf32, #tpu.memory_space<vmem>>, %arg11: memref<1x32xf32, #tpu.memory_space<vmem>>, %arg12: memref<1x32xf32, #tpu.memory_space<vmem>>, %arg13: memref<1x32xf32, #tpu.memory_space<vmem>>, %arg14: memref<256x128xf32, #tpu.memory_space<vmem>>, %arg15: memref<1x128xf32, #tpu.memory_space<vmem>>, %arg16: memref<1x1x128xf32, #tpu.memory_space<vmem>>) attributes {dimension_semantics = [#tpu.dimension_semantics<parallel>], iteration_bounds = array<i64: 2>, scalar_prefetch = 0 : i64, scratch_operands = 0 : i64, tpu.core_type = #tpu.core_type<tc>, window_params = [{transform_indices = @transform_0, window_bounds = array<i64: 1, 8, 32>}, {pipeline_mode = #tpu.pipeline_mode<synchronous>, transform_indices = @transform_1, window_bounds = array<i64: 32, 96>}, {pipeline_mode = #tpu.pipeline_mode<synchronous>, transform_indices = @transform_2, window_bounds = array<i64: 1, 96>}, {pipeline_mode = #tpu.pipeline_mode<synchronous>, transform_indices = @transform_3, window_bounds = array<i64: 32, 32>}, {pipeline_mode = #tpu.pipeline_mode<synchronous>, transform_indices = @transform_4, window_bounds = array<i64: 1, 32>}, {pipeline_mode = #tpu.pipeline_mode<synchronous>, transform_indices = @transform_5, window_bounds = array<i64: 1, 32>}, {pipeline_mode = #tpu.pipeline_mode<synchronous>, transform_indices = @transform_6, window_bounds = array<i64: 1, 32>}, {pipeline_mode = #tpu.pipeline_mode<synchronous>, transform_indices = @transform_7, window_bounds = array<i64: 32, 64>}, {pipeline_mode = #tpu.pipeline_mode<synchronous>, transform_indices = @transform_8, window_bounds = array<i64: 1, 64>}, {pipeline_mode = #tpu.pipeline_mode<synchronous>, transform_indices = @transform_9, window_bounds = array<i64: 64, 32>}, {pipeline_mode = #tpu.pipeline_mode<synchronous>, transform_indices = @transform_10, window_bounds = array<i64: 1, 32>}, {pipeline_mode = #tpu.pipeline_mode<synchronous>, transform_indices = @transform_11, window_bounds = array<i64: 1, 32>}, {pipeline_mode = #tpu.pipeline_mode<synchronous>, transform_indices = @transform_12, window_bounds = array<i64: 1, 32>}, {pipeline_mode = #tpu.pipeline_mode<synchronous>, transform_indices = @transform_13, window_bounds = array<i64: 256, 128>}, {pipeline_mode = #tpu.pipeline_mode<synchronous>, transform_indices = @transform_14, window_bounds = array<i64: 1, 128>}, {transform_indices = @transform_15, window_bounds = array<i64: 1, 1, 128>}]} {
    %c0 = arith.constant 0 : index
    %c0_0 = arith.constant 0 : index
    %c0_1 = arith.constant 0 : index
    %0 = vector.load %arg1[%c0, %c0_0, %c0_1] : memref<1x8x32xf32, #tpu.memory_space<vmem>>, vector<1x8x32xf32>
    %1 = vector.shape_cast %0 : vector<1x8x32xf32> to vector<8x32xf32>
    %c0_2 = arith.constant 0 : index
    %c0_3 = arith.constant 0 : index
    %2 = vector.load %arg3[%c0_2, %c0_3] : memref<1x96xf32, #tpu.memory_space<vmem>>, vector<1x96xf32>
    %3 = vector.shape_cast %2 : vector<1x96xf32> to vector<1x96xf32>
    %4 = vector.broadcast %3 : vector<1x96xf32> to vector<8x96xf32>
    %c0_4 = arith.constant 0 : index
    %c0_5 = arith.constant 0 : index
    %5 = vector.load %arg5[%c0_4, %c0_5] : memref<1x32xf32, #tpu.memory_space<vmem>>, vector<1x32xf32>
    %6 = vector.shape_cast %5 : vector<1x32xf32> to vector<1x32xf32>
    %7 = vector.broadcast %6 : vector<1x32xf32> to vector<8x32xf32>
    %c0_6 = arith.constant 0 : index
    %c0_7 = arith.constant 0 : index
    %8 = vector.load %arg9[%c0_6, %c0_7] : memref<1x64xf32, #tpu.memory_space<vmem>>, vector<1x64xf32>
    %9 = vector.shape_cast %8 : vector<1x64xf32> to vector<1x64xf32>
    %10 = vector.broadcast %9 : vector<1x64xf32> to vector<8x64xf32>
    %c0_8 = arith.constant 0 : index
    %c0_9 = arith.constant 0 : index
    %11 = vector.load %arg11[%c0_8, %c0_9] : memref<1x32xf32, #tpu.memory_space<vmem>>, vector<1x32xf32>
    %12 = vector.shape_cast %11 : vector<1x32xf32> to vector<1x32xf32>
    %13 = vector.broadcast %12 : vector<1x32xf32> to vector<8x32xf32>
    %c0_10 = arith.constant 0 : index
    %c0_11 = arith.constant 0 : index
    %14 = vector.load %arg6[%c0_10, %c0_11] : memref<1x32xf32, #tpu.memory_space<vmem>>, vector<1x32xf32>
    %15 = vector.shape_cast %14 : vector<1x32xf32> to vector<1x32xf32>
    %16 = vector.broadcast %15 : vector<1x32xf32> to vector<8x32xf32>
    %c0_12 = arith.constant 0 : index
    %c0_13 = arith.constant 0 : index
    %17 = vector.load %arg7[%c0_12, %c0_13] : memref<1x32xf32, #tpu.memory_space<vmem>>, vector<1x32xf32>
    %18 = vector.shape_cast %17 : vector<1x32xf32> to vector<1x32xf32>
    %19 = vector.broadcast %18 : vector<1x32xf32> to vector<8x32xf32>
    %c0_14 = arith.constant 0 : index
    %c0_15 = arith.constant 0 : index
    %20 = vector.load %arg12[%c0_14, %c0_15] : memref<1x32xf32, #tpu.memory_space<vmem>>, vector<1x32xf32>
    %21 = vector.shape_cast %20 : vector<1x32xf32> to vector<1x32xf32>
    %22 = vector.broadcast %21 : vector<1x32xf32> to vector<8x32xf32>
    %c0_16 = arith.constant 0 : index
    %c0_17 = arith.constant 0 : index
    %23 = vector.load %arg13[%c0_16, %c0_17] : memref<1x32xf32, #tpu.memory_space<vmem>>, vector<1x32xf32>
    %24 = vector.shape_cast %23 : vector<1x32xf32> to vector<1x32xf32>
    %25 = vector.broadcast %24 : vector<1x32xf32> to vector<8x32xf32>
    %c0_i32 = arith.constant 0 : i32
    %c2_i32 = arith.constant 2 : i32
    %26 = arith.addi %c0_i32, %c2_i32 : i32
    %c1_i32 = arith.constant 1 : i32
    %27 = scf.for %arg17 = %c0_i32 to %26 step %c1_i32 iter_args(%arg18 = %1) -> (vector<8x32xf32>)  : i32 {
      %c0_39 = arith.constant 0 : index
      %c0_40 = arith.constant 0 : index
      %64 = vector.load %arg2[%c0_39, %c0_40] : memref<32x96xf32, #tpu.memory_space<vmem>>, vector<32x96xf32>
      %cst_41 = arith.constant dense<0.000000e+00> : vector<8x96xf32>
      %65 = tpu.matmul %arg18, %64, %cst_41 {dimension_numbers = #tpu.dot_dimension_numbers<[1], [0], [0], [1], [0, 0, 1, 1], [], []>} : vector<8x32xf32>, vector<32x96xf32>, vector<8x96xf32> -> vector<8x96xf32>
      %66 = arith.addf %65, %4 : vector<8x96xf32>
      %67 = vector.extract_strided_slice %66 {offsets = [0, 0], sizes = [2, 8], strides = [1, 1]} : vector<8x96xf32> to vector<2x8xf32>
      %68 = vector.extract_strided_slice %66 {offsets = [0, 8], sizes = [2, 8], strides = [1, 1]} : vector<8x96xf32> to vector<2x8xf32>
      %69 = vector.extract_strided_slice %66 {offsets = [0, 16], sizes = [2, 8], strides = [1, 1]} : vector<8x96xf32> to vector<2x8xf32>
      %70 = vector.extract_strided_slice %66 {offsets = [0, 24], sizes = [2, 8], strides = [1, 1]} : vector<8x96xf32> to vector<2x8xf32>
      %71 = tpu.concatenate %67, %68, %69, %70 in 0 : vector<2x8xf32>, vector<2x8xf32>, vector<2x8xf32>, vector<2x8xf32> -> vector<8x8xf32>
      %72 = vector.extract_strided_slice %66 {offsets = [0, 32], sizes = [2, 8], strides = [1, 1]} : vector<8x96xf32> to vector<2x8xf32>
      %73 = vector.extract_strided_slice %66 {offsets = [0, 40], sizes = [2, 8], strides = [1, 1]} : vector<8x96xf32> to vector<2x8xf32>
      %74 = vector.extract_strided_slice %66 {offsets = [0, 48], sizes = [2, 8], strides = [1, 1]} : vector<8x96xf32> to vector<2x8xf32>
      %75 = vector.extract_strided_slice %66 {offsets = [0, 56], sizes = [2, 8], strides = [1, 1]} : vector<8x96xf32> to vector<2x8xf32>
      %76 = tpu.concatenate %72, %73, %74, %75 in 0 : vector<2x8xf32>, vector<2x8xf32>, vector<2x8xf32>, vector<2x8xf32> -> vector<8x8xf32>
      %77 = vector.extract_strided_slice %66 {offsets = [0, 64], sizes = [2, 8], strides = [1, 1]} : vector<8x96xf32> to vector<2x8xf32>
      %78 = vector.extract_strided_slice %66 {offsets = [0, 72], sizes = [2, 8], strides = [1, 1]} : vector<8x96xf32> to vector<2x8xf32>
      %79 = vector.extract_strided_slice %66 {offsets = [0, 80], sizes = [2, 8], strides = [1, 1]} : vector<8x96xf32> to vector<2x8xf32>
      %80 = vector.extract_strided_slice %66 {offsets = [0, 88], sizes = [2, 8], strides = [1, 1]} : vector<8x96xf32> to vector<2x8xf32>
      %81 = tpu.concatenate %77, %78, %79, %80 in 0 : vector<2x8xf32>, vector<2x8xf32>, vector<2x8xf32>, vector<2x8xf32> -> vector<8x8xf32>
      %cst_42 = arith.constant dense<0.000000e+00> : vector<8x8xf32>
      %82 = tpu.matmul %71, %76, %cst_42 {dimension_numbers = #tpu.dot_dimension_numbers<[1], [1], [0], [0], [0, 0, 1, 0], [], []>} : vector<8x8xf32>, vector<8x8xf32>, vector<8x8xf32> -> vector<8x8xf32>
      %cst_43 = arith.constant 0.353553385 : f32
      %83 = vector.broadcast %cst_43 : f32 to vector<8x8xf32>
      %84 = arith.mulf %82, %83 : vector<8x8xf32>
      %cst_44 = arith.constant dense<0xFF800000> : vector<8xf32>
      %85 = vector.multi_reduction <maximumf>, %84, %cst_44 [1] : vector<8x8xf32> to vector<8xf32>
      %86 = vector.shape_cast %85 : vector<8xf32> to vector<8x1xf32>
      %87 = vector.broadcast %86 : vector<8x1xf32> to vector<8x8xf32>
      %88 = arith.subf %84, %87 : vector<8x8xf32>
      %89 = math.exp %88 : vector<8x8xf32>
      %cst_45 = arith.constant dense<0.000000e+00> : vector<8xf32>
      %90 = vector.multi_reduction <add>, %89, %cst_45 [1] : vector<8x8xf32> to vector<8xf32>
      %91 = vector.shape_cast %90 : vector<8xf32> to vector<8x1xf32>
      %92 = tpu.reciprocal %91 : vector<8x1xf32> -> vector<8x1xf32>
      %93 = vector.broadcast %92 : vector<8x1xf32> to vector<8x8xf32>
      %94 = arith.mulf %89, %93 : vector<8x8xf32>
      %cst_46 = arith.constant dense<0.000000e+00> : vector<8x8xf32>
      %95 = tpu.matmul %94, %81, %cst_46 {dimension_numbers = #tpu.dot_dimension_numbers<[1], [0], [0], [1], [0, 0, 1, 1], [], []>} : vector<8x8xf32>, vector<8x8xf32>, vector<8x8xf32> -> vector<8x8xf32>
      %96 = vector.extract_strided_slice %95 {offsets = [0, 0], sizes = [2, 8], strides = [1, 1]} : vector<8x8xf32> to vector<2x8xf32>
      %97 = vector.extract_strided_slice %95 {offsets = [2, 0], sizes = [2, 8], strides = [1, 1]} : vector<8x8xf32> to vector<2x8xf32>
      %98 = vector.extract_strided_slice %95 {offsets = [4, 0], sizes = [2, 8], strides = [1, 1]} : vector<8x8xf32> to vector<2x8xf32>
      %99 = vector.extract_strided_slice %95 {offsets = [6, 0], sizes = [2, 8], strides = [1, 1]} : vector<8x8xf32> to vector<2x8xf32>
      %100 = tpu.concatenate %96, %97, %98, %99 in 1 : vector<2x8xf32>, vector<2x8xf32>, vector<2x8xf32>, vector<2x8xf32> -> vector<2x32xf32>
      %101 = vector.extract_strided_slice %66 {offsets = [2, 0], sizes = [2, 8], strides = [1, 1]} : vector<8x96xf32> to vector<2x8xf32>
      %102 = vector.extract_strided_slice %66 {offsets = [2, 8], sizes = [2, 8], strides = [1, 1]} : vector<8x96xf32> to vector<2x8xf32>
      %103 = vector.extract_strided_slice %66 {offsets = [2, 16], sizes = [2, 8], strides = [1, 1]} : vector<8x96xf32> to vector<2x8xf32>
      %104 = vector.extract_strided_slice %66 {offsets = [2, 24], sizes = [2, 8], strides = [1, 1]} : vector<8x96xf32> to vector<2x8xf32>
      %105 = tpu.concatenate %101, %102, %103, %104 in 0 : vector<2x8xf32>, vector<2x8xf32>, vector<2x8xf32>, vector<2x8xf32> -> vector<8x8xf32>
      %106 = vector.extract_strided_slice %66 {offsets = [2, 32], sizes = [2, 8], strides = [1, 1]} : vector<8x96xf32> to vector<2x8xf32>
      %107 = vector.extract_strided_slice %66 {offsets = [2, 40], sizes = [2, 8], strides = [1, 1]} : vector<8x96xf32> to vector<2x8xf32>
      %108 = vector.extract_strided_slice %66 {offsets = [2, 48], sizes = [2, 8], strides = [1, 1]} : vector<8x96xf32> to vector<2x8xf32>
      %109 = vector.extract_strided_slice %66 {offsets = [2, 56], sizes = [2, 8], strides = [1, 1]} : vector<8x96xf32> to vector<2x8xf32>
      %110 = tpu.concatenate %106, %107, %108, %109 in 0 : vector<2x8xf32>, vector<2x8xf32>, vector<2x8xf32>, vector<2x8xf32> -> vector<8x8xf32>
      %111 = vector.extract_strided_slice %66 {offsets = [2, 64], sizes = [2, 8], strides = [1, 1]} : vector<8x96xf32> to vector<2x8xf32>
      %112 = vector.extract_strided_slice %66 {offsets = [2, 72], sizes = [2, 8], strides = [1, 1]} : vector<8x96xf32> to vector<2x8xf32>
      %113 = vector.extract_strided_slice %66 {offsets = [2, 80], sizes = [2, 8], strides = [1, 1]} : vector<8x96xf32> to vector<2x8xf32>
      %114 = vector.extract_strided_slice %66 {offsets = [2, 88], sizes = [2, 8], strides = [1, 1]} : vector<8x96xf32> to vector<2x8xf32>
      %115 = tpu.concatenate %111, %112, %113, %114 in 0 : vector<2x8xf32>, vector<2x8xf32>, vector<2x8xf32>, vector<2x8xf32> -> vector<8x8xf32>
      %cst_47 = arith.constant dense<0.000000e+00> : vector<8x8xf32>
      %116 = tpu.matmul %105, %110, %cst_47 {dimension_numbers = #tpu.dot_dimension_numbers<[1], [1], [0], [0], [0, 0, 1, 0], [], []>} : vector<8x8xf32>, vector<8x8xf32>, vector<8x8xf32> -> vector<8x8xf32>
      %cst_48 = arith.constant 0.353553385 : f32
      %117 = vector.broadcast %cst_48 : f32 to vector<8x8xf32>
      %118 = arith.mulf %116, %117 : vector<8x8xf32>
      %cst_49 = arith.constant dense<0xFF800000> : vector<8xf32>
      %119 = vector.multi_reduction <maximumf>, %118, %cst_49 [1] : vector<8x8xf32> to vector<8xf32>
      %120 = vector.shape_cast %119 : vector<8xf32> to vector<8x1xf32>
      %121 = vector.broadcast %120 : vector<8x1xf32> to vector<8x8xf32>
      %122 = arith.subf %118, %121 : vector<8x8xf32>
      %123 = math.exp %122 : vector<8x8xf32>
      %cst_50 = arith.constant dense<0.000000e+00> : vector<8xf32>
      %124 = vector.multi_reduction <add>, %123, %cst_50 [1] : vector<8x8xf32> to vector<8xf32>
      %125 = vector.shape_cast %124 : vector<8xf32> to vector<8x1xf32>
      %126 = tpu.reciprocal %125 : vector<8x1xf32> -> vector<8x1xf32>
      %127 = vector.broadcast %126 : vector<8x1xf32> to vector<8x8xf32>
      %128 = arith.mulf %123, %127 : vector<8x8xf32>
      %cst_51 = arith.constant dense<0.000000e+00> : vector<8x8xf32>
      %129 = tpu.matmul %128, %115, %cst_51 {dimension_numbers = #tpu.dot_dimension_numbers<[1], [0], [0], [1], [0, 0, 1, 1], [], []>} : vector<8x8xf32>, vector<8x8xf32>, vector<8x8xf32> -> vector<8x8xf32>
      %130 = vector.extract_strided_slice %129 {offsets = [0, 0], sizes = [2, 8], strides = [1, 1]} : vector<8x8xf32> to vector<2x8xf32>
      %131 = vector.extract_strided_slice %129 {offsets = [2, 0], sizes = [2, 8], strides = [1, 1]} : vector<8x8xf32> to vector<2x8xf32>
      %132 = vector.extract_strided_slice %129 {offsets = [4, 0], sizes = [2, 8], strides = [1, 1]} : vector<8x8xf32> to vector<2x8xf32>
      %133 = vector.extract_strided_slice %129 {offsets = [6, 0], sizes = [2, 8], strides = [1, 1]} : vector<8x8xf32> to vector<2x8xf32>
      %134 = tpu.concatenate %130, %131, %132, %133 in 1 : vector<2x8xf32>, vector<2x8xf32>, vector<2x8xf32>, vector<2x8xf32> -> vector<2x32xf32>
      %135 = vector.extract_strided_slice %66 {offsets = [4, 0], sizes = [2, 8], strides = [1, 1]} : vector<8x96xf32> to vector<2x8xf32>
      %136 = vector.extract_strided_slice %66 {offsets = [4, 8], sizes = [2, 8], strides = [1, 1]} : vector<8x96xf32> to vector<2x8xf32>
      %137 = vector.extract_strided_slice %66 {offsets = [4, 16], sizes = [2, 8], strides = [1, 1]} : vector<8x96xf32> to vector<2x8xf32>
      %138 = vector.extract_strided_slice %66 {offsets = [4, 24], sizes = [2, 8], strides = [1, 1]} : vector<8x96xf32> to vector<2x8xf32>
      %139 = tpu.concatenate %135, %136, %137, %138 in 0 : vector<2x8xf32>, vector<2x8xf32>, vector<2x8xf32>, vector<2x8xf32> -> vector<8x8xf32>
      %140 = vector.extract_strided_slice %66 {offsets = [4, 32], sizes = [2, 8], strides = [1, 1]} : vector<8x96xf32> to vector<2x8xf32>
      %141 = vector.extract_strided_slice %66 {offsets = [4, 40], sizes = [2, 8], strides = [1, 1]} : vector<8x96xf32> to vector<2x8xf32>
      %142 = vector.extract_strided_slice %66 {offsets = [4, 48], sizes = [2, 8], strides = [1, 1]} : vector<8x96xf32> to vector<2x8xf32>
      %143 = vector.extract_strided_slice %66 {offsets = [4, 56], sizes = [2, 8], strides = [1, 1]} : vector<8x96xf32> to vector<2x8xf32>
      %144 = tpu.concatenate %140, %141, %142, %143 in 0 : vector<2x8xf32>, vector<2x8xf32>, vector<2x8xf32>, vector<2x8xf32> -> vector<8x8xf32>
      %145 = vector.extract_strided_slice %66 {offsets = [4, 64], sizes = [2, 8], strides = [1, 1]} : vector<8x96xf32> to vector<2x8xf32>
      %146 = vector.extract_strided_slice %66 {offsets = [4, 72], sizes = [2, 8], strides = [1, 1]} : vector<8x96xf32> to vector<2x8xf32>
      %147 = vector.extract_strided_slice %66 {offsets = [4, 80], sizes = [2, 8], strides = [1, 1]} : vector<8x96xf32> to vector<2x8xf32>
      %148 = vector.extract_strided_slice %66 {offsets = [4, 88], sizes = [2, 8], strides = [1, 1]} : vector<8x96xf32> to vector<2x8xf32>
      %149 = tpu.concatenate %145, %146, %147, %148 in 0 : vector<2x8xf32>, vector<2x8xf32>, vector<2x8xf32>, vector<2x8xf32> -> vector<8x8xf32>
      %cst_52 = arith.constant dense<0.000000e+00> : vector<8x8xf32>
      %150 = tpu.matmul %139, %144, %cst_52 {dimension_numbers = #tpu.dot_dimension_numbers<[1], [1], [0], [0], [0, 0, 1, 0], [], []>} : vector<8x8xf32>, vector<8x8xf32>, vector<8x8xf32> -> vector<8x8xf32>
      %cst_53 = arith.constant 0.353553385 : f32
      %151 = vector.broadcast %cst_53 : f32 to vector<8x8xf32>
      %152 = arith.mulf %150, %151 : vector<8x8xf32>
      %cst_54 = arith.constant dense<0xFF800000> : vector<8xf32>
      %153 = vector.multi_reduction <maximumf>, %152, %cst_54 [1] : vector<8x8xf32> to vector<8xf32>
      %154 = vector.shape_cast %153 : vector<8xf32> to vector<8x1xf32>
      %155 = vector.broadcast %154 : vector<8x1xf32> to vector<8x8xf32>
      %156 = arith.subf %152, %155 : vector<8x8xf32>
      %157 = math.exp %156 : vector<8x8xf32>
      %cst_55 = arith.constant dense<0.000000e+00> : vector<8xf32>
      %158 = vector.multi_reduction <add>, %157, %cst_55 [1] : vector<8x8xf32> to vector<8xf32>
      %159 = vector.shape_cast %158 : vector<8xf32> to vector<8x1xf32>
      %160 = tpu.reciprocal %159 : vector<8x1xf32> -> vector<8x1xf32>
      %161 = vector.broadcast %160 : vector<8x1xf32> to vector<8x8xf32>
      %162 = arith.mulf %157, %161 : vector<8x8xf32>
      %cst_56 = arith.constant dense<0.000000e+00> : vector<8x8xf32>
      %163 = tpu.matmul %162, %149, %cst_56 {dimension_numbers = #tpu.dot_dimension_numbers<[1], [0], [0], [1], [0, 0, 1, 1], [], []>} : vector<8x8xf32>, vector<8x8xf32>, vector<8x8xf32> -> vector<8x8xf32>
      %164 = vector.extract_strided_slice %163 {offsets = [0, 0], sizes = [2, 8], strides = [1, 1]} : vector<8x8xf32> to vector<2x8xf32>
      %165 = vector.extract_strided_slice %163 {offsets = [2, 0], sizes = [2, 8], strides = [1, 1]} : vector<8x8xf32> to vector<2x8xf32>
      %166 = vector.extract_strided_slice %163 {offsets = [4, 0], sizes = [2, 8], strides = [1, 1]} : vector<8x8xf32> to vector<2x8xf32>
      %167 = vector.extract_strided_slice %163 {offsets = [6, 0], sizes = [2, 8], strides = [1, 1]} : vector<8x8xf32> to vector<2x8xf32>
      %168 = tpu.concatenate %164, %165, %166, %167 in 1 : vector<2x8xf32>, vector<2x8xf32>, vector<2x8xf32>, vector<2x8xf32> -> vector<2x32xf32>
      %169 = vector.extract_strided_slice %66 {offsets = [6, 0], sizes = [2, 8], strides = [1, 1]} : vector<8x96xf32> to vector<2x8xf32>
      %170 = vector.extract_strided_slice %66 {offsets = [6, 8], sizes = [2, 8], strides = [1, 1]} : vector<8x96xf32> to vector<2x8xf32>
      %171 = vector.extract_strided_slice %66 {offsets = [6, 16], sizes = [2, 8], strides = [1, 1]} : vector<8x96xf32> to vector<2x8xf32>
      %172 = vector.extract_strided_slice %66 {offsets = [6, 24], sizes = [2, 8], strides = [1, 1]} : vector<8x96xf32> to vector<2x8xf32>
      %173 = tpu.concatenate %169, %170, %171, %172 in 0 : vector<2x8xf32>, vector<2x8xf32>, vector<2x8xf32>, vector<2x8xf32> -> vector<8x8xf32>
      %174 = vector.extract_strided_slice %66 {offsets = [6, 32], sizes = [2, 8], strides = [1, 1]} : vector<8x96xf32> to vector<2x8xf32>
      %175 = vector.extract_strided_slice %66 {offsets = [6, 40], sizes = [2, 8], strides = [1, 1]} : vector<8x96xf32> to vector<2x8xf32>
      %176 = vector.extract_strided_slice %66 {offsets = [6, 48], sizes = [2, 8], strides = [1, 1]} : vector<8x96xf32> to vector<2x8xf32>
      %177 = vector.extract_strided_slice %66 {offsets = [6, 56], sizes = [2, 8], strides = [1, 1]} : vector<8x96xf32> to vector<2x8xf32>
      %178 = tpu.concatenate %174, %175, %176, %177 in 0 : vector<2x8xf32>, vector<2x8xf32>, vector<2x8xf32>, vector<2x8xf32> -> vector<8x8xf32>
      %179 = vector.extract_strided_slice %66 {offsets = [6, 64], sizes = [2, 8], strides = [1, 1]} : vector<8x96xf32> to vector<2x8xf32>
      %180 = vector.extract_strided_slice %66 {offsets = [6, 72], sizes = [2, 8], strides = [1, 1]} : vector<8x96xf32> to vector<2x8xf32>
      %181 = vector.extract_strided_slice %66 {offsets = [6, 80], sizes = [2, 8], strides = [1, 1]} : vector<8x96xf32> to vector<2x8xf32>
      %182 = vector.extract_strided_slice %66 {offsets = [6, 88], sizes = [2, 8], strides = [1, 1]} : vector<8x96xf32> to vector<2x8xf32>
      %183 = tpu.concatenate %179, %180, %181, %182 in 0 : vector<2x8xf32>, vector<2x8xf32>, vector<2x8xf32>, vector<2x8xf32> -> vector<8x8xf32>
      %cst_57 = arith.constant dense<0.000000e+00> : vector<8x8xf32>
      %184 = tpu.matmul %173, %178, %cst_57 {dimension_numbers = #tpu.dot_dimension_numbers<[1], [1], [0], [0], [0, 0, 1, 0], [], []>} : vector<8x8xf32>, vector<8x8xf32>, vector<8x8xf32> -> vector<8x8xf32>
      %cst_58 = arith.constant 0.353553385 : f32
      %185 = vector.broadcast %cst_58 : f32 to vector<8x8xf32>
      %186 = arith.mulf %184, %185 : vector<8x8xf32>
      %cst_59 = arith.constant dense<0xFF800000> : vector<8xf32>
      %187 = vector.multi_reduction <maximumf>, %186, %cst_59 [1] : vector<8x8xf32> to vector<8xf32>
      %188 = vector.shape_cast %187 : vector<8xf32> to vector<8x1xf32>
      %189 = vector.broadcast %188 : vector<8x1xf32> to vector<8x8xf32>
      %190 = arith.subf %186, %189 : vector<8x8xf32>
      %191 = math.exp %190 : vector<8x8xf32>
      %cst_60 = arith.constant dense<0.000000e+00> : vector<8xf32>
      %192 = vector.multi_reduction <add>, %191, %cst_60 [1] : vector<8x8xf32> to vector<8xf32>
      %193 = vector.shape_cast %192 : vector<8xf32> to vector<8x1xf32>
      %194 = tpu.reciprocal %193 : vector<8x1xf32> -> vector<8x1xf32>
      %195 = vector.broadcast %194 : vector<8x1xf32> to vector<8x8xf32>
      %196 = arith.mulf %191, %195 : vector<8x8xf32>
      %cst_61 = arith.constant dense<0.000000e+00> : vector<8x8xf32>
      %197 = tpu.matmul %196, %183, %cst_61 {dimension_numbers = #tpu.dot_dimension_numbers<[1], [0], [0], [1], [0, 0, 1, 1], [], []>} : vector<8x8xf32>, vector<8x8xf32>, vector<8x8xf32> -> vector<8x8xf32>
      %198 = vector.extract_strided_slice %197 {offsets = [0, 0], sizes = [2, 8], strides = [1, 1]} : vector<8x8xf32> to vector<2x8xf32>
      %199 = vector.extract_strided_slice %197 {offsets = [2, 0], sizes = [2, 8], strides = [1, 1]} : vector<8x8xf32> to vector<2x8xf32>
      %200 = vector.extract_strided_slice %197 {offsets = [4, 0], sizes = [2, 8], strides = [1, 1]} : vector<8x8xf32> to vector<2x8xf32>
      %201 = vector.extract_strided_slice %197 {offsets = [6, 0], sizes = [2, 8], strides = [1, 1]} : vector<8x8xf32> to vector<2x8xf32>
      %202 = tpu.concatenate %198, %199, %200, %201 in 1 : vector<2x8xf32>, vector<2x8xf32>, vector<2x8xf32>, vector<2x8xf32> -> vector<2x32xf32>
      %203 = tpu.concatenate %100, %134, %168, %202 in 0 : vector<2x32xf32>, vector<2x32xf32>, vector<2x32xf32>, vector<2x32xf32> -> vector<8x32xf32>
      %c0_62 = arith.constant 0 : index
      %c0_63 = arith.constant 0 : index
      %204 = vector.load %arg4[%c0_62, %c0_63] : memref<32x32xf32, #tpu.memory_space<vmem>>, vector<32x32xf32>
      %cst_64 = arith.constant dense<0.000000e+00> : vector<8x32xf32>
      %205 = tpu.matmul %203, %204, %cst_64 {dimension_numbers = #tpu.dot_dimension_numbers<[1], [0], [0], [1], [0, 0, 1, 1], [], []>} : vector<8x32xf32>, vector<32x32xf32>, vector<8x32xf32> -> vector<8x32xf32>
      %206 = arith.addf %205, %7 : vector<8x32xf32>
      %207 = arith.addf %206, %arg18 : vector<8x32xf32>
      %cst_65 = arith.constant dense<0.000000e+00> : vector<8xf32>
      %208 = vector.multi_reduction <add>, %207, %cst_65 [1] : vector<8x32xf32> to vector<8xf32>
      %209 = vector.shape_cast %208 : vector<8xf32> to vector<8x1xf32>
      %cst_66 = arith.constant 3.200000e+01 : f32
      %210 = vector.broadcast %cst_66 : f32 to vector<8x1xf32>
      %211 = arith.divf %209, %210 : vector<8x1xf32>
      %212 = vector.broadcast %211 : vector<8x1xf32> to vector<8x32xf32>
      %213 = arith.subf %207, %212 : vector<8x32xf32>
      %214 = arith.mulf %213, %213 : vector<8x32xf32>
      %cst_67 = arith.constant dense<0.000000e+00> : vector<8xf32>
      %215 = vector.multi_reduction <add>, %214, %cst_67 [1] : vector<8x32xf32> to vector<8xf32>
      %216 = vector.shape_cast %215 : vector<8xf32> to vector<8x1xf32>
      %cst_68 = arith.constant 3.200000e+01 : f32
      %217 = vector.broadcast %cst_68 : f32 to vector<8x1xf32>
      %218 = arith.divf %216, %217 : vector<8x1xf32>
      %cst_69 = arith.constant 9.99999974E-6 : f32
      %219 = vector.broadcast %cst_69 : f32 to vector<8x1xf32>
      %220 = arith.addf %218, %219 : vector<8x1xf32>
      %221 = math.rsqrt %220 : vector<8x1xf32>
      %222 = vector.broadcast %221 : vector<8x1xf32> to vector<8x32xf32>
      %223 = arith.mulf %213, %222 : vector<8x32xf32>
      %224 = arith.mulf %223, %16 : vector<8x32xf32>
      %225 = arith.addf %224, %19 : vector<8x32xf32>
      %c0_70 = arith.constant 0 : index
      %c0_71 = arith.constant 0 : index
      %226 = vector.load %arg8[%c0_70, %c0_71] : memref<32x64xf32, #tpu.memory_space<vmem>>, vector<32x64xf32>
      %cst_72 = arith.constant dense<0.000000e+00> : vector<8x64xf32>
      %227 = tpu.matmul %225, %226, %cst_72 {dimension_numbers = #tpu.dot_dimension_numbers<[1], [0], [0], [1], [0, 0, 1, 1], [], []>} : vector<8x32xf32>, vector<32x64xf32>, vector<8x64xf32> -> vector<8x64xf32>
      %228 = arith.addf %227, %10 : vector<8x64xf32>
      %cst_73 = arith.constant 0.000000e+00 : f32
      %229 = vector.broadcast %cst_73 : f32 to vector<8x64xf32>
      %230 = arith.maximumf %228, %229 : vector<8x64xf32>
      %c0_74 = arith.constant 0 : index
      %c0_75 = arith.constant 0 : index
      %231 = vector.load %arg10[%c0_74, %c0_75] : memref<64x32xf32, #tpu.memory_space<vmem>>, vector<64x32xf32>
      %cst_76 = arith.constant dense<0.000000e+00> : vector<8x32xf32>
      %232 = tpu.matmul %230, %231, %cst_76 {dimension_numbers = #tpu.dot_dimension_numbers<[1], [0], [0], [1], [0, 0, 1, 1], [], []>} : vector<8x64xf32>, vector<64x32xf32>, vector<8x32xf32> -> vector<8x32xf32>
      %233 = arith.addf %232, %13 : vector<8x32xf32>
      %234 = arith.addf %233, %225 : vector<8x32xf32>
      %cst_77 = arith.constant dense<0.000000e+00> : vector<8xf32>
      %235 = vector.multi_reduction <add>, %234, %cst_77 [1] : vector<8x32xf32> to vector<8xf32>
      %236 = vector.shape_cast %235 : vector<8xf32> to vector<8x1xf32>
      %cst_78 = arith.constant 3.200000e+01 : f32
      %237 = vector.broadcast %cst_78 : f32 to vector<8x1xf32>
      %238 = arith.divf %236, %237 : vector<8x1xf32>
      %239 = vector.broadcast %238 : vector<8x1xf32> to vector<8x32xf32>
      %240 = arith.subf %234, %239 : vector<8x32xf32>
      %241 = arith.mulf %240, %240 : vector<8x32xf32>
      %cst_79 = arith.constant dense<0.000000e+00> : vector<8xf32>
      %242 = vector.multi_reduction <add>, %241, %cst_79 [1] : vector<8x32xf32> to vector<8xf32>
      %243 = vector.shape_cast %242 : vector<8xf32> to vector<8x1xf32>
      %cst_80 = arith.constant 3.200000e+01 : f32
      %244 = vector.broadcast %cst_80 : f32 to vector<8x1xf32>
      %245 = arith.divf %243, %244 : vector<8x1xf32>
      %cst_81 = arith.constant 9.99999974E-6 : f32
      %246 = vector.broadcast %cst_81 : f32 to vector<8x1xf32>
      %247 = arith.addf %245, %246 : vector<8x1xf32>
      %248 = math.rsqrt %247 : vector<8x1xf32>
      %249 = vector.broadcast %248 : vector<8x1xf32> to vector<8x32xf32>
      %250 = arith.mulf %240, %249 : vector<8x32xf32>
      %251 = arith.mulf %250, %22 : vector<8x32xf32>
      %252 = arith.addf %251, %25 : vector<8x32xf32>
      scf.yield %252 : vector<8x32xf32>
    }
    %c0_18 = arith.constant 0 : index
    %c0_19 = arith.constant 0 : index
    %28 = vector.load %arg15[%c0_18, %c0_19] : memref<1x128xf32, #tpu.memory_space<vmem>>, vector<1x128xf32>
    %29 = vector.extract_strided_slice %27 {offsets = [0, 0], sizes = [1, 32], strides = [1, 1]} : vector<8x32xf32> to vector<1x32xf32>
    %c0_20 = arith.constant 0 : index
    %c0_21 = arith.constant 0 : index
    %30 = vector.load %arg14[%c0_20, %c0_21] : memref<256x128xf32, #tpu.memory_space<vmem>>, vector<32x128xf32>
    %cst = arith.constant dense<0.000000e+00> : vector<1x128xf32>
    %31 = tpu.matmul %29, %30, %cst {dimension_numbers = #tpu.dot_dimension_numbers<[1], [0], [0], [1], [0, 0, 1, 1], [], []>} : vector<1x32xf32>, vector<32x128xf32>, vector<1x128xf32> -> vector<1x128xf32>
    %32 = arith.addf %28, %31 : vector<1x128xf32>
    %33 = vector.extract_strided_slice %27 {offsets = [1, 0], sizes = [1, 32], strides = [1, 1]} : vector<8x32xf32> to vector<1x32xf32>
    %c32 = arith.constant 32 : index
    %c0_22 = arith.constant 0 : index
    %34 = vector.load %arg14[%c32, %c0_22] : memref<256x128xf32, #tpu.memory_space<vmem>>, vector<32x128xf32>
    %cst_23 = arith.constant dense<0.000000e+00> : vector<1x128xf32>
    %35 = tpu.matmul %33, %34, %cst_23 {dimension_numbers = #tpu.dot_dimension_numbers<[1], [0], [0], [1], [0, 0, 1, 1], [], []>} : vector<1x32xf32>, vector<32x128xf32>, vector<1x128xf32> -> vector<1x128xf32>
    %36 = arith.addf %32, %35 : vector<1x128xf32>
    %37 = vector.extract_strided_slice %27 {offsets = [2, 0], sizes = [1, 32], strides = [1, 1]} : vector<8x32xf32> to vector<1x32xf32>
    %c64 = arith.constant 64 : index
    %c0_24 = arith.constant 0 : index
    %38 = vector.load %arg14[%c64, %c0_24] : memref<256x128xf32, #tpu.memory_space<vmem>>, vector<32x128xf32>
    %cst_25 = arith.constant dense<0.000000e+00> : vector<1x128xf32>
    %39 = tpu.matmul %37, %38, %cst_25 {dimension_numbers = #tpu.dot_dimension_numbers<[1], [0], [0], [1], [0, 0, 1, 1], [], []>} : vector<1x32xf32>, vector<32x128xf32>, vector<1x128xf32> -> vector<1x128xf32>
    %40 = arith.addf %36, %39 : vector<1x128xf32>
    %41 = vector.extract_strided_slice %27 {offsets = [3, 0], sizes = [1, 32], strides = [1, 1]} : vector<8x32xf32> to vector<1x32xf32>
    %c96 = arith.constant 96 : index
    %c0_26 = arith.constant 0 : index
    %42 = vector.load %arg14[%c96, %c0_26] : memref<256x128xf32, #tpu.memory_space<vmem>>, vector<32x128xf32>
    %cst_27 = arith.constant dense<0.000000e+00> : vector<1x128xf32>
    %43 = tpu.matmul %41, %42, %cst_27 {dimension_numbers = #tpu.dot_dimension_numbers<[1], [0], [0], [1], [0, 0, 1, 1], [], []>} : vector<1x32xf32>, vector<32x128xf32>, vector<1x128xf32> -> vector<1x128xf32>
    %44 = arith.addf %40, %43 : vector<1x128xf32>
    %45 = vector.extract_strided_slice %27 {offsets = [4, 0], sizes = [1, 32], strides = [1, 1]} : vector<8x32xf32> to vector<1x32xf32>
    %c128 = arith.constant 128 : index
    %c0_28 = arith.constant 0 : index
    %46 = vector.load %arg14[%c128, %c0_28] : memref<256x128xf32, #tpu.memory_space<vmem>>, vector<32x128xf32>
    %cst_29 = arith.constant dense<0.000000e+00> : vector<1x128xf32>
    %47 = tpu.matmul %45, %46, %cst_29 {dimension_numbers = #tpu.dot_dimension_numbers<[1], [0], [0], [1], [0, 0, 1, 1], [], []>} : vector<1x32xf32>, vector<32x128xf32>, vector<1x128xf32> -> vector<1x128xf32>
    %48 = arith.addf %44, %47 : vector<1x128xf32>
    %49 = vector.extract_strided_slice %27 {offsets = [5, 0], sizes = [1, 32], strides = [1, 1]} : vector<8x32xf32> to vector<1x32xf32>
    %c160 = arith.constant 160 : index
    %c0_30 = arith.constant 0 : index
    %50 = vector.load %arg14[%c160, %c0_30] : memref<256x128xf32, #tpu.memory_space<vmem>>, vector<32x128xf32>
    %cst_31 = arith.constant dense<0.000000e+00> : vector<1x128xf32>
    %51 = tpu.matmul %49, %50, %cst_31 {dimension_numbers = #tpu.dot_dimension_numbers<[1], [0], [0], [1], [0, 0, 1, 1], [], []>} : vector<1x32xf32>, vector<32x128xf32>, vector<1x128xf32> -> vector<1x128xf32>
    %52 = arith.addf %48, %51 : vector<1x128xf32>
    %53 = vector.extract_strided_slice %27 {offsets = [6, 0], sizes = [1, 32], strides = [1, 1]} : vector<8x32xf32> to vector<1x32xf32>
    %c192 = arith.constant 192 : index
    %c0_32 = arith.constant 0 : index
    %54 = vector.load %arg14[%c192, %c0_32] : memref<256x128xf32, #tpu.memory_space<vmem>>, vector<32x128xf32>
    %cst_33 = arith.constant dense<0.000000e+00> : vector<1x128xf32>
    %55 = tpu.matmul %53, %54, %cst_33 {dimension_numbers = #tpu.dot_dimension_numbers<[1], [0], [0], [1], [0, 0, 1, 1], [], []>} : vector<1x32xf32>, vector<32x128xf32>, vector<1x128xf32> -> vector<1x128xf32>
    %56 = arith.addf %52, %55 : vector<1x128xf32>
    %57 = vector.extract_strided_slice %27 {offsets = [7, 0], sizes = [1, 32], strides = [1, 1]} : vector<8x32xf32> to vector<1x32xf32>
    %c224 = arith.constant 224 : index
    %c0_34 = arith.constant 0 : index
    %58 = vector.load %arg14[%c224, %c0_34] : memref<256x128xf32, #tpu.memory_space<vmem>>, vector<32x128xf32>
    %cst_35 = arith.constant dense<0.000000e+00> : vector<1x128xf32>
    %59 = tpu.matmul %57, %58, %cst_35 {dimension_numbers = #tpu.dot_dimension_numbers<[1], [0], [0], [1], [0, 0, 1, 1], [], []>} : vector<1x32xf32>, vector<32x128xf32>, vector<1x128xf32> -> vector<1x128xf32>
    %60 = arith.addf %56, %59 : vector<1x128xf32>
    %c0_36 = arith.constant 0 : index
    %c0_37 = arith.constant 0 : index
    %c0_38 = arith.constant 0 : index
    %61 = vector.load %arg16[%c0_36, %c0_37, %c0_38] : memref<1x1x128xf32, #tpu.memory_space<vmem>>, vector<1x1x128xf32>
    %62 = vector.shape_cast %61 : vector<1x1x128xf32> to vector<1x128xf32>
    %63 = vector.shape_cast %60 : vector<1x128xf32> to vector<1x1x128xf32>
    tpu.vector_store %arg16[%c0_36, %c0_37, %c0_38], %63 {strides = array<i32>} : memref<1x1x128xf32, #tpu.memory_space<vmem>>, vector<1x1x128xf32>,
    return
  }
  func.func @transform_0(%arg0: i32) -> (i32, i32, i32) {
    %c0_i32 = arith.constant 0 : i32
    %c0_i32_0 = arith.constant 0 : i32
    %c0_i32_1 = arith.constant 0 : i32
    return %arg0, %c0_i32, %c0_i32_0 : i32, i32, i32
  }
  func.func @transform_1(%arg0: i32) -> (i32, i32) {
    %c0_i32 = arith.constant 0 : i32
    %c0_i32_0 = arith.constant 0 : i32
    %c0_i32_1 = arith.constant 0 : i32
    return %c0_i32, %c0_i32_0 : i32, i32
  }
  func.func @transform_2(%arg0: i32) -> (i32, i32) {
    %c0_i32 = arith.constant 0 : i32
    %c0_i32_0 = arith.constant 0 : i32
    %c0_i32_1 = arith.constant 0 : i32
    return %c0_i32, %c0_i32_0 : i32, i32
  }
  func.func @transform_3(%arg0: i32) -> (i32, i32) {
    %c0_i32 = arith.constant 0 : i32
    %c0_i32_0 = arith.constant 0 : i32
    %c0_i32_1 = arith.constant 0 : i32
    return %c0_i32, %c0_i32_0 : i32, i32
  }
  func.func @transform_4(%arg0: i32) -> (i32, i32) {
    %c0_i32 = arith.constant 0 : i32
    %c0_i32_0 = arith.constant 0 : i32
    %c0_i32_1 = arith.constant 0 : i32
    return %c0_i32, %c0_i32_0 : i32, i32
  }
  func.func @transform_5(%arg0: i32) -> (i32, i32) {
    %c0_i32 = arith.constant 0 : i32
    %c0_i32_0 = arith.constant 0 : i32
    %c0_i32_1 = arith.constant 0 : i32
    return %c0_i32, %c0_i32_0 : i32, i32
  }
  func.func @transform_6(%arg0: i32) -> (i32, i32) {
    %c0_i32 = arith.constant 0 : i32
    %c0_i32_0 = arith.constant 0 : i32
    %c0_i32_1 = arith.constant 0 : i32
    return %c0_i32, %c0_i32_0 : i32, i32
  }
  func.func @transform_7(%arg0: i32) -> (i32, i32) {
    %c0_i32 = arith.constant 0 : i32
    %c0_i32_0 = arith.constant 0 : i32
    %c0_i32_1 = arith.constant 0 : i32
    return %c0_i32, %c0_i32_0 : i32, i32
  }
  func.func @transform_8(%arg0: i32) -> (i32, i32) {
    %c0_i32 = arith.constant 0 : i32
    %c0_i32_0 = arith.constant 0 : i32
    %c0_i32_1 = arith.constant 0 : i32
    return %c0_i32, %c0_i32_0 : i32, i32
  }
  func.func @transform_9(%arg0: i32) -> (i32, i32) {
    %c0_i32 = arith.constant 0 : i32
    %c0_i32_0 = arith.constant 0 : i32
    %c0_i32_1 = arith.constant 0 : i32
    return %c0_i32, %c0_i32_0 : i32, i32
  }
  func.func @transform_10(%arg0: i32) -> (i32, i32) {
    %c0_i32 = arith.constant 0 : i32
    %c0_i32_0 = arith.constant 0 : i32
    %c0_i32_1 = arith.constant 0 : i32
    return %c0_i32, %c0_i32_0 : i32, i32
  }
  func.func @transform_11(%arg0: i32) -> (i32, i32) {
    %c0_i32 = arith.constant 0 : i32
    %c0_i32_0 = arith.constant 0 : i32
    %c0_i32_1 = arith.constant 0 : i32
    return %c0_i32, %c0_i32_0 : i32, i32
  }
  func.func @transform_12(%arg0: i32) -> (i32, i32) {
    %c0_i32 = arith.constant 0 : i32
    %c0_i32_0 = arith.constant 0 : i32
    %c0_i32_1 = arith.constant 0 : i32
    return %c0_i32, %c0_i32_0 : i32, i32
  }
  func.func @transform_13(%arg0: i32) -> (i32, i32) {
    %c0_i32 = arith.constant 0 : i32
    %c0_i32_0 = arith.constant 0 : i32
    %c0_i32_1 = arith.constant 0 : i32
    return %c0_i32, %c0_i32_0 : i32, i32
  }
  func.func @transform_14(%arg0: i32) -> (i32, i32) {
    %c0_i32 = arith.constant 0 : i32
    %c0_i32_0 = arith.constant 0 : i32
    %c0_i32_1 = arith.constant 0 : i32
    return %c0_i32, %c0_i32_0 : i32, i32
  }
  func.func @transform_15(%arg0: i32) -> (i32, i32, i32) {
    %c0_i32 = arith.constant 0 : i32
    %c0_i32_0 = arith.constant 0 : i32
    %c0_i32_1 = arith.constant 0 : i32
    return %arg0, %c0_i32, %c0_i32_0 : i32, i32, i32
  }
}

</mosaic_0001>

<llo_original>
// kernel: model_forward.1
$region0: #{model_forward.1}
  #allocation0 [shape = 'u32[]', space=smem, size = 0x4, offset = 0x4, fixed_abs, tag = 'smem constant byte address 0x4 - core index']
  #allocation1 [shape = 'u32[144,128]{1,0:T(1,128)}', space=vmem, size = 0x12000, scoped, tag = 'internal scratch']
  %s0 = inlined_call_operand.vmem [shape: f32[2,8,32], index: 0, kind: input, shape index: {}]
  %s1 = inlined_call_operand.vmem [shape: f32[32,96], index: 1, kind: input, shape index: {}]
  %s2 = inlined_call_operand.vmem [shape: f32[1,96], index: 2, kind: input, shape index: {}]
  %s3 = inlined_call_operand.vmem [shape: f32[32,32], index: 3, kind: input, shape index: {}]
  %s4 = inlined_call_operand.vmem [shape: f32[1,32], index: 4, kind: input, shape index: {}]
  %s5 = inlined_call_operand.vmem [shape: f32[1,32], index: 5, kind: input, shape index: {}]
  %s6 = inlined_call_operand.hbm [shape: f32[1,32], index: 6, kind: input, shape index: {}]
  %s7 = inlined_call_operand.vmem [shape: f32[32,64], index: 7, kind: input, shape index: {}]
  %s8 = inlined_call_operand.hbm [shape: f32[1,64], index: 8, kind: input, shape index: {}]
  %s9 = inlined_call_operand.vmem [shape: f32[64,32], index: 9, kind: input, shape index: {}]
  %s10 = inlined_call_operand.hbm [shape: f32[1,32], index: 10, kind: input, shape index: {}]
  %s11 = inlined_call_operand.hbm [shape: f32[1,32], index: 11, kind: input, shape index: {}]
  %s12 = inlined_call_operand.hbm [shape: f32[1,32], index: 12, kind: input, shape index: {}]
  %s13 = inlined_call_operand.vmem [shape: f32[256,128], index: 13, kind: input, shape index: {}]
  %s14 = inlined_call_operand.hbm [shape: f32[1,128], index: 14, kind: input, shape index: {}]
  %s15 = inlined_call_operand.hbm [shape: f32[2,1,128], index: 15, kind: output, shape index: {}]
  %s16 = sld [smem:[#allocation0]]
  $region124: #{model_forward.1} parent=0
    _
  %s18 = ssub.s32 1, %s16
  %s19 = scalar_select 0, %s18, %s16
  $region1: #{model_forward.1} parent=0
    #allocation2 [shape = 'u8[512]{0}', space=vmem, size = 0x400, scoped, tag = 'input window, operand 6, single buffered']
    #allocation3 [shape = 's32[2]{0}', space=sflag, size = 0x8, scoped, tag = 'scoped memory for model_forward.1']
    #allocation4 [shape = 's32[2]{0}', space=sflag, size = 0x8, scoped, tag = 'scoped memory for model_forward.1']
    #allocation5 [shape = 'u8[512]{0}', space=vmem, size = 0x400, scoped, tag = 'input window, operand 8, single buffered']
    #allocation6 [shape = 's32[1]{0}', space=sflag, size = 0x4, scoped, tag = 'scoped memory for model_forward.1']
    #allocation7 [shape = 'u8[512]{0}', space=vmem, size = 0x400, scoped, tag = 'input window, operand 10, single buffered']
    #allocation8 [shape = 'u8[512]{0}', space=vmem, size = 0x400, scoped, tag = 'input window, operand 11, single buffered']
    #allocation9 [shape = 's32[1]{0}', space=sflag, size = 0x4, scoped, tag = 'scoped memory for model_forward.1']
    #allocation10 [shape = 'u8[512]{0}', space=vmem, size = 0x400, scoped, tag = 'input window, operand 12, single buffered']
    #allocation11 [shape = 'u8[512]{0}', space=vmem, size = 0x400, scoped, tag = 'input window, operand 14, single buffered']
    #allocation12 [shape = 's32[1]{0}', space=sflag, size = 0x4, scoped, tag = 'scoped memory for model_forward.1']
    #allocation13 [shape = 'u8[1024]{0}', space=vmem, size = 0x400, scoped, tag = 'output window, operand 0']
    %20 = vsyncpa [#allocation3], 0
    %21 = vsyncpa [#allocation6], 0
    %22 = vsyncpa [#allocation9], 0
    %23 = vsyncpa [#allocation12], 0
    %24 = vsyncpa [#allocation4], 0
    %s25 = scalar_lea.sflag [#allocation4], 1
    %26 = vsyncpa %s25, 0
    loop: start=0, step=1, limit=4
    $region2: #{model_forward.1} parent=1 // loop_pre_header
      _
    $region3: #{model_forward.1} parent=1 // loop_header
      %s28 = sphi 0, %s32
      %p29 = scmp.ge.s32.totalorder %s28, 4
      %s38 = sphi 0, %s40
      %s41 = sphi 0, %s38
      %s42 = sphi 0, %s41
      %s58 = sphi 0, %s42
      %s62 = sphi 0, %s62
      %s64 = sphi 0, %s62
      %s65 = sphi 0, %s64
      %s79 = sphi 0, %s65
      %s83 = sphi 0, %s83
      %s85 = sphi 0, %s83
      %s86 = sphi 0, %s85
      %s100 = sphi 0, %s86
      %s104 = sphi 0, %s104
      %s106 = sphi 0, %s104
      %s107 = sphi 0, %s106
      %s121 = sphi 0, %s107
      %s125 = sphi 0, %s125
      %s127 = sphi 0, %s125
      %s128 = sphi 0, %s127
      %s142 = sphi 0, %s128
      %s146 = sphi 0, %s146
      %s148 = sphi 0, %s146
      %s149 = sphi 0, %s148
      %s163 = sphi 0, %s149
      %s167 = sphi 0, %s167
      %s169 = sphi 0, %s167
      %s170 = sphi 0, %s169
      %s184 = sphi 0, %s170
      %s188 = sphi 0, %s188
      %s190 = sphi 0, %s188
      %s191 = sphi 0, %s190
      %s205 = sphi 0, %s191
      %s209 = sphi 0, %s209
      %s211 = sphi 0, %s209
      %s212 = sphi 0, %s211
      %s226 = sphi 0, %s212
      %s230 = sphi 0, %s230
      %s232 = sphi 0, %s230
      %s233 = sphi 0, %s232
      %s247 = sphi 0, %s233
      %s251 = sphi 0, %s251
      %s253 = sphi 0, %s251
      %s254 = sphi 0, %s253
      %s268 = sphi 0, %s254
      %s272 = sphi 0, %s272
      %s274 = sphi 0, %s272
      %s275 = sphi 0, %s274
      %s289 = sphi 0, %s275
      %s293 = sphi 0, %s293
      %s295 = sphi 0, %s293
      %s296 = sphi 0, %s295
      %s310 = sphi 0, %s296
      %s314 = sphi 0, %s314
      %s316 = sphi 0, %s314
      %s317 = sphi 0, %s316
      %s331 = sphi 0, %s317
      %s335 = sphi 0, %s335
      %s337 = sphi 0, %s335
      %s338 = sphi 0, %s337
      %s352 = sphi 0, %s338
      %s358 = sphi 0, %s360
      %s361 = sphi 0, %s358
      %s362 = sphi 0, %s361
      %s378 = sphi 0, %s362
    $region4: #{model_forward.1} parent=1 // loop_header_branch
      %31 = sbr.rel (%p29) target = $region8
    $region5: #{model_forward.1} parent=1 // loop_body
      %s33 = ssub.s32 %s28, 1
      %s34 = ssub.s32 %s28, 2
      %s35 = sadd.s32 %s28, 1
      %s36 = ssub.s32 %s28, %s35
      %p37 = scmp.eq.s32.totalorder %s36, 0
      %s39 = sadd.s32 %s38, 1
      %s40 = scalar_select %p37, %s38, %s39
      %p43 = pneg %p37
      %p44 = scmp.eq.s32.totalorder %s28, 1
      %p45 = por %p43, %p44
      %p46 = scmp.ne.s32.totalorder %s38, %s41
      %p47 = scmp.eq.s32.totalorder %s28, 0
      %p48 = por %p46, %p47
      %p49 = scmp.ne.s32.totalorder %s38, %s41
      %p50 = scmp.eq.s32.totalorder %s33, 1
      %p51 = por %p49, %p50
      %p52 = scmp.ne.s32.totalorder %s41, %s42
      %p53 = scmp.eq.s32.totalorder %s33, 0
      %p54 = por %p52, %p53
      %p55 = scmp.ne.s32.totalorder %s41, %s42
      %p56 = scmp.eq.s32.totalorder %s34, 1
      %p57 = por %p55, %p56
      %p59 = scmp.ne.s32.totalorder %s42, %s58
      %p60 = scmp.eq.s32.totalorder %s34, 0
      %p61 = por %p59, %p60
      %s63 = sadd.s32 %s62, 1
      %p66 = scmp.eq.s32.totalorder %s28, 1
      %p67 = scmp.ne.s32.totalorder %s62, %s64
      %p68 = scmp.eq.s32.totalorder %s28, 0
      %p69 = por %p67, %p68
      %p70 = scmp.ne.s32.totalorder %s62, %s64
      %p71 = scmp.eq.s32.totalorder %s33, 1
      %p72 = por %p70, %p71
      %p73 = scmp.ne.s32.totalorder %s64, %s65
      %p74 = scmp.eq.s32.totalorder %s33, 0
      %p75 = por %p73, %p74
      %p76 = scmp.ne.s32.totalorder %s64, %s65
      %p77 = scmp.eq.s32.totalorder %s34, 1
      %p78 = por %p76, %p77
      %p80 = scmp.ne.s32.totalorder %s65, %s79
      %p81 = scmp.eq.s32.totalorder %s34, 0
      %p82 = por %p80, %p81
      %s84 = sadd.s32 %s83, 1
      %p87 = scmp.eq.s32.totalorder %s28, 1
      %p88 = scmp.ne.s32.totalorder %s83, %s85
      %p89 = scmp.eq.s32.totalorder %s28, 0
      %p90 = por %p88, %p89
      %p91 = scmp.ne.s32.totalorder %s83, %s85
      %p92 = scmp.eq.s32.totalorder %s33, 1
      %p93 = por %p91, %p92
      %p94 = scmp.ne.s32.totalorder %s85, %s86
      %p95 = scmp.eq.s32.totalorder %s33, 0
      %p96 = por %p94, %p95
      %p97 = scmp.ne.s32.totalorder %s85, %s86
      %p98 = scmp.eq.s32.totalorder %s34, 1
      %p99 = por %p97, %p98
      %p101 = scmp.ne.s32.totalorder %s86, %s100
      %p102 = scmp.eq.s32.totalorder %s34, 0
      %p103 = por %p101, %p102
      %s105 = sadd.s32 %s104, 1
      %p108 = scmp.eq.s32.totalorder %s28, 1
      %p109 = scmp.ne.s32.totalorder %s104, %s106
      %p110 = scmp.eq.s32.totalorder %s28, 0
      %p111 = por %p109, %p110
      %p112 = scmp.ne.s32.totalorder %s104, %s106
      %p113 = scmp.eq.s32.totalorder %s33, 1
      %p114 = por %p112, %p113
      %p115 = scmp.ne.s32.totalorder %s106, %s107
      %p116 = scmp.eq.s32.totalorder %s33, 0
      %p117 = por %p115, %p116
      %p118 = scmp.ne.s32.totalorder %s106, %s107
      %p119 = scmp.eq.s32.totalorder %s34, 1
      %p120 = por %p118, %p119
      %p122 = scmp.ne.s32.totalorder %s107, %s121
      %p123 = scmp.eq.s32.totalorder %s34, 0
      %p124 = por %p122, %p123
      %s126 = sadd.s32 %s125, 1
      %p129 = scmp.eq.s32.totalorder %s28, 1
      %p130 = scmp.ne.s32.totalorder %s125, %s127
      %p131 = scmp.eq.s32.totalorder %s28, 0
      %p132 = por %p130, %p131
      %p133 = scmp.ne.s32.totalorder %s125, %s127
      %p134 = scmp.eq.s32.totalorder %s33, 1
      %p135 = por %p133, %p134
      %p136 = scmp.ne.s32.totalorder %s127, %s128
      %p137 = scmp.eq.s32.totalorder %s33, 0
      %p138 = por %p136, %p137
      %p139 = scmp.ne.s32.totalorder %s127, %s128
      %p140 = scmp.eq.s32.totalorder %s34, 1
      %p141 = por %p139, %p140
      %p143 = scmp.ne.s32.totalorder %s128, %s142
      %p144 = scmp.eq.s32.totalorder %s34, 0
      %p145 = por %p143, %p144
      %s147 = sadd.s32 %s146, 1
      %p150 = scmp.eq.s32.totalorder %s28, 1
      %p151 = scmp.ne.s32.totalorder %s146, %s148
      %p152 = scmp.eq.s32.totalorder %s28, 0
      %p153 = por %p151, %p152
      %p154 = scmp.ne.s32.totalorder %s146, %s148
      %p155 = scmp.eq.s32.totalorder %s33, 1
      %p156 = por %p154, %p155
      %p157 = scmp.ne.s32.totalorder %s148, %s149
      %p158 = scmp.eq.s32.totalorder %s33, 0
      %p159 = por %p157, %p158
      %p160 = scmp.ne.s32.totalorder %s148, %s149
      %p161 = scmp.eq.s32.totalorder %s34, 1
      %p162 = por %p160, %p161
      %p164 = scmp.ne.s32.totalorder %s149, %s163
      %p165 = scmp.eq.s32.totalorder %s34, 0
      %p166 = por %p164, %p165
      %s168 = sadd.s32 %s167, 1
      %p171 = scmp.eq.s32.totalorder %s28, 1
      %p172 = scmp.ne.s32.totalorder %s167, %s169
      %p173 = scmp.eq.s32.totalorder %s28, 0
      %p174 = por %p172, %p173
      %p175 = scmp.ne.s32.totalorder %s167, %s169
      %p176 = scmp.eq.s32.totalorder %s33, 1
      %p177 = por %p175, %p176
      %p178 = scmp.ne.s32.totalorder %s169, %s170
      %p179 = scmp.eq.s32.totalorder %s33, 0
      %p180 = por %p178, %p179
      %p181 = scmp.ne.s32.totalorder %s169, %s170
      %p182 = scmp.eq.s32.totalorder %s34, 1
      %p183 = por %p181, %p182
      %p185 = scmp.ne.s32.totalorder %s170, %s184
      %p186 = scmp.eq.s32.totalorder %s34, 0
      %p187 = por %p185, %p186
      %s189 = sadd.s32 %s188, 1
      %p192 = scmp.eq.s32.totalorder %s28, 1
      %p193 = scmp.ne.s32.totalorder %s188, %s190
      %p194 = scmp.eq.s32.totalorder %s28, 0
      %p195 = por %p193, %p194
      %p196 = scmp.ne.s32.totalorder %s188, %s190
      %p197 = scmp.eq.s32.totalorder %s33, 1
      %p198 = por %p196, %p197
      %p199 = scmp.ne.s32.totalorder %s190, %s191
      %p200 = scmp.eq.s32.totalorder %s33, 0
      %p201 = por %p199, %p200
      %p202 = scmp.ne.s32.totalorder %s190, %s191
      %p203 = scmp.eq.s32.totalorder %s34, 1
      %p204 = por %p202, %p203
      %p206 = scmp.ne.s32.totalorder %s191, %s205
      %p207 = scmp.eq.s32.totalorder %s34, 0
      %p208 = por %p206, %p207
      %s210 = sadd.s32 %s209, 1
      %p213 = scmp.eq.s32.totalorder %s28, 1
      %p214 = scmp.ne.s32.totalorder %s209, %s211
      %p215 = scmp.eq.s32.totalorder %s28, 0
      %p216 = por %p214, %p215
      %p217 = scmp.ne.s32.totalorder %s209, %s211
      %p218 = scmp.eq.s32.totalorder %s33, 1
      %p219 = por %p217, %p218
      %p220 = scmp.ne.s32.totalorder %s211, %s212
      %p221 = scmp.eq.s32.totalorder %s33, 0
      %p222 = por %p220, %p221
      %p223 = scmp.ne.s32.totalorder %s211, %s212
      %p224 = scmp.eq.s32.totalorder %s34, 1
      %p225 = por %p223, %p224
      %p227 = scmp.ne.s32.totalorder %s212, %s226
      %p228 = scmp.eq.s32.totalorder %s34, 0
      %p229 = por %p227, %p228
      %s231 = sadd.s32 %s230, 1
      %p234 = scmp.eq.s32.totalorder %s28, 1
      %p235 = scmp.ne.s32.totalorder %s230, %s232
      %p236 = scmp.eq.s32.totalorder %s28, 0
      %p237 = por %p235, %p236
      %p238 = scmp.ne.s32.totalorder %s230, %s232
      %p239 = scmp.eq.s32.totalorder %s33, 1
      %p240 = por %p238, %p239
      %p241 = scmp.ne.s32.totalorder %s232, %s233
      %p242 = scmp.eq.s32.totalorder %s33, 0
      %p243 = por %p241, %p242
      %p244 = scmp.ne.s32.totalorder %s232, %s233
      %p245 = scmp.eq.s32.totalorder %s34, 1
      %p246 = por %p244, %p245
      %p248 = scmp.ne.s32.totalorder %s233, %s247
      %p249 = scmp.eq.s32.totalorder %s34, 0
      %p250 = por %p248, %p249
      %s252 = sadd.s32 %s251, 1
      %p255 = scmp.eq.s32.totalorder %s28, 1
      %p256 = scmp.ne.s32.totalorder %s251, %s253
      %p257 = scmp.eq.s32.totalorder %s28, 0
      %p258 = por %p256, %p257
      %p259 = scmp.ne.s32.totalorder %s251, %s253
      %p260 = scmp.eq.s32.totalorder %s33, 1
      %p261 = por %p259, %p260
      %p262 = scmp.ne.s32.totalorder %s253, %s254
      %p263 = scmp.eq.s32.totalorder %s33, 0
      %p264 = por %p262, %p263
      %p265 = scmp.ne.s32.totalorder %s253, %s254
      %p266 = scmp.eq.s32.totalorder %s34, 1
      %p267 = por %p265, %p266
      %p269 = scmp.ne.s32.totalorder %s254, %s268
      %p270 = scmp.eq.s32.totalorder %s34, 0
      %p271 = por %p269, %p270
      %s273 = sadd.s32 %s272, 1
      %p276 = scmp.eq.s32.totalorder %s28, 1
      %p277 = scmp.ne.s32.totalorder %s272, %s274
      %p278 = scmp.eq.s32.totalorder %s28, 0
      %p279 = por %p277, %p278
      %p280 = scmp.ne.s32.totalorder %s272, %s274
      %p281 = scmp.eq.s32.totalorder %s33, 1
      %p282 = por %p280, %p281
      %p283 = scmp.ne.s32.totalorder %s274, %s275
      %p284 = scmp.eq.s32.totalorder %s33, 0
      %p285 = por %p283, %p284
      %p286 = scmp.ne.s32.totalorder %s274, %s275
      %p287 = scmp.eq.s32.totalorder %s34, 1
      %p288 = por %p286, %p287
      %p290 = scmp.ne.s32.totalorder %s275, %s289
      %p291 = scmp.eq.s32.totalorder %s34, 0
      %p292 = por %p290, %p291
      %s294 = sadd.s32 %s293, 1
      %p297 = scmp.eq.s32.totalorder %s28, 1
      %p298 = scmp.ne.s32.totalorder %s293, %s295
      %p299 = scmp.eq.s32.totalorder %s28, 0
      %p300 = por %p298, %p299
      %p301 = scmp.ne.s32.totalorder %s293, %s295
      %p302 = scmp.eq.s32.totalorder %s33, 1
      %p303 = por %p301, %p302
      %p304 = scmp.ne.s32.totalorder %s295, %s296
      %p305 = scmp.eq.s32.totalorder %s33, 0
      %p306 = por %p304, %p305
      %p307 = scmp.ne.s32.totalorder %s295, %s296
      %p308 = scmp.eq.s32.totalorder %s34, 1
      %p309 = por %p307, %p308
      %p311 = scmp.ne.s32.totalorder %s296, %s310
      %p312 = scmp.eq.s32.totalorder %s34, 0
      %p313 = por %p311, %p312
      %s315 = sadd.s32 %s314, 1
      %p318 = scmp.eq.s32.totalorder %s28, 1
      %p319 = scmp.ne.s32.totalorder %s314, %s316
      %p320 = scmp.eq.s32.totalorder %s28, 0
      %p321 = por %p319, %p320
      %p322 = scmp.ne.s32.totalorder %s314, %s316
      %p323 = scmp.eq.s32.totalorder %s33, 1
      %p324 = por %p322, %p323
      %p325 = scmp.ne.s32.totalorder %s316, %s317
      %p326 = scmp.eq.s32.totalorder %s33, 0
      %p327 = por %p325, %p326
      %p328 = scmp.ne.s32.totalorder %s316, %s317
      %p329 = scmp.eq.s32.totalorder %s34, 1
      %p330 = por %p328, %p329
      %p332 = scmp.ne.s32.totalorder %s317, %s331
      %p333 = scmp.eq.s32.totalorder %s34, 0
      %p334 = por %p332, %p333
      %s336 = sadd.s32 %s335, 1
      %p339 = scmp.eq.s32.totalorder %s28, 1
      %p340 = scmp.ne.s32.totalorder %s335, %s337
      %p341 = scmp.eq.s32.totalorder %s28, 0
      %p342 = por %p340, %p341
      %p343 = scmp.ne.s32.totalorder %s335, %s337
      %p344 = scmp.eq.s32.totalorder %s33, 1
      %p345 = por %p343, %p344
      %p346 = scmp.ne.s32.totalorder %s337, %s338
      %p347 = scmp.eq.s32.totalorder %s33, 0
      %p348 = por %p346, %p347
      %p349 = scmp.ne.s32.totalorder %s337, %s338
      %p350 = scmp.eq.s32.totalorder %s34, 1
      %p351 = por %p349, %p350
      %p353 = scmp.ne.s32.totalorder %s338, %s352
      %p354 = scmp.eq.s32.totalorder %s34, 0
      %p355 = por %p353, %p354
      %s356 = ssub.s32 %s28, %s35
      %p357 = scmp.eq.s32.totalorder %s356, 0
      %s359 = sadd.s32 %s358, 1
      %s360 = scalar_select %p357, %s358, %s359
      %p363 = pneg %p357
      %p364 = scmp.eq.s32.totalorder %s28, 1
      %p365 = por %p363, %p364
      %p366 = scmp.ne.s32.totalorder %s358, %s361
      %p367 = scmp.eq.s32.totalorder %s28, 0
      %p368 = por %p366, %p367
      %p369 = scmp.ne.s32.totalorder %s358, %s361
      %p370 = scmp.eq.s32.totalorder %s33, 1
      %p371 = por %p369, %p370
      %p372 = scmp.ne.s32.totalorder %s361, %s362
      %p373 = scmp.eq.s32.totalorder %s33, 0
      %p374 = por %p372, %p373
      %p375 = scmp.ne.s32.totalorder %s361, %s362
      %p376 = scmp.eq.s32.totalorder %s34, 1
      %p377 = por %p375, %p376
      %p379 = scmp.ne.s32.totalorder %s362, %s378
      %p380 = scmp.eq.s32.totalorder %s34, 0
      %p381 = por %p379, %p380
      %p382 = scmp.le.s32.totalorder 1, %s28
      %p383 = scmp.lt.s32.totalorder %s28, 3
      %p384 = pnand %p382, %p383
      %p385 = pneg %p384
      // Predicated region
      $region9: #{model_forward.1} parent=5 // pred_check
        _
      $region10: #{model_forward.1} parent=5 // pred_check_branch
        %387 = sbr.rel (%p384) target = $region12
      $region11: #{model_forward.1} parent=5 // pred_region
        %s388 = ssub.s32 %s28, 1
        // Predicated region
        $region13: #{model_forward.1} parent=11 // pred_check
          %p389 = pneg %p75
        $region14: #{model_forward.1} parent=11 // pred_check_branch
          %391 = sbr.rel (%p389) target = $region16
        $region15: #{model_forward.1} parent=11 // pred_region
          _
        $region16: #{model_forward.1} parent=11 // pred_fallthru
          _
        // Predicated region
        $region17: #{model_forward.1} parent=11 // pred_check
          %p392 = pneg %p96
        $region18: #{model_forward.1} parent=11 // pred_check_branch
          %394 = sbr.rel (%p392) target = $region20
        $region19: #{model_forward.1} parent=11 // pred_region
          _
        $region20: #{model_forward.1} parent=11 // pred_fallthru
          _
        // Predicated region
        $region21: #{model_forward.1} parent=11 // pred_check
          %p395 = pneg %p117
        $region22: #{model_forward.1} parent=11 // pred_check_branch
          %397 = sbr.rel (%p395) target = $region24
        $region23: #{model_forward.1} parent=11 // pred_region
          _
        $region24: #{model_forward.1} parent=11 // pred_fallthru
          _
        // Predicated region
        $region25: #{model_forward.1} parent=11 // pred_check
          %p398 = pneg %p138
        $region26: #{model_forward.1} parent=11 // pred_check_branch
          %400 = sbr.rel (%p398) target = $region28
        $region27: #{model_forward.1} parent=11 // pred_region
          _
        $region28: #{model_forward.1} parent=11 // pred_fallthru
          _
        // Predicated region
        $region29: #{model_forward.1} parent=11 // pred_check
          %p401 = pneg %p159
        $region30: #{model_forward.1} parent=11 // pred_check_branch
          %403 = sbr.rel (%p401) target = $region32
        $region31: #{model_forward.1} parent=11 // pred_region
          _
        $region32: #{model_forward.1} parent=11 // pred_fallthru
          _
        // Predicated region
        $region33: #{model_forward.1} parent=11 // pred_check
          %p404 = pneg %p180
        $region34: #{model_forward.1} parent=11 // pred_check_branch
          %406 = sbr.rel (%p404) target = $region36
        $region35: #{model_forward.1} parent=11 // pred_region
          %s408 = ssub.s32 16, 16
          %409 = vsyncadd [#allocation3], %s408
          %s411 = sshll.u32 [#allocation2], 4
          %s412 = int_to_ptr.vmem [resolvable:$true] %s411
          %414 = dma.hbm_to_vmem [thread:$0]  %s6, 16, %s412, [#allocation3]
        $region36: #{model_forward.1} parent=11 // pred_fallthru
          _
        // Predicated region
        $region37: #{model_forward.1} parent=11 // pred_check
          %p415 = pneg %p201
        $region38: #{model_forward.1} parent=11 // pred_check_branch
          %417 = sbr.rel (%p415) target = $region40
        $region39: #{model_forward.1} parent=11 // pred_region
          _
        $region40: #{model_forward.1} parent=11 // pred_fallthru
          _
        // Predicated region
        $region41: #{model_forward.1} parent=11 // pred_check
          %p418 = pneg %p222
        $region42: #{model_forward.1} parent=11 // pred_check_branch
          %420 = sbr.rel (%p418) target = $region44
        $region43: #{model_forward.1} parent=11 // pred_region
          %s422 = ssub.s32 16, 16
          %423 = vsyncadd [#allocation6], %s422
          %s425 = sshll.u32 [#allocation5], 4
          %s426 = int_to_ptr.vmem [resolvable:$true] %s425
          %428 = dma.hbm_to_vmem [thread:$0]  %s8, 16, %s426, [#allocation6]
        $region44: #{model_forward.1} parent=11 // pred_fallthru
          _
        // Predicated region
        $region45: #{model_forward.1} parent=11 // pred_check
          %p429 = pneg %p243
        $region46: #{model_forward.1} parent=11 // pred_check_branch
          %431 = sbr.rel (%p429) target = $region48
        $region47: #{model_forward.1} parent=11 // pred_region
          _
        $region48: #{model_forward.1} parent=11 // pred_fallthru
          _
        // Predicated region
        $region49: #{model_forward.1} parent=11 // pred_check
          %p432 = pneg %p264
        $region50: #{model_forward.1} parent=11 // pred_check_branch
          %434 = sbr.rel (%p432) target = $region52
        $region51: #{model_forward.1} parent=11 // pred_region
          %s436 = ssub.s32 16, 16
          %437 = vsyncadd [#allocation6], %s436
          %s439 = sshll.u32 [#allocation7], 4
          %s440 = int_to_ptr.vmem [resolvable:$true] %s439
          %442 = dma.hbm_to_vmem [thread:$0]  %s10, 16, %s440, [#allocation6]
        $region52: #{model_forward.1} parent=11 // pred_fallthru
          _
        // Predicated region
        $region53: #{model_forward.1} parent=11 // pred_check
          %p443 = pneg %p285
        $region54: #{model_forward.1} parent=11 // pred_check_branch
          %445 = sbr.rel (%p443) target = $region56
        $region55: #{model_forward.1} parent=11 // pred_region
          %s447 = ssub.s32 16, 16
          %448 = vsyncadd [#allocation9], %s447
          %s450 = sshll.u32 [#allocation8], 4
          %s451 = int_to_ptr.vmem [resolvable:$true] %s450
          %453 = dma.hbm_to_vmem [thread:$0]  %s11, 16, %s451, [#allocation9]
        $region56: #{model_forward.1} parent=11 // pred_fallthru
          _
        // Predicated region
        $region57: #{model_forward.1} parent=11 // pred_check
          %p454 = pneg %p306
        $region58: #{model_forward.1} parent=11 // pred_check_branch
          %456 = sbr.rel (%p454) target = $region60
        $region59: #{model_forward.1} parent=11 // pred_region
          %s458 = ssub.s32 16, 16
          %459 = vsyncadd [#allocation9], %s458
          %s461 = sshll.u32 [#allocation10], 4
          %s462 = int_to_ptr.vmem [resolvable:$true] %s461
          %464 = dma.hbm_to_vmem [thread:$0]  %s12, 16, %s462, [#allocation9]
        $region60: #{model_forward.1} parent=11 // pred_fallthru
          _
        // Predicated region
        $region61: #{model_forward.1} parent=11 // pred_check
          %p465 = pneg %p327
        $region62: #{model_forward.1} parent=11 // pred_check_branch
          %467 = sbr.rel (%p465) target = $region64
        $region63: #{model_forward.1} parent=11 // pred_region
          _
        $region64: #{model_forward.1} parent=11 // pred_fallthru
          _
        // Predicated region
        $region65: #{model_forward.1} parent=11 // pred_check
          %p468 = pneg %p348
        $region66: #{model_forward.1} parent=11 // pred_check_branch
          %470 = sbr.rel (%p468) target = $region68
        $region67: #{model_forward.1} parent=11 // pred_region
          %s472 = ssub.s32 16, 16
          %473 = vsyncadd [#allocation12], %s472
          %s475 = sshll.u32 [#allocation11], 4
          %s476 = int_to_ptr.vmem [resolvable:$true] %s475
          %478 = dma.hbm_to_vmem [thread:$0]  %s14, 16, %s476, [#allocation12]
        $region68: #{model_forward.1} parent=11 // pred_fallthru
          _
      $region12: #{model_forward.1} parent=5 // pred_fallthru
        _
      %p479 = scmp.lt.s32.totalorder %s28, 2
      // Predicated region
      $region69: #{model_forward.1} parent=5 // pred_check
        %p480 = pneg %p479
      $region70: #{model_forward.1} parent=5 // pred_check_branch
        %482 = sbr.rel (%p480) target = $region72
      $region71: #{model_forward.1} parent=5 // pred_region
        // Predicated region
        $region73: #{model_forward.1} parent=71 // pred_check
          %p483 = pneg %p48
        $region74: #{model_forward.1} parent=71 // pred_check_branch
          %485 = sbr.rel (%p483) target = $region76
        $region75: #{model_forward.1} parent=71 // pred_region
          %p486 = scmp.lt.s32.totalorder %s28, 1
          %s487 = scalar_select %p486, %s28, 1
          %s488 = smul.addr %s487, 8
          %s489 = scalar_lea.vmem %s0, %s488
        $region76: #{model_forward.1} parent=71 // pred_fallthru
          _
      $region72: #{model_forward.1} parent=5 // pred_fallthru
        _
      %p490 = scmp.le.s32.totalorder 1, %s28
      %p491 = scmp.lt.s32.totalorder %s28, 3
      %p492 = pnand %p490, %p491
      %p493 = pneg %p492
      // Predicated region
      $region77: #{model_forward.1} parent=5 // pred_check
        _
      $region78: #{model_forward.1} parent=5 // pred_check_branch
        %495 = sbr.rel (%p492) target = $region80
      $region79: #{model_forward.1} parent=5 // pred_region
        %s496 = ssub.s32 %s28, 1
        // Predicated region
        $region81: #{model_forward.1} parent=79 // pred_check
          %p497 = pneg %p180
        $region82: #{model_forward.1} parent=79 // pred_check_branch
          %499 = sbr.rel (%p497) target = $region84
        $region83: #{model_forward.1} parent=79 // pred_region
          %500 = dma.done [#allocation3], 16
        $region84: #{model_forward.1} parent=79 // pred_fallthru
          _
        // Predicated region
        $region85: #{model_forward.1} parent=79 // pred_check
          %p501 = pneg %p222
        $region86: #{model_forward.1} parent=79 // pred_check_branch
          %503 = sbr.rel (%p501) target = $region88
        $region87: #{model_forward.1} parent=79 // pred_region
          %504 = dma.done [#allocation6], 16
        $region88: #{model_forward.1} parent=79 // pred_fallthru
          _
        // Predicated region
        $region89: #{model_forward.1} parent=79 // pred_check
          %p505 = pneg %p264
        $region90: #{model_forward.1} parent=79 // pred_check_branch
          %507 = sbr.rel (%p505) target = $region92
        $region91: #{model_forward.1} parent=79 // pred_region
          %508 = dma.done [#allocation6], 16
        $region92: #{model_forward.1} parent=79 // pred_fallthru
          _
        // Predicated region
        $region93: #{model_forward.1} parent=79 // pred_check
          %p509 = pneg %p285
        $region94: #{model_forward.1} parent=79 // pred_check_branch
          %511 = sbr.rel (%p509) target = $region96
        $region95: #{model_forward.1} parent=79 // pred_region
          %512 = dma.done [#allocation9], 16
        $region96: #{model_forward.1} parent=79 // pred_fallthru
          _
        // Predicated region
        $region97: #{model_forward.1} parent=79 // pred_check
          %p513 = pneg %p306
        $region98: #{model_forward.1} parent=79 // pred_check_branch
          %515 = sbr.rel (%p513) target = $region100
        $region99: #{model_forward.1} parent=79 // pred_region
          %516 = dma.done [#allocation9], 16
        $region100: #{model_forward.1} parent=79 // pred_fallthru
          _
        // Predicated region
        $region101: #{model_forward.1} parent=79 // pred_check
          %p517 = pneg %p348
        $region102: #{model_forward.1} parent=79 // pred_check_branch
          %519 = sbr.rel (%p517) target = $region104
        $region103: #{model_forward.1} parent=79 // pred_region
          %520 = dma.done [#allocation12], 16
        $region104: #{model_forward.1} parent=79 // pred_fallthru
          _
        %p521 = scmp.lt.s32.totalorder %s33, 1
        %s522 = scalar_select %p521, %s33, 1
        %s523 = smul.addr %s522, 8
        %s524 = scalar_lea.vmem %s0, %s523
        %p525 = pneg %p54
        %p526 = pneg %p51
        %p527 = pneg %p75
        %p528 = pneg %p72
        %p529 = pneg %p96
        %p530 = pneg %p93
        %p531 = pneg %p117
        %p532 = pneg %p114
        %p533 = pneg %p138
        %p534 = pneg %p135
        %p535 = pneg %p159
        %p536 = pneg %p156
        %p537 = pneg %p180
        %p538 = pneg %p177
        %p539 = pneg %p201
        %p540 = pneg %p198
        %p541 = pneg %p222
        %p542 = pneg %p219
        %p543 = pneg %p243
        %p544 = pneg %p240
        %p545 = pneg %p264
        %p546 = pneg %p261
        %p547 = pneg %p285
        %p548 = pneg %p282
        %p549 = pneg %p306
        %p550 = pneg %p303
        %p551 = pneg %p327
        %p552 = pneg %p324
        %p553 = pneg %p348
        %p554 = pneg %p345
        %p555 = pneg %p374
        %p556 = pneg %p371
        %s557 = sand.u32 %s361, 1
        %s558 = scalar_lea.sflag [#allocation4], %s557
        %s559 = sand.u32 %s361, 1
        %s560 = scalar_lea.vmem [#allocation13], %s559
        %p561 = scmp.lt.s32.totalorder %s33, 1
        %s562 = scalar_select %p561, %s33, 1
        %s563 = smul.addr %s562, 8
        %s564 = scalar_lea.vmem %s0, %s563
        %v565 = vld [vmem:[%s564] sm:$0xff]
        %v566 = vld [vmem:[%s2] sm:$0x1]
        %v568 = vlaneseq
        %v569 = vshrl.u32 %v568, 7
        %v570 = vsub.s32 0, %v569
        %v571 = vrot.slane %v566, %v570
        %v573 = vld [vmem:[%s4] sm:$0x1]
        %v575 = vlaneseq
        %v576 = vshrl.u32 %v575, 7
        %v577 = vsub.s32 0, %v576
        %v578 = vrot.slane %v573, %v577
        %v580 = vld [vmem:[#allocation5] sm:$0x1]
        %v582 = vlaneseq
        %v583 = vshrl.u32 %v582, 7
        %v584 = vsub.s32 0, %v583
        %v585 = vrot.slane %v580, %v584
        %v587 = vld [vmem:[#allocation7] sm:$0x1]
        %v589 = vlaneseq
        %v590 = vshrl.u32 %v589, 7
        %v591 = vsub.s32 0, %v590
        %v592 = vrot.slane %v587, %v591
        %v594 = vld [vmem:[%s5] sm:$0x1]
        %v596 = vlaneseq
        %v597 = vshrl.u32 %v596, 7
        %v598 = vsub.s32 0, %v597
        %v599 = vrot.slane %v594, %v598
        %v601 = vld [vmem:[#allocation2] sm:$0x1]
        %v603 = vlaneseq
        %v604 = vshrl.u32 %v603, 7
        %v605 = vsub.s32 0, %v604
        %v606 = vrot.slane %v601, %v605
        %v608 = vld [vmem:[#allocation8] sm:$0x1]
        %v610 = vlaneseq
        %v611 = vshrl.u32 %v610, 7
        %v612 = vsub.s32 0, %v611
        %v613 = vrot.slane %v608, %v612
        %v615 = vld [vmem:[#allocation10] sm:$0x1]
        %v617 = vlaneseq
        %v618 = vshrl.u32 %v617, 7
        %v619 = vsub.s32 0, %v618
        %v620 = vrot.slane %v615, %v619
        loop: start=0, step=1, limit=2
        $region105: #{model_forward.1} parent=79 // loop_pre_header
          _
        $region106: #{model_forward.1} parent=79 // loop_header
          %s623 = sphi 0, %s627
          %p624 = scmp.ge.s32.totalorder %s623, 2
          %v628 = vphi %v565, %v1773
        $region107: #{model_forward.1} parent=79 // loop_header_branch
          %626 = sbr.rel (%p624) target = $region111
        $region108: #{model_forward.1} parent=79 // loop_body
          %v629 = vld [vmem:[%s1] sm:$0xff]
          %v630 = vld [vmem:[%s1 + $0x8] sm:$0xff]
          %v631 = vld [vmem:[%s1 + $0x10] sm:$0xff]
          %v632 = vld [vmem:[%s1 + $0x18] sm:$0xff]
          %vm633 = vcmask 261120
          %v635 = vsel %vm633, %v628, 0
          %637 = vmatprep.subr.mxu0 0.0
          %638 = vmatpush1.msra.mxu0 %v629
          %639 = vmatprep.subr.mxu0 0.0
          %640 = vmatpush1.msra.mxu0 %v630
          %641 = vmatprep.subr.mxu0 0.0
          %642 = vmatpush1.msra.mxu0 %v631
          %643 = vmatprep.subr.mxu0 0.0
          %644 = vmatpush1.msra.mxu0 %v632
          %645 = vmatprep.subr.mxu0 0.0
          %646 = vmatpush1.msra.mxu0 0.0
          %647 = vmatprep.subr.mxu0 0.0
          %648 = vmatpush1.msra.mxu0 0.0
          %649 = vmatprep.subr.mxu0 0.0
          %650 = vmatpush1.msra.mxu0 0.0
          %651 = vmatprep.subr.mxu0 0.0
          %652 = vmatpush1.msra.mxu0 0.0
          %653 = vmatprep.subr.mxu0 0.0
          %654 = vmatpush1.msra.mxu0 0.0
          %655 = vmatprep.subr.mxu0 0.0
          %656 = vmatpush1.msra.mxu0 0.0
          %657 = vmatprep.subr.mxu0 0.0
          %658 = vmatpush1.msra.mxu0 0.0
          %659 = vmatprep.subr.mxu0 0.0
          %660 = vmatpush1.msra.mxu0 0.0
          %661 = vmatprep.subr.mxu0 0.0
          %662 = vmatpush1.msra.mxu0 0.0
          %663 = vmatprep.subr.mxu0 0.0
          %664 = vmatpush1.msra.mxu0 0.0
          %665 = vmatprep.subr.mxu0 0.0
          %666 = vmatpush1.msra.mxu0 0.0
          %667 = vmatprep.subr.mxu0 0.0
          %668 = vmatpush1.msra.mxu0 0.0
          %669 = vmatprep.subr.mxu0 0.0
          %670 = vmatpush1.msra.mxu0 0.0
          %671 = vmatprep.subr.mxu0 0.0
          %672 = vmatpush1.msra.mxu0 0.0
          %673 = vmatprep.subr.mxu0 0.0
          %674 = vmatpush1.msra.mxu0 0.0
          %675 = vmatprep.subr.mxu0 0.0
          %676 = vmatpush1.msra.mxu0 0.0
          %677 = vmatprep.subr.mxu0 0.0
          %678 = vmatpush1.msra.mxu0 0.0
          %679 = vmatprep.subr.mxu0 0.0
          %680 = vmatpush1.msra.mxu0 0.0
          %681 = vmatprep.subr.mxu0 0.0
          %682 = vmatpush1.msra.mxu0 0.0
          %683 = vmatprep.subr.mxu0 0.0
          %684 = vmatpush1.msra.mxu0 0.0
          %685 = vmatprep.subr.mxu0 0.0
          %686 = vmatpush1.msra.mxu0 0.0
          %687 = vmatprep.subr.mxu0 0.0
          %688 = vmatpush1.msra.mxu0 0.0
          %689 = vmatprep.subr.mxu0 0.0
          %690 = vmatpush1.msra.mxu0 0.0
          %691 = vmatprep.subr.mxu0 0.0
          %692 = vmatpush1.msra.mxu0 0.0
          %693 = vmatprep.subr.mxu0 0.0
          %694 = vmatpush1.msra.mxu0 0.0
          %695 = vmatprep.subr.mxu0 0.0
          %696 = vmatpush1.msra.mxu0 0.0
          %697 = vmatprep.subr.mxu0 0.0
          %698 = vmatpush1.msra.mxu0 0.0
          %699 = vmatprep.subr.mxu0 0.0
          %700 = vmatpush1.msra.mxu0 0.0
          %701 = vmatprep.mubr.f32.mxu0 0.0
          %702 = vmatmul.mubr.f32.gmra.mrb[0].mxu0 %v635
          %v703 = vpop.f32.mrb[0].mxu0
          %v704 = vadd.f32 %v571, %v703
          %v705 = vpop.f32.mrb[0].mxu0
          %706 = vdwg.mxu0
          %v708 = vrot.slane %v704, 6
          %709 = vrot.lane.b32.xlu0 %v708, 120
          %v710 = vpop.permute.xlu0 %709
          %v712 = vrot.slane %v704, 4
          %713 = vrot.lane.b32.xlu0 %v712, 112
          %v714 = vpop.permute.xlu0 %713
          %v716 = vrot.slane %v704, 2
          %717 = vrot.lane.b32.xlu0 %v716, 104
          %v718 = vpop.permute.xlu0 %717
          %vm720 = vcmask 1041408
          %v721 = vsel %vm720, %v704, %v710
          %vm722 = vcmask 1043456
          %v723 = vsel %vm722, %v721, %v714
          %vm724 = vcmask 1045504
          %v725 = vsel %vm724, %v723, %v718
          %727 = vrot.lane.b32.xlu0 %v725, 96
          %v728 = vpop.permute.xlu0 %727
          %vm729 = vcmask 64512
          %v730 = vsel %vm729, %v725, 0
          %v732 = vsel %vm729, %v728, 0
          %734 = vmatprep.subr.mxu0 0.0
          %735 = vmatpush1.xpose.msra.mxu0 %v732
          %736 = vmatprep.subr.mxu0 0.0
          %737 = vmatpush1.xpose.msra.mxu0 0.0
          %738 = vmatprep.subr.mxu0 0.0
          %739 = vmatpush1.xpose.msra.mxu0 0.0
          %740 = vmatprep.subr.mxu0 0.0
          %741 = vmatpush1.xpose.msra.mxu0 0.0
          %742 = vmatprep.subr.mxu0 0.0
          %743 = vmatpush1.xpose.msra.mxu0 0.0
          %744 = vmatprep.subr.mxu0 0.0
          %745 = vmatpush1.xpose.msra.mxu0 0.0
          %746 = vmatprep.subr.mxu0 0.0
          %747 = vmatpush1.xpose.msra.mxu0 0.0
          %748 = vmatprep.subr.mxu0 0.0
          %749 = vmatpush1.xpose.msra.mxu0 0.0
          %750 = vmatprep.subr.mxu0 0.0
          %751 = vmatpush1.xpose.msra.mxu0 0.0
          %752 = vmatprep.subr.mxu0 0.0
          %753 = vmatpush1.xpose.msra.mxu0 0.0
          %754 = vmatprep.subr.mxu0 0.0
          %755 = vmatpush1.xpose.msra.mxu0 0.0
          %756 = vmatprep.subr.mxu0 0.0
          %757 = vmatpush1.xpose.msra.mxu0 0.0
          %758 = vmatprep.subr.mxu0 0.0
          %759 = vmatpush1.xpose.msra.mxu0 0.0
          %760 = vmatprep.subr.mxu0 0.0
          %761 = vmatpush1.xpose.msra.mxu0 0.0
          %762 = vmatprep.subr.mxu0 0.0
          %763 = vmatpush1.xpose.msra.mxu0 0.0
          %764 = vmatprep.subr.mxu0 0.0
          %765 = vmatpush1.xpose.msra.mxu0 0.0
          %766 = vmatprep.subr.mxu0 0.0
          %767 = vmatpush1.xpose.msra.mxu0 0.0
          %768 = vmatprep.subr.mxu0 0.0
          %769 = vmatpush1.xpose.msra.mxu0 0.0
          %770 = vmatprep.subr.mxu0 0.0
          %771 = vmatpush1.xpose.msra.mxu0 0.0
          %772 = vmatprep.subr.mxu0 0.0
          %773 = vmatpush1.xpose.msra.mxu0 0.0
          %774 = vmatprep.subr.mxu0 0.0
          %775 = vmatpush1.xpose.msra.mxu0 0.0
          %776 = vmatprep.subr.mxu0 0.0
          %777 = vmatpush1.xpose.msra.mxu0 0.0
          %778 = vmatprep.subr.mxu0 0.0
          %779 = vmatpush1.xpose.msra.mxu0 0.0
          %780 = vmatprep.subr.mxu0 0.0
          %781 = vmatpush1.xpose.msra.mxu0 0.0
          %782 = vmatprep.subr.mxu0 0.0
          %783 = vmatpush1.xpose.msra.mxu0 0.0
          %784 = vmatprep.subr.mxu0 0.0
          %785 = vmatpush1.xpose.msra.mxu0 0.0
          %786 = vmatprep.subr.mxu0 0.0
          %787 = vmatpush1.xpose.msra.mxu0 0.0
          %788 = vmatprep.subr.mxu0 0.0
          %789 = vmatpush1.xpose.msra.mxu0 0.0
          %790 = vmatprep.subr.mxu0 0.0
          %791 = vmatpush1.xpose.msra.mxu0 0.0
          %792 = vmatprep.subr.mxu0 0.0
          %793 = vmatpush1.xpose.msra.mxu0 0.0
          %794 = vmatprep.subr.mxu0 0.0
          %795 = vmatpush1.xpose.msra.mxu0 0.0
          %796 = vmatprep.subr.mxu0 0.0
          %797 = vmatpush1.xpose.msra.mxu0 0.0
          %798 = vmatprep.mubr.f32.mxu0 0.0
          %799 = vmatmul.mubr.f32.gmra.mrb[0].mxu0 %v730
          %v800 = vpop.f32.mrb[0].mxu0
          %v801 = vadd.f32 0.0, %v800
          %v802 = vpop.f32.mrb[0].mxu0
          %803 = vdwg.mxu0
          %v804 = vmul.f32 %v801, 0.35355338
          %v805 = vsel %vm729, %v804, -inf
          %806 = vmax.xlane.f32.xlu0 %v805
          %v807 = vpop.xlane.xlu0 %806
          %v808 = vsub.f32 %v804, %v807
          %v809 = vmul.f32 %v808, 1.442695
          %v810 = vpow.pop %v809
          %v811 = vsel %vm729, %v810, 0.0
          %812 = vadd.xlane.f32.xlu0 %v811
          %v813 = vpop.xlane.xlu0 %812
          %v814 = vrcp.pop %v813
          %v815 = vmul.f32 %v810, %v814
          %816 = vrot.lane.b32.xlu0 %v725, 64
          %v817 = vpop.permute.xlu0 %816
          %v820 = vsel %vm729, %v815, 0
          %822 = vmatprep.subr.mxu0 0.0
          %823 = vmatpush1.msra.mxu0 %v817
          %824 = vmatprep.subr.mxu0 0.0
          %825 = vmatpush1.msra.mxu0 0.0
          %826 = vmatprep.subr.mxu0 0.0
          %827 = vmatpush1.msra.mxu0 0.0
          %828 = vmatprep.subr.mxu0 0.0
          %829 = vmatpush1.msra.mxu0 0.0
          %830 = vmatprep.subr.mxu0 0.0
          %831 = vmatpush1.msra.mxu0 0.0
          %832 = vmatprep.subr.mxu0 0.0
          %833 = vmatpush1.msra.mxu0 0.0
          %834 = vmatprep.subr.mxu0 0.0
          %835 = vmatpush1.msra.mxu0 0.0
          %836 = vmatprep.subr.mxu0 0.0
          %837 = vmatpush1.msra.mxu0 0.0
          %838 = vmatprep.subr.mxu0 0.0
          %839 = vmatpush1.msra.mxu0 0.0
          %840 = vmatprep.subr.mxu0 0.0
          %841 = vmatpush1.msra.mxu0 0.0
          %842 = vmatprep.subr.mxu0 0.0
          %843 = vmatpush1.msra.mxu0 0.0
          %844 = vmatprep.subr.mxu0 0.0
          %845 = vmatpush1.msra.mxu0 0.0
          %846 = vmatprep.subr.mxu0 0.0
          %847 = vmatpush1.msra.mxu0 0.0
          %848 = vmatprep.subr.mxu0 0.0
          %849 = vmatpush1.msra.mxu0 0.0
          %850 = vmatprep.subr.mxu0 0.0
          %851 = vmatpush1.msra.mxu0 0.0
          %852 = vmatprep.subr.mxu0 0.0
          %853 = vmatpush1.msra.mxu0 0.0
          %854 = vmatprep.subr.mxu0 0.0
          %855 = vmatpush1.msra.mxu0 0.0
          %856 = vmatprep.subr.mxu0 0.0
          %857 = vmatpush1.msra.mxu0 0.0
          %858 = vmatprep.subr.mxu0 0.0
          %859 = vmatpush1.msra.mxu0 0.0
          %860 = vmatprep.subr.mxu0 0.0
          %861 = vmatpush1.msra.mxu0 0.0
          %862 = vmatprep.subr.mxu0 0.0
          %863 = vmatpush1.msra.mxu0 0.0
          %864 = vmatprep.subr.mxu0 0.0
          %865 = vmatpush1.msra.mxu0 0.0
          %866 = vmatprep.subr.mxu0 0.0
          %867 = vmatpush1.msra.mxu0 0.0
          %868 = vmatprep.subr.mxu0 0.0
          %869 = vmatpush1.msra.mxu0 0.0
          %870 = vmatprep.subr.mxu0 0.0
          %871 = vmatpush1.msra.mxu0 0.0
          %872 = vmatprep.subr.mxu0 0.0
          %873 = vmatpush1.msra.mxu0 0.0
          %874 = vmatprep.subr.mxu0 0.0
          %875 = vmatpush1.msra.mxu0 0.0
          %876 = vmatprep.subr.mxu0 0.0
          %877 = vmatpush1.msra.mxu0 0.0
          %878 = vmatprep.subr.mxu0 0.0
          %879 = vmatpush1.msra.mxu0 0.0
          %880 = vmatprep.subr.mxu0 0.0
          %881 = vmatpush1.msra.mxu0 0.0
          %882 = vmatprep.subr.mxu0 0.0
          %883 = vmatpush1.msra.mxu0 0.0
          %884 = vmatprep.subr.mxu0 0.0
          %885 = vmatpush1.msra.mxu0 0.0
          %886 = vmatprep.mubr.f32.mxu0 0.0
          %887 = vmatmul.mubr.f32.gmra.mrb[0].mxu0 %v820
          %v888 = vpop.f32.mrb[0].mxu0
          %v889 = vadd.f32 0.0, %v888
          %v890 = vpop.f32.mrb[0].mxu0
          %891 = vdwg.mxu0
          %v893 = vrot.slane %v889, 2
          %894 = vrot.lane.b32.xlu0 %v893, 8
          %v895 = vpop.permute.xlu0 %894
          %v897 = vrot.slane %v889, 4
          %898 = vrot.lane.b32.xlu0 %v897, 16
          %v899 = vpop.permute.xlu0 %898
          %v901 = vrot.slane %v889, 6
          %902 = vrot.lane.b32.xlu0 %v901, 24
          %v903 = vpop.permute.xlu0 %902
          %v905 = vsel %vm729, %v889, %v895
          %vm906 = vcmask 130048
          %v907 = vsel %vm906, %v905, %v899
          %vm908 = vcmask 195584
          %v909 = vsel %vm908, %v907, %v903
          %911 = vrot.lane.b32.xlu0 %v704, 120
          %v912 = vpop.permute.xlu0 %911
          %914 = vrot.lane.b32.xlu0 %v708, 112
          %v915 = vpop.permute.xlu0 %914
          %917 = vrot.lane.b32.xlu0 %v712, 104
          %v918 = vpop.permute.xlu0 %917
          %v920 = vsel %vm720, %v716, %v912
          %v921 = vsel %vm722, %v920, %v915
          %v922 = vsel %vm724, %v921, %v918
          %924 = vrot.lane.b32.xlu0 %v922, 96
          %v925 = vpop.permute.xlu0 %924
          %v926 = vsel %vm729, %v922, 0
          %v928 = vsel %vm729, %v925, 0
          %930 = vmatprep.subr.mxu0 0.0
          %931 = vmatpush1.xpose.msra.mxu0 %v928
          %932 = vmatprep.subr.mxu0 0.0
          %933 = vmatpush1.xpose.msra.mxu0 0.0
          %934 = vmatprep.subr.mxu0 0.0
          %935 = vmatpush1.xpose.msra.mxu0 0.0
          %936 = vmatprep.subr.mxu0 0.0
          %937 = vmatpush1.xpose.msra.mxu0 0.0
          %938 = vmatprep.subr.mxu0 0.0
          %939 = vmatpush1.xpose.msra.mxu0 0.0
          %940 = vmatprep.subr.mxu0 0.0
          %941 = vmatpush1.xpose.msra.mxu0 0.0
          %942 = vmatprep.subr.mxu0 0.0
          %943 = vmatpush1.xpose.msra.mxu0 0.0
          %944 = vmatprep.subr.mxu0 0.0
          %945 = vmatpush1.xpose.msra.mxu0 0.0
          %946 = vmatprep.subr.mxu0 0.0
          %947 = vmatpush1.xpose.msra.mxu0 0.0
          %948 = vmatprep.subr.mxu0 0.0
          %949 = vmatpush1.xpose.msra.mxu0 0.0
          %950 = vmatprep.subr.mxu0 0.0
          %951 = vmatpush1.xpose.msra.mxu0 0.0
          %952 = vmatprep.subr.mxu0 0.0
          %953 = vmatpush1.xpose.msra.mxu0 0.0
          %954 = vmatprep.subr.mxu0 0.0
          %955 = vmatpush1.xpose.msra.mxu0 0.0
          %956 = vmatprep.subr.mxu0 0.0
          %957 = vmatpush1.xpose.msra.mxu0 0.0
          %958 = vmatprep.subr.mxu0 0.0
          %959 = vmatpush1.xpose.msra.mxu0 0.0
          %960 = vmatprep.subr.mxu0 0.0
          %961 = vmatpush1.xpose.msra.mxu0 0.0
          %962 = vmatprep.subr.mxu0 0.0
          %963 = vmatpush1.xpose.msra.mxu0 0.0
          %964 = vmatprep.subr.mxu0 0.0
          %965 = vmatpush1.xpose.msra.mxu0 0.0
          %966 = vmatprep.subr.mxu0 0.0
          %967 = vmatpush1.xpose.msra.mxu0 0.0
          %968 = vmatprep.subr.mxu0 0.0
          %969 = vmatpush1.xpose.msra.mxu0 0.0
          %970 = vmatprep.subr.mxu0 0.0
          %971 = vmatpush1.xpose.msra.mxu0 0.0
          %972 = vmatprep.subr.mxu0 0.0
          %973 = vmatpush1.xpose.msra.mxu0 0.0
          %974 = vmatprep.subr.mxu0 0.0
          %975 = vmatpush1.xpose.msra.mxu0 0.0
          %976 = vmatprep.subr.mxu0 0.0
          %977 = vmatpush1.xpose.msra.mxu0 0.0
          %978 = vmatprep.subr.mxu0 0.0
          %979 = vmatpush1.xpose.msra.mxu0 0.0
          %980 = vmatprep.subr.mxu0 0.0
          %981 = vmatpush1.xpose.msra.mxu0 0.0
          %982 = vmatprep.subr.mxu0 0.0
          %983 = vmatpush1.xpose.msra.mxu0 0.0
          %984 = vmatprep.subr.mxu0 0.0
          %985 = vmatpush1.xpose.msra.mxu0 0.0
          %986 = vmatprep.subr.mxu0 0.0
          %987 = vmatpush1.xpose.msra.mxu0 0.0
          %988 = vmatprep.subr.mxu0 0.0
          %989 = vmatpush1.xpose.msra.mxu0 0.0
          %990 = vmatprep.subr.mxu0 0.0
          %991 = vmatpush1.xpose.msra.mxu0 0.0
          %992 = vmatprep.subr.mxu0 0.0
          %993 = vmatpush1.xpose.msra.mxu0 0.0
          %994 = vmatprep.mubr.f32.mxu0 0.0
          %995 = vmatmul.mubr.f32.gmra.mrb[0].mxu0 %v926
          %v996 = vpop.f32.mrb[0].mxu0
          %v997 = vadd.f32 0.0, %v996
          %v998 = vpop.f32.mrb[0].mxu0
          %999 = vdwg.mxu0
          %v1000 = vmul.f32 %v997, 0.35355338
          %v1001 = vsel %vm729, %v1000, -inf
          %1002 = vmax.xlane.f32.xlu0 %v1001
          %v1003 = vpop.xlane.xlu0 %1002
          %v1004 = vsub.f32 %v1000, %v1003
          %v1005 = vmul.f32 %v1004, 1.442695
          %v1006 = vpow.pop %v1005
          %v1007 = vsel %vm729, %v1006, 0.0
          %1008 = vadd.xlane.f32.xlu0 %v1007
          %v1009 = vpop.xlane.xlu0 %1008
          %v1010 = vrcp.pop %v1009
          %v1011 = vmul.f32 %v1006, %v1010
          %1012 = vrot.lane.b32.xlu0 %v922, 64
          %v1013 = vpop.permute.xlu0 %1012
          %v1016 = vsel %vm729, %v1011, 0
          %1018 = vmatprep.subr.mxu0 0.0
          %1019 = vmatpush1.msra.mxu0 %v1013
          %1020 = vmatprep.subr.mxu0 0.0
          %1021 = vmatpush1.msra.mxu0 0.0
          %1022 = vmatprep.subr.mxu0 0.0
          %1023 = vmatpush1.msra.mxu0 0.0
          %1024 = vmatprep.subr.mxu0 0.0
          %1025 = vmatpush1.msra.mxu0 0.0
          %1026 = vmatprep.subr.mxu0 0.0
          %1027 = vmatpush1.msra.mxu0 0.0
          %1028 = vmatprep.subr.mxu0 0.0
          %1029 = vmatpush1.msra.mxu0 0.0
          %1030 = vmatprep.subr.mxu0 0.0
          %1031 = vmatpush1.msra.mxu0 0.0
          %1032 = vmatprep.subr.mxu0 0.0
          %1033 = vmatpush1.msra.mxu0 0.0
          %1034 = vmatprep.subr.mxu0 0.0
          %1035 = vmatpush1.msra.mxu0 0.0
          %1036 = vmatprep.subr.mxu0 0.0
          %1037 = vmatpush1.msra.mxu0 0.0
          %1038 = vmatprep.subr.mxu0 0.0
          %1039 = vmatpush1.msra.mxu0 0.0
          %1040 = vmatprep.subr.mxu0 0.0
          %1041 = vmatpush1.msra.mxu0 0.0
          %1042 = vmatprep.subr.mxu0 0.0
          %1043 = vmatpush1.msra.mxu0 0.0
          %1044 = vmatprep.subr.mxu0 0.0
          %1045 = vmatpush1.msra.mxu0 0.0
          %1046 = vmatprep.subr.mxu0 0.0
          %1047 = vmatpush1.msra.mxu0 0.0
          %1048 = vmatprep.subr.mxu0 0.0
          %1049 = vmatpush1.msra.mxu0 0.0
          %1050 = vmatprep.subr.mxu0 0.0
          %1051 = vmatpush1.msra.mxu0 0.0
          %1052 = vmatprep.subr.mxu0 0.0
          %1053 = vmatpush1.msra.mxu0 0.0
          %1054 = vmatprep.subr.mxu0 0.0
          %1055 = vmatpush1.msra.mxu0 0.0
          %1056 = vmatprep.subr.mxu0 0.0
          %1057 = vmatpush1.msra.mxu0 0.0
          %1058 = vmatprep.subr.mxu0 0.0
          %1059 = vmatpush1.msra.mxu0 0.0
          %1060 = vmatprep.subr.mxu0 0.0
          %1061 = vmatpush1.msra.mxu0 0.0
          %1062 = vmatprep.subr.mxu0 0.0
          %1063 = vmatpush1.msra.mxu0 0.0
          %1064 = vmatprep.subr.mxu0 0.0
          %1065 = vmatpush1.msra.mxu0 0.0
          %1066 = vmatprep.subr.mxu0 0.0
          %1067 = vmatpush1.msra.mxu0 0.0
          %1068 = vmatprep.subr.mxu0 0.0
          %1069 = vmatpush1.msra.mxu0 0.0
          %1070 = vmatprep.subr.mxu0 0.0
          %1071 = vmatpush1.msra.mxu0 0.0
          %1072 = vmatprep.subr.mxu0 0.0
          %1073 = vmatpush1.msra.mxu0 0.0
          %1074 = vmatprep.subr.mxu0 0.0
          %1075 = vmatpush1.msra.mxu0 0.0
          %1076 = vmatprep.subr.mxu0 0.0
          %1077 = vmatpush1.msra.mxu0 0.0
          %1078 = vmatprep.subr.mxu0 0.0
          %1079 = vmatpush1.msra.mxu0 0.0
          %1080 = vmatprep.subr.mxu0 0.0
          %1081 = vmatpush1.msra.mxu0 0.0
          %1082 = vmatprep.mubr.f32.mxu0 0.0
          %1083 = vmatmul.mubr.f32.gmra.mrb[0].mxu0 %v1016
          %v1084 = vpop.f32.mrb[0].mxu0
          %v1085 = vadd.f32 0.0, %v1084
          %v1086 = vpop.f32.mrb[0].mxu0
          %1087 = vdwg.mxu0
          %v1089 = vrot.slane %v1085, 2
          %1090 = vrot.lane.b32.xlu0 %v1089, 8
          %v1091 = vpop.permute.xlu0 %1090
          %v1093 = vrot.slane %v1085, 4
          %1094 = vrot.lane.b32.xlu0 %v1093, 16
          %v1095 = vpop.permute.xlu0 %1094
          %v1097 = vrot.slane %v1085, 6
          %1098 = vrot.lane.b32.xlu0 %v1097, 24
          %v1099 = vpop.permute.xlu0 %1098
          %v1101 = vsel %vm729, %v1085, %v1091
          %v1102 = vsel %vm906, %v1101, %v1095
          %v1103 = vsel %vm908, %v1102, %v1099
          %1105 = vrot.lane.b32.xlu0 %v716, 120
          %v1106 = vpop.permute.xlu0 %1105
          %1108 = vrot.lane.b32.xlu0 %v704, 112
          %v1109 = vpop.permute.xlu0 %1108
          %1111 = vrot.lane.b32.xlu0 %v708, 104
          %v1112 = vpop.permute.xlu0 %1111
          %v1114 = vsel %vm720, %v712, %v1106
          %v1115 = vsel %vm722, %v1114, %v1109
          %v1116 = vsel %vm724, %v1115, %v1112
          %1118 = vrot.lane.b32.xlu0 %v1116, 96
          %v1119 = vpop.permute.xlu0 %1118
          %v1120 = vsel %vm729, %v1116, 0
          %v1122 = vsel %vm729, %v1119, 0
          %1124 = vmatprep.subr.mxu0 0.0
          %1125 = vmatpush1.xpose.msra.mxu0 %v1122
          %1126 = vmatprep.subr.mxu0 0.0
          %1127 = vmatpush1.xpose.msra.mxu0 0.0
          %1128 = vmatprep.subr.mxu0 0.0
          %1129 = vmatpush1.xpose.msra.mxu0 0.0
          %1130 = vmatprep.subr.mxu0 0.0
          %1131 = vmatpush1.xpose.msra.mxu0 0.0
          %1132 = vmatprep.subr.mxu0 0.0
          %1133 = vmatpush1.xpose.msra.mxu0 0.0
          %1134 = vmatprep.subr.mxu0 0.0
          %1135 = vmatpush1.xpose.msra.mxu0 0.0
          %1136 = vmatprep.subr.mxu0 0.0
          %1137 = vmatpush1.xpose.msra.mxu0 0.0
          %1138 = vmatprep.subr.mxu0 0.0
          %1139 = vmatpush1.xpose.msra.mxu0 0.0
          %1140 = vmatprep.subr.mxu0 0.0
          %1141 = vmatpush1.xpose.msra.mxu0 0.0
          %1142 = vmatprep.subr.mxu0 0.0
          %1143 = vmatpush1.xpose.msra.mxu0 0.0
          %1144 = vmatprep.subr.mxu0 0.0
          %1145 = vmatpush1.xpose.msra.mxu0 0.0
          %1146 = vmatprep.subr.mxu0 0.0
          %1147 = vmatpush1.xpose.msra.mxu0 0.0
          %1148 = vmatprep.subr.mxu0 0.0
          %1149 = vmatpush1.xpose.msra.mxu0 0.0
          %1150 = vmatprep.subr.mxu0 0.0
          %1151 = vmatpush1.xpose.msra.mxu0 0.0
          %1152 = vmatprep.subr.mxu0 0.0
          %1153 = vmatpush1.xpose.msra.mxu0 0.0
          %1154 = vmatprep.subr.mxu0 0.0
          %1155 = vmatpush1.xpose.msra.mxu0 0.0
          %1156 = vmatprep.subr.mxu0 0.0
          %1157 = vmatpush1.xpose.msra.mxu0 0.0
          %1158 = vmatprep.subr.mxu0 0.0
          %1159 = vmatpush1.xpose.msra.mxu0 0.0
          %1160 = vmatprep.subr.mxu0 0.0
          %1161 = vmatpush1.xpose.msra.mxu0 0.0
          %1162 = vmatprep.subr.mxu0 0.0
          %1163 = vmatpush1.xpose.msra.mxu0 0.0
          %1164 = vmatprep.subr.mxu0 0.0
          %1165 = vmatpush1.xpose.msra.mxu0 0.0
          %1166 = vmatprep.subr.mxu0 0.0
          %1167 = vmatpush1.xpose.msra.mxu0 0.0
          %1168 = vmatprep.subr.mxu0 0.0
          %1169 = vmatpush1.xpose.msra.mxu0 0.0
          %1170 = vmatprep.subr.mxu0 0.0
          %1171 = vmatpush1.xpose.msra.mxu0 0.0
          %1172 = vmatprep.subr.mxu0 0.0
          %1173 = vmatpush1.xpose.msra.mxu0 0.0
          %1174 = vmatprep.subr.mxu0 0.0
          %1175 = vmatpush1.xpose.msra.mxu0 0.0
          %1176 = vmatprep.subr.mxu0 0.0
          %1177 = vmatpush1.xpose.msra.mxu0 0.0
          %1178 = vmatprep.subr.mxu0 0.0
          %1179 = vmatpush1.xpose.msra.mxu0 0.0
          %1180 = vmatprep.subr.mxu0 0.0
          %1181 = vmatpush1.xpose.msra.mxu0 0.0
          %1182 = vmatprep.subr.mxu0 0.0
          %1183 = vmatpush1.xpose.msra.mxu0 0.0
          %1184 = vmatprep.subr.mxu0 0.0
          %1185 = vmatpush1.xpose.msra.mxu0 0.0
          %1186 = vmatprep.subr.mxu0 0.0
          %1187 = vmatpush1.xpose.msra.mxu0 0.0
          %1188 = vmatprep.mubr.f32.mxu0 0.0
          %1189 = vmatmul.mubr.f32.gmra.mrb[0].mxu0 %v1120
          %v1190 = vpop.f32.mrb[0].mxu0
          %v1191 = vadd.f32 0.0, %v1190
          %v1192 = vpop.f32.mrb[0].mxu0
          %1193 = vdwg.mxu0
          %v1194 = vmul.f32 %v1191, 0.35355338
          %v1195 = vsel %vm729, %v1194, -inf
          %1196 = vmax.xlane.f32.xlu0 %v1195
          %v1197 = vpop.xlane.xlu0 %1196
          %v1198 = vsub.f32 %v1194, %v1197
          %v1199 = vmul.f32 %v1198, 1.442695
          %v1200 = vpow.pop %v1199
          %v1201 = vsel %vm729, %v1200, 0.0
          %1202 = vadd.xlane.f32.xlu0 %v1201
          %v1203 = vpop.xlane.xlu0 %1202
          %v1204 = vrcp.pop %v1203
          %v1205 = vmul.f32 %v1200, %v1204
          %1206 = vrot.lane.b32.xlu0 %v1116, 64
          %v1207 = vpop.permute.xlu0 %1206
          %v1210 = vsel %vm729, %v1205, 0
          %1212 = vmatprep.subr.mxu0 0.0
          %1213 = vmatpush1.msra.mxu0 %v1207
          %1214 = vmatprep.subr.mxu0 0.0
          %1215 = vmatpush1.msra.mxu0 0.0
          %1216 = vmatprep.subr.mxu0 0.0
          %1217 = vmatpush1.msra.mxu0 0.0
          %1218 = vmatprep.subr.mxu0 0.0
          %1219 = vmatpush1.msra.mxu0 0.0
          %1220 = vmatprep.subr.mxu0 0.0
          %1221 = vmatpush1.msra.mxu0 0.0
          %1222 = vmatprep.subr.mxu0 0.0
          %1223 = vmatpush1.msra.mxu0 0.0
          %1224 = vmatprep.subr.mxu0 0.0
          %1225 = vmatpush1.msra.mxu0 0.0
          %1226 = vmatprep.subr.mxu0 0.0
          %1227 = vmatpush1.msra.mxu0 0.0
          %1228 = vmatprep.subr.mxu0 0.0
          %1229 = vmatpush1.msra.mxu0 0.0
          %1230 = vmatprep.subr.mxu0 0.0
          %1231 = vmatpush1.msra.mxu0 0.0
          %1232 = vmatprep.subr.mxu0 0.0
          %1233 = vmatpush1.msra.mxu0 0.0
          %1234 = vmatprep.subr.mxu0 0.0
          %1235 = vmatpush1.msra.mxu0 0.0
          %1236 = vmatprep.subr.mxu0 0.0
          %1237 = vmatpush1.msra.mxu0 0.0
          %1238 = vmatprep.subr.mxu0 0.0
          %1239 = vmatpush1.msra.mxu0 0.0
          %1240 = vmatprep.subr.mxu0 0.0
          %1241 = vmatpush1.msra.mxu0 0.0
          %1242 = vmatprep.subr.mxu0 0.0
          %1243 = vmatpush1.msra.mxu0 0.0
          %1244 = vmatprep.subr.mxu0 0.0
          %1245 = vmatpush1.msra.mxu0 0.0
          %1246 = vmatprep.subr.mxu0 0.0
          %1247 = vmatpush1.msra.mxu0 0.0
          %1248 = vmatprep.subr.mxu0 0.0
          %1249 = vmatpush1.msra.mxu0 0.0
          %1250 = vmatprep.subr.mxu0 0.0
          %1251 = vmatpush1.msra.mxu0 0.0
          %1252 = vmatprep.subr.mxu0 0.0
          %1253 = vmatpush1.msra.mxu0 0.0
          %1254 = vmatprep.subr.mxu0 0.0
          %1255 = vmatpush1.msra.mxu0 0.0
          %1256 = vmatprep.subr.mxu0 0.0
          %1257 = vmatpush1.msra.mxu0 0.0
          %1258 = vmatprep.subr.mxu0 0.0
          %1259 = vmatpush1.msra.mxu0 0.0
          %1260 = vmatprep.subr.mxu0 0.0
          %1261 = vmatpush1.msra.mxu0 0.0
          %1262 = vmatprep.subr.mxu0 0.0
          %1263 = vmatpush1.msra.mxu0 0.0
          %1264 = vmatprep.subr.mxu0 0.0
          %1265 = vmatpush1.msra.mxu0 0.0
          %1266 = vmatprep.subr.mxu0 0.0
          %1267 = vmatpush1.msra.mxu0 0.0
          %1268 = vmatprep.subr.mxu0 0.0
          %1269 = vmatpush1.msra.mxu0 0.0
          %1270 = vmatprep.subr.mxu0 0.0
          %1271 = vmatpush1.msra.mxu0 0.0
          %1272 = vmatprep.subr.mxu0 0.0
          %1273 = vmatpush1.msra.mxu0 0.0
          %1274 = vmatprep.subr.mxu0 0.0
          %1275 = vmatpush1.msra.mxu0 0.0
          %1276 = vmatprep.mubr.f32.mxu0 0.0
          %1277 = vmatmul.mubr.f32.gmra.mrb[0].mxu0 %v1210
          %v1278 = vpop.f32.mrb[0].mxu0
          %v1279 = vadd.f32 0.0, %v1278
          %v1280 = vpop.f32.mrb[0].mxu0
          %1281 = vdwg.mxu0
          %v1283 = vrot.slane %v1279, 2
          %1284 = vrot.lane.b32.xlu0 %v1283, 8
          %v1285 = vpop.permute.xlu0 %1284
          %v1287 = vrot.slane %v1279, 4
          %1288 = vrot.lane.b32.xlu0 %v1287, 16
          %v1289 = vpop.permute.xlu0 %1288
          %v1291 = vrot.slane %v1279, 6
          %1292 = vrot.lane.b32.xlu0 %v1291, 24
          %v1293 = vpop.permute.xlu0 %1292
          %v1295 = vsel %vm729, %v1279, %v1285
          %v1296 = vsel %vm906, %v1295, %v1289
          %v1297 = vsel %vm908, %v1296, %v1293
          %1299 = vrot.lane.b32.xlu0 %v712, 120
          %v1300 = vpop.permute.xlu0 %1299
          %1302 = vrot.lane.b32.xlu0 %v716, 112
          %v1303 = vpop.permute.xlu0 %1302
          %1305 = vrot.lane.b32.xlu0 %v704, 104
          %v1306 = vpop.permute.xlu0 %1305
          %v1308 = vsel %vm720, %v708, %v1300
          %v1309 = vsel %vm722, %v1308, %v1303
          %v1310 = vsel %vm724, %v1309, %v1306
          %1312 = vrot.lane.b32.xlu0 %v1310, 96
          %v1313 = vpop.permute.xlu0 %1312
          %v1314 = vsel %vm729, %v1310, 0
          %v1316 = vsel %vm729, %v1313, 0
          %1318 = vmatprep.subr.mxu0 0.0
          %1319 = vmatpush1.xpose.msra.mxu0 %v1316
          %1320 = vmatprep.subr.mxu0 0.0
          %1321 = vmatpush1.xpose.msra.mxu0 0.0
          %1322 = vmatprep.subr.mxu0 0.0
          %1323 = vmatpush1.xpose.msra.mxu0 0.0
          %1324 = vmatprep.subr.mxu0 0.0
          %1325 = vmatpush1.xpose.msra.mxu0 0.0
          %1326 = vmatprep.subr.mxu0 0.0
          %1327 = vmatpush1.xpose.msra.mxu0 0.0
          %1328 = vmatprep.subr.mxu0 0.0
          %1329 = vmatpush1.xpose.msra.mxu0 0.0
          %1330 = vmatprep.subr.mxu0 0.0
          %1331 = vmatpush1.xpose.msra.mxu0 0.0
          %1332 = vmatprep.subr.mxu0 0.0
          %1333 = vmatpush1.xpose.msra.mxu0 0.0
          %1334 = vmatprep.subr.mxu0 0.0
          %1335 = vmatpush1.xpose.msra.mxu0 0.0
          %1336 = vmatprep.subr.mxu0 0.0
          %1337 = vmatpush1.xpose.msra.mxu0 0.0
          %1338 = vmatprep.subr.mxu0 0.0
          %1339 = vmatpush1.xpose.msra.mxu0 0.0
          %1340 = vmatprep.subr.mxu0 0.0
          %1341 = vmatpush1.xpose.msra.mxu0 0.0
          %1342 = vmatprep.subr.mxu0 0.0
          %1343 = vmatpush1.xpose.msra.mxu0 0.0
          %1344 = vmatprep.subr.mxu0 0.0
          %1345 = vmatpush1.xpose.msra.mxu0 0.0
          %1346 = vmatprep.subr.mxu0 0.0
          %1347 = vmatpush1.xpose.msra.mxu0 0.0
          %1348 = vmatprep.subr.mxu0 0.0
          %1349 = vmatpush1.xpose.msra.mxu0 0.0
          %1350 = vmatprep.subr.mxu0 0.0
          %1351 = vmatpush1.xpose.msra.mxu0 0.0
          %1352 = vmatprep.subr.mxu0 0.0
          %1353 = vmatpush1.xpose.msra.mxu0 0.0
          %1354 = vmatprep.subr.mxu0 0.0
          %1355 = vmatpush1.xpose.msra.mxu0 0.0
          %1356 = vmatprep.subr.mxu0 0.0
          %1357 = vmatpush1.xpose.msra.mxu0 0.0
          %1358 = vmatprep.subr.mxu0 0.0
          %1359 = vmatpush1.xpose.msra.mxu0 0.0
          %1360 = vmatprep.subr.mxu0 0.0
          %1361 = vmatpush1.xpose.msra.mxu0 0.0
          %1362 = vmatprep.subr.mxu0 0.0
          %1363 = vmatpush1.xpose.msra.mxu0 0.0
          %1364 = vmatprep.subr.mxu0 0.0
          %1365 = vmatpush1.xpose.msra.mxu0 0.0
          %1366 = vmatprep.subr.mxu0 0.0
          %1367 = vmatpush1.xpose.msra.mxu0 0.0
          %1368 = vmatprep.subr.mxu0 0.0
          %1369 = vmatpush1.xpose.msra.mxu0 0.0
          %1370 = vmatprep.subr.mxu0 0.0
          %1371 = vmatpush1.xpose.msra.mxu0 0.0
          %1372 = vmatprep.subr.mxu0 0.0
          %1373 = vmatpush1.xpose.msra.mxu0 0.0
          %1374 = vmatprep.subr.mxu0 0.0
          %1375 = vmatpush1.xpose.msra.mxu0 0.0
          %1376 = vmatprep.subr.mxu0 0.0
          %1377 = vmatpush1.xpose.msra.mxu0 0.0
          %1378 = vmatprep.subr.mxu0 0.0
          %1379 = vmatpush1.xpose.msra.mxu0 0.0
          %1380 = vmatprep.subr.mxu0 0.0
          %1381 = vmatpush1.xpose.msra.mxu0 0.0
          %1382 = vmatprep.mubr.f32.mxu0 0.0
          %1383 = vmatmul.mubr.f32.gmra.mrb[0].mxu0 %v1314
          %v1384 = vpop.f32.mrb[0].mxu0
          %v1385 = vadd.f32 0.0, %v1384
          %v1386 = vpop.f32.mrb[0].mxu0
          %1387 = vdwg.mxu0
          %v1388 = vmul.f32 %v1385, 0.35355338
          %v1389 = vsel %vm729, %v1388, -inf
          %1390 = vmax.xlane.f32.xlu0 %v1389
          %v1391 = vpop.xlane.xlu0 %1390
          %v1392 = vsub.f32 %v1388, %v1391
          %v1393 = vmul.f32 %v1392, 1.442695
          %v1394 = vpow.pop %v1393
          %v1395 = vsel %vm729, %v1394, 0.0
          %1396 = vadd.xlane.f32.xlu0 %v1395
          %v1397 = vpop.xlane.xlu0 %1396
          %v1398 = vrcp.pop %v1397
          %v1399 = vmul.f32 %v1394, %v1398
          %1400 = vrot.lane.b32.xlu0 %v1310, 64
          %v1401 = vpop.permute.xlu0 %1400
          %v1404 = vsel %vm729, %v1399, 0
          %1406 = vmatprep.subr.mxu0 0.0
          %1407 = vmatpush1.msra.mxu0 %v1401
          %1408 = vmatprep.subr.mxu0 0.0
          %1409 = vmatpush1.msra.mxu0 0.0
          %1410 = vmatprep.subr.mxu0 0.0
          %1411 = vmatpush1.msra.mxu0 0.0
          %1412 = vmatprep.subr.mxu0 0.0
          %1413 = vmatpush1.msra.mxu0 0.0
          %1414 = vmatprep.subr.mxu0 0.0
          %1415 = vmatpush1.msra.mxu0 0.0
          %1416 = vmatprep.subr.mxu0 0.0
          %1417 = vmatpush1.msra.mxu0 0.0
          %1418 = vmatprep.subr.mxu0 0.0
          %1419 = vmatpush1.msra.mxu0 0.0
          %1420 = vmatprep.subr.mxu0 0.0
          %1421 = vmatpush1.msra.mxu0 0.0
          %1422 = vmatprep.subr.mxu0 0.0
          %1423 = vmatpush1.msra.mxu0 0.0
          %1424 = vmatprep.subr.mxu0 0.0
          %1425 = vmatpush1.msra.mxu0 0.0
          %1426 = vmatprep.subr.mxu0 0.0
          %1427 = vmatpush1.msra.mxu0 0.0
          %1428 = vmatprep.subr.mxu0 0.0
          %1429 = vmatpush1.msra.mxu0 0.0
          %1430 = vmatprep.subr.mxu0 0.0
          %1431 = vmatpush1.msra.mxu0 0.0
          %1432 = vmatprep.subr.mxu0 0.0
          %1433 = vmatpush1.msra.mxu0 0.0
          %1434 = vmatprep.subr.mxu0 0.0
          %1435 = vmatpush1.msra.mxu0 0.0
          %1436 = vmatprep.subr.mxu0 0.0
          %1437 = vmatpush1.msra.mxu0 0.0
          %1438 = vmatprep.subr.mxu0 0.0
          %1439 = vmatpush1.msra.mxu0 0.0
          %1440 = vmatprep.subr.mxu0 0.0
          %1441 = vmatpush1.msra.mxu0 0.0
          %1442 = vmatprep.subr.mxu0 0.0
          %1443 = vmatpush1.msra.mxu0 0.0
          %1444 = vmatprep.subr.mxu0 0.0
          %1445 = vmatpush1.msra.mxu0 0.0
          %1446 = vmatprep.subr.mxu0 0.0
          %1447 = vmatpush1.msra.mxu0 0.0
          %1448 = vmatprep.subr.mxu0 0.0
          %1449 = vmatpush1.msra.mxu0 0.0
          %1450 = vmatprep.subr.mxu0 0.0
          %1451 = vmatpush1.msra.mxu0 0.0
          %1452 = vmatprep.subr.mxu0 0.0
          %1453 = vmatpush1.msra.mxu0 0.0
          %1454 = vmatprep.subr.mxu0 0.0
          %1455 = vmatpush1.msra.mxu0 0.0
          %1456 = vmatprep.subr.mxu0 0.0
          %1457 = vmatpush1.msra.mxu0 0.0
          %1458 = vmatprep.subr.mxu0 0.0
          %1459 = vmatpush1.msra.mxu0 0.0
          %1460 = vmatprep.subr.mxu0 0.0
          %1461 = vmatpush1.msra.mxu0 0.0
          %1462 = vmatprep.subr.mxu0 0.0
          %1463 = vmatpush1.msra.mxu0 0.0
          %1464 = vmatprep.subr.mxu0 0.0
          %1465 = vmatpush1.msra.mxu0 0.0
          %1466 = vmatprep.subr.mxu0 0.0
          %1467 = vmatpush1.msra.mxu0 0.0
          %1468 = vmatprep.subr.mxu0 0.0
          %1469 = vmatpush1.msra.mxu0 0.0
          %1470 = vmatprep.mubr.f32.mxu0 0.0
          %1471 = vmatmul.mubr.f32.gmra.mrb[0].mxu0 %v1404
          %v1472 = vpop.f32.mrb[0].mxu0
          %v1473 = vadd.f32 0.0, %v1472
          %v1474 = vpop.f32.mrb[0].mxu0
          %1475 = vdwg.mxu0
          %v1477 = vrot.slane %v1473, 2
          %1478 = vrot.lane.b32.xlu0 %v1477, 8
          %v1479 = vpop.permute.xlu0 %1478
          %v1481 = vrot.slane %v1473, 4
          %1482 = vrot.lane.b32.xlu0 %v1481, 16
          %v1483 = vpop.permute.xlu0 %1482
          %v1485 = vrot.slane %v1473, 6
          %1486 = vrot.lane.b32.xlu0 %v1485, 24
          %v1487 = vpop.permute.xlu0 %1486
          %v1489 = vsel %vm729, %v1473, %v1479
          %v1490 = vsel %vm906, %v1489, %v1483
          %v1491 = vsel %vm908, %v1490, %v1487
          %v1493 = vrot.slane %v1103, 6
          %v1496 = vrot.slane %v1297, 4
          %v1499 = vrot.slane %v1491, 2
          %v1501 = vsel %vm720, %v909, %v1493
          %v1502 = vsel %vm722, %v1501, %v1496
          %v1503 = vsel %vm724, %v1502, %v1499
          %v1504 = vld [vmem:[%s3] sm:$0xff]
          %v1505 = vld [vmem:[%s3 + $0x8] sm:$0xff]
          %v1506 = vld [vmem:[%s3 + $0x10] sm:$0xff]
          %v1507 = vld [vmem:[%s3 + $0x18] sm:$0xff]
          %v1509 = vsel %vm633, %v1503, 0
          %1511 = vmatprep.subr.mxu0 0.0
          %1512 = vmatpush1.msra.mxu0 %v1504
          %1513 = vmatprep.subr.mxu0 0.0
          %1514 = vmatpush1.msra.mxu0 %v1505
          %1515 = vmatprep.subr.mxu0 0.0
          %1516 = vmatpush1.msra.mxu0 %v1506
          %1517 = vmatprep.subr.mxu0 0.0
          %1518 = vmatpush1.msra.mxu0 %v1507
          %1519 = vmatprep.subr.mxu0 0.0
          %1520 = vmatpush1.msra.mxu0 0.0
          %1521 = vmatprep.subr.mxu0 0.0
          %1522 = vmatpush1.msra.mxu0 0.0
          %1523 = vmatprep.subr.mxu0 0.0
          %1524 = vmatpush1.msra.mxu0 0.0
          %1525 = vmatprep.subr.mxu0 0.0
          %1526 = vmatpush1.msra.mxu0 0.0
          %1527 = vmatprep.subr.mxu0 0.0
          %1528 = vmatpush1.msra.mxu0 0.0
          %1529 = vmatprep.subr.mxu0 0.0
          %1530 = vmatpush1.msra.mxu0 0.0
          %1531 = vmatprep.subr.mxu0 0.0
          %1532 = vmatpush1.msra.mxu0 0.0
          %1533 = vmatprep.subr.mxu0 0.0
          %1534 = vmatpush1.msra.mxu0 0.0
          %1535 = vmatprep.subr.mxu0 0.0
          %1536 = vmatpush1.msra.mxu0 0.0
          %1537 = vmatprep.subr.mxu0 0.0
          %1538 = vmatpush1.msra.mxu0 0.0
          %1539 = vmatprep.subr.mxu0 0.0
          %1540 = vmatpush1.msra.mxu0 0.0
          %1541 = vmatprep.subr.mxu0 0.0
          %1542 = vmatpush1.msra.mxu0 0.0
          %1543 = vmatprep.subr.mxu0 0.0
          %1544 = vmatpush1.msra.mxu0 0.0
          %1545 = vmatprep.subr.mxu0 0.0
          %1546 = vmatpush1.msra.mxu0 0.0
          %1547 = vmatprep.subr.mxu0 0.0
          %1548 = vmatpush1.msra.mxu0 0.0
          %1549 = vmatprep.subr.mxu0 0.0
          %1550 = vmatpush1.msra.mxu0 0.0
          %1551 = vmatprep.subr.mxu0 0.0
          %1552 = vmatpush1.msra.mxu0 0.0
          %1553 = vmatprep.subr.mxu0 0.0
          %1554 = vmatpush1.msra.mxu0 0.0
          %1555 = vmatprep.subr.mxu0 0.0
          %1556 = vmatpush1.msra.mxu0 0.0
          %1557 = vmatprep.subr.mxu0 0.0
          %1558 = vmatpush1.msra.mxu0 0.0
          %1559 = vmatprep.subr.mxu0 0.0
          %1560 = vmatpush1.msra.mxu0 0.0
          %1561 = vmatprep.subr.mxu0 0.0
          %1562 = vmatpush1.msra.mxu0 0.0
          %1563 = vmatprep.subr.mxu0 0.0
          %1564 = vmatpush1.msra.mxu0 0.0
          %1565 = vmatprep.subr.mxu0 0.0
          %1566 = vmatpush1.msra.mxu0 0.0
          %1567 = vmatprep.subr.mxu0 0.0
          %1568 = vmatpush1.msra.mxu0 0.0
          %1569 = vmatprep.subr.mxu0 0.0
          %1570 = vmatpush1.msra.mxu0 0.0
          %1571 = vmatprep.subr.mxu0 0.0
          %1572 = vmatpush1.msra.mxu0 0.0
          %1573 = vmatprep.subr.mxu0 0.0
          %1574 = vmatpush1.msra.mxu0 0.0
          %1575 = vmatprep.mubr.f32.mxu0 0.0
          %1576 = vmatmul.mubr.f32.gmra.mrb[0].mxu0 %v1509
          %v1577 = vpop.f32.mrb[0].mxu0
          %v1578 = vadd.f32 %v578, %v1577
          %v1579 = vpop.f32.mrb[0].mxu0
          %1580 = vdwg.mxu0
          %v1581 = vadd.f32 %v1578, %v628
          %v1582 = vsel %vm633, %v1581, 0.0
          %1583 = vadd.xlane.f32.xlu0 %v1582
          %v1584 = vpop.xlane.xlu0 %1583
          %v1585 = vrcp.pop 32.0
          %v1586 = vmul.f32 %v1584, %v1585
          %v1587 = vsub.f32 %v1581, %v1586
          %v1588 = vmul.f32 %v1587, %v1587
          %v1589 = vsel %vm633, %v1588, 0.0
          %1590 = vadd.xlane.f32.xlu0 %v1589
          %v1591 = vpop.xlane.xlu0 %1590
          %v1592 = vmul.f32 %v1591, %v1585
          %v1593 = vadd.f32 %v1592, 1e-05
          %v1594 = vrsqrt.pop %v1593
          %v1595 = vmul.f32 %v1587, %v1594
          %v1596 = vmul.f32 %v1595, %v599
          %v1597 = vadd.f32 %v1596, %v606
          %v1598 = vld [vmem:[%s7] sm:$0xff]
          %v1599 = vld [vmem:[%s7 + $0x8] sm:$0xff]
          %v1600 = vld [vmem:[%s7 + $0x10] sm:$0xff]
          %v1601 = vld [vmem:[%s7 + $0x18] sm:$0xff]
          %v1603 = vsel %vm633, %v1597, 0
          %1605 = vmatprep.subr.mxu0 0.0
          %1606 = vmatpush1.msra.mxu0 %v1598
          %1607 = vmatprep.subr.mxu0 0.0
          %1608 = vmatpush1.msra.mxu0 %v1599
          %1609 = vmatprep.subr.mxu0 0.0
          %1610 = vmatpush1.msra.mxu0 %v1600
          %1611 = vmatprep.subr.mxu0 0.0
          %1612 = vmatpush1.msra.mxu0 %v1601
          %1613 = vmatprep.subr.mxu0 0.0
          %1614 = vmatpush1.msra.mxu0 0.0
          %1615 = vmatprep.subr.mxu0 0.0
          %1616 = vmatpush1.msra.mxu0 0.0
          %1617 = vmatprep.subr.mxu0 0.0
          %1618 = vmatpush1.msra.mxu0 0.0
          %1619 = vmatprep.subr.mxu0 0.0
          %1620 = vmatpush1.msra.mxu0 0.0
          %1621 = vmatprep.subr.mxu0 0.0
          %1622 = vmatpush1.msra.mxu0 0.0
          %1623 = vmatprep.subr.mxu0 0.0
          %1624 = vmatpush1.msra.mxu0 0.0
          %1625 = vmatprep.subr.mxu0 0.0
          %1626 = vmatpush1.msra.mxu0 0.0
          %1627 = vmatprep.subr.mxu0 0.0
          %1628 = vmatpush1.msra.mxu0 0.0
          %1629 = vmatprep.subr.mxu0 0.0
          %1630 = vmatpush1.msra.mxu0 0.0
          %1631 = vmatprep.subr.mxu0 0.0
          %1632 = vmatpush1.msra.mxu0 0.0
          %1633 = vmatprep.subr.mxu0 0.0
          %1634 = vmatpush1.msra.mxu0 0.0
          %1635 = vmatprep.subr.mxu0 0.0
          %1636 = vmatpush1.msra.mxu0 0.0
          %1637 = vmatprep.subr.mxu0 0.0
          %1638 = vmatpush1.msra.mxu0 0.0
          %1639 = vmatprep.subr.mxu0 0.0
          %1640 = vmatpush1.msra.mxu0 0.0
          %1641 = vmatprep.subr.mxu0 0.0
          %1642 = vmatpush1.msra.mxu0 0.0
          %1643 = vmatprep.subr.mxu0 0.0
          %1644 = vmatpush1.msra.mxu0 0.0
          %1645 = vmatprep.subr.mxu0 0.0
          %1646 = vmatpush1.msra.mxu0 0.0
          %1647 = vmatprep.subr.mxu0 0.0
          %1648 = vmatpush1.msra.mxu0 0.0
          %1649 = vmatprep.subr.mxu0 0.0
          %1650 = vmatpush1.msra.mxu0 0.0
          %1651 = vmatprep.subr.mxu0 0.0
          %1652 = vmatpush1.msra.mxu0 0.0
          %1653 = vmatprep.subr.mxu0 0.0
          %1654 = vmatpush1.msra.mxu0 0.0
          %1655 = vmatprep.subr.mxu0 0.0
          %1656 = vmatpush1.msra.mxu0 0.0
          %1657 = vmatprep.subr.mxu0 0.0
          %1658 = vmatpush1.msra.mxu0 0.0
          %1659 = vmatprep.subr.mxu0 0.0
          %1660 = vmatpush1.msra.mxu0 0.0
          %1661 = vmatprep.subr.mxu0 0.0
          %1662 = vmatpush1.msra.mxu0 0.0
          %1663 = vmatprep.subr.mxu0 0.0
          %1664 = vmatpush1.msra.mxu0 0.0
          %1665 = vmatprep.subr.mxu0 0.0
          %1666 = vmatpush1.msra.mxu0 0.0
          %1667 = vmatprep.subr.mxu0 0.0
          %1668 = vmatpush1.msra.mxu0 0.0
          %1669 = vmatprep.mubr.f32.mxu0 0.0
          %1670 = vmatmul.mubr.f32.gmra.mrb[0].mxu0 %v1603
          %v1671 = vpop.f32.mrb[0].mxu0
          %v1672 = vadd.f32 %v585, %v1671
          %v1673 = vpop.f32.mrb[0].mxu0
          %1674 = vdwg.mxu0
          %v1675 = vmax.f32 %v1672, 0.0
          %v1676 = vld [vmem:[%s9] sm:$0xff]
          %v1677 = vld [vmem:[%s9 + $0x8] sm:$0xff]
          %v1678 = vld [vmem:[%s9 + $0x10] sm:$0xff]
          %v1679 = vld [vmem:[%s9 + $0x18] sm:$0xff]
          %v1680 = vld [vmem:[%s9 + $0x20] sm:$0xff]
          %v1681 = vld [vmem:[%s9 + $0x28] sm:$0xff]
          %v1682 = vld [vmem:[%s9 + $0x30] sm:$0xff]
          %v1683 = vld [vmem:[%s9 + $0x38] sm:$0xff]
          %vm1684 = vcmask 523264
          %v1686 = vsel %vm1684, %v1675, 0
          %1688 = vmatprep.subr.mxu0 0.0
          %1689 = vmatpush1.msra.mxu0 %v1676
          %1690 = vmatprep.subr.mxu0 0.0
          %1691 = vmatpush1.msra.mxu0 %v1677
          %1692 = vmatprep.subr.mxu0 0.0
          %1693 = vmatpush1.msra.mxu0 %v1678
          %1694 = vmatprep.subr.mxu0 0.0
          %1695 = vmatpush1.msra.mxu0 %v1679
          %1696 = vmatprep.subr.mxu0 0.0
          %1697 = vmatpush1.msra.mxu0 %v1680
          %1698 = vmatprep.subr.mxu0 0.0
          %1699 = vmatpush1.msra.mxu0 %v1681
          %1700 = vmatprep.subr.mxu0 0.0
          %1701 = vmatpush1.msra.mxu0 %v1682
          %1702 = vmatprep.subr.mxu0 0.0
          %1703 = vmatpush1.msra.mxu0 %v1683
          %1704 = vmatprep.subr.mxu0 0.0
          %1705 = vmatpush1.msra.mxu0 0.0
          %1706 = vmatprep.subr.mxu0 0.0
          %1707 = vmatpush1.msra.mxu0 0.0
          %1708 = vmatprep.subr.mxu0 0.0
          %1709 = vmatpush1.msra.mxu0 0.0
          %1710 = vmatprep.subr.mxu0 0.0
          %1711 = vmatpush1.msra.mxu0 0.0
          %1712 = vmatprep.subr.mxu0 0.0
          %1713 = vmatpush1.msra.mxu0 0.0
          %1714 = vmatprep.subr.mxu0 0.0
          %1715 = vmatpush1.msra.mxu0 0.0
          %1716 = vmatprep.subr.mxu0 0.0
          %1717 = vmatpush1.msra.mxu0 0.0
          %1718 = vmatprep.subr.mxu0 0.0
          %1719 = vmatpush1.msra.mxu0 0.0
          %1720 = vmatprep.subr.mxu0 0.0
          %1721 = vmatpush1.msra.mxu0 0.0
          %1722 = vmatprep.subr.mxu0 0.0
          %1723 = vmatpush1.msra.mxu0 0.0
          %1724 = vmatprep.subr.mxu0 0.0
          %1725 = vmatpush1.msra.mxu0 0.0
          %1726 = vmatprep.subr.mxu0 0.0
          %1727 = vmatpush1.msra.mxu0 0.0
          %1728 = vmatprep.subr.mxu0 0.0
          %1729 = vmatpush1.msra.mxu0 0.0
          %1730 = vmatprep.subr.mxu0 0.0
          %1731 = vmatpush1.msra.mxu0 0.0
          %1732 = vmatprep.subr.mxu0 0.0
          %1733 = vmatpush1.msra.mxu0 0.0
          %1734 = vmatprep.subr.mxu0 0.0
          %1735 = vmatpush1.msra.mxu0 0.0
          %1736 = vmatprep.subr.mxu0 0.0
          %1737 = vmatpush1.msra.mxu0 0.0
          %1738 = vmatprep.subr.mxu0 0.0
          %1739 = vmatpush1.msra.mxu0 0.0
          %1740 = vmatprep.subr.mxu0 0.0
          %1741 = vmatpush1.msra.mxu0 0.0
          %1742 = vmatprep.subr.mxu0 0.0
          %1743 = vmatpush1.msra.mxu0 0.0
          %1744 = vmatprep.subr.mxu0 0.0
          %1745 = vmatpush1.msra.mxu0 0.0
          %1746 = vmatprep.subr.mxu0 0.0
          %1747 = vmatpush1.msra.mxu0 0.0
          %1748 = vmatprep.subr.mxu0 0.0
          %1749 = vmatpush1.msra.mxu0 0.0
          %1750 = vmatprep.subr.mxu0 0.0
          %1751 = vmatpush1.msra.mxu0 0.0
          %1752 = vmatprep.mubr.f32.mxu0 0.0
          %1753 = vmatmul.mubr.f32.gmra.mrb[0].mxu0 %v1686
          %v1754 = vpop.f32.mrb[0].mxu0
          %v1755 = vadd.f32 %v592, %v1754
          %v1756 = vpop.f32.mrb[0].mxu0
          %1757 = vdwg.mxu0
          %v1758 = vadd.f32 %v1755, %v1597
          %v1759 = vsel %vm633, %v1758, 0.0
          %1760 = vadd.xlane.f32.xlu0 %v1759
          %v1761 = vpop.xlane.xlu0 %1760
          %v1762 = vmul.f32 %v1761, %v1585
          %v1763 = vsub.f32 %v1758, %v1762
          %v1764 = vmul.f32 %v1763, %v1763
          %v1765 = vsel %vm633, %v1764, 0.0
          %1766 = vadd.xlane.f32.xlu0 %v1765
          %v1767 = vpop.xlane.xlu0 %1766
          %v1768 = vmul.f32 %v1767, %v1585
          %v1769 = vadd.f32 %v1768, 1e-05
          %v1770 = vrsqrt.pop %v1769
          %v1771 = vmul.f32 %v1763, %v1770
          %v1772 = vmul.f32 %v1771, %v613
          %v1773 = vadd.f32 %v1772, %v620
        $region109: #{model_forward.1} parent=79 // loop_footer
          %s627 = sadd.s32 1, %s623
        $region110: #{model_forward.1} parent=79 // loop_footer_branch
          %622 = sbr.rel target = $region106
        $region111: #{model_forward.1} parent=79 // loop_exit
          _
        %v1774 = vld [vmem:[#allocation11] sm:$0x1]
        %v1775 = vld [vmem:[%s13] sm:$0xff]
        %v1776 = vld [vmem:[%s13 + $0x8] sm:$0xff]
        %v1777 = vld [vmem:[%s13 + $0x10] sm:$0xff]
        %v1778 = vld [vmem:[%s13 + $0x18] sm:$0xff]
        %vm1779 = vcmask 261120
        %v1781 = vsel %vm1779, %v628, 0
        %1783 = vmatprep.subr.mxu0 0.0
        %1784 = vmatpush1.msra.mxu0 %v1775
        %1785 = vmatprep.subr.mxu0 0.0
        %1786 = vmatpush1.msra.mxu0 %v1776
        %1787 = vmatprep.subr.mxu0 0.0
        %1788 = vmatpush1.msra.mxu0 %v1777
        %1789 = vmatprep.subr.mxu0 0.0
        %1790 = vmatpush1.msra.mxu0 %v1778
        %1791 = vmatprep.subr.mxu0 0.0
        %1792 = vmatpush1.msra.mxu0 0.0
        %1793 = vmatprep.subr.mxu0 0.0
        %1794 = vmatpush1.msra.mxu0 0.0
        %1795 = vmatprep.subr.mxu0 0.0
        %1796 = vmatpush1.msra.mxu0 0.0
        %1797 = vmatprep.subr.mxu0 0.0
        %1798 = vmatpush1.msra.mxu0 0.0
        %1799 = vmatprep.subr.mxu0 0.0
        %1800 = vmatpush1.msra.mxu0 0.0
        %1801 = vmatprep.subr.mxu0 0.0
        %1802 = vmatpush1.msra.mxu0 0.0
        %1803 = vmatprep.subr.mxu0 0.0
        %1804 = vmatpush1.msra.mxu0 0.0
        %1805 = vmatprep.subr.mxu0 0.0
        %1806 = vmatpush1.msra.mxu0 0.0
        %1807 = vmatprep.subr.mxu0 0.0
        %1808 = vmatpush1.msra.mxu0 0.0
        %1809 = vmatprep.subr.mxu0 0.0
        %1810 = vmatpush1.msra.mxu0 0.0
        %1811 = vmatprep.subr.mxu0 0.0
        %1812 = vmatpush1.msra.mxu0 0.0
        %1813 = vmatprep.subr.mxu0 0.0
        %1814 = vmatpush1.msra.mxu0 0.0
        %1815 = vmatprep.subr.mxu0 0.0
        %1816 = vmatpush1.msra.mxu0 0.0
        %1817 = vmatprep.subr.mxu0 0.0
        %1818 = vmatpush1.msra.mxu0 0.0
        %1819 = vmatprep.subr.mxu0 0.0
        %1820 = vmatpush1.msra.mxu0 0.0
        %1821 = vmatprep.subr.mxu0 0.0
        %1822 = vmatpush1.msra.mxu0 0.0
        %1823 = vmatprep.subr.mxu0 0.0
        %1824 = vmatpush1.msra.mxu0 0.0
        %1825 = vmatprep.subr.mxu0 0.0
        %1826 = vmatpush1.msra.mxu0 0.0
        %1827 = vmatprep.subr.mxu0 0.0
        %1828 = vmatpush1.msra.mxu0 0.0
        %1829 = vmatprep.subr.mxu0 0.0
        %1830 = vmatpush1.msra.mxu0 0.0
        %1831 = vmatprep.subr.mxu0 0.0
        %1832 = vmatpush1.msra.mxu0 0.0
        %1833 = vmatprep.subr.mxu0 0.0
        %1834 = vmatpush1.msra.mxu0 0.0
        %1835 = vmatprep.subr.mxu0 0.0
        %1836 = vmatpush1.msra.mxu0 0.0
        %1837 = vmatprep.subr.mxu0 0.0
        %1838 = vmatpush1.msra.mxu0 0.0
        %1839 = vmatprep.subr.mxu0 0.0
        %1840 = vmatpush1.msra.mxu0 0.0
        %1841 = vmatprep.subr.mxu0 0.0
        %1842 = vmatpush1.msra.mxu0 0.0
        %1843 = vmatprep.subr.mxu0 0.0
        %1844 = vmatpush1.msra.mxu0 0.0
        %1845 = vmatprep.subr.mxu0 0.0
        %1846 = vmatpush1.msra.mxu0 0.0
        %1847 = vmatprep.mubr.f32.mxu0 0.0
        %1848 = vmatmul.mubr.f32.gmra.mrb[0].mxu0 %v1781
        %v1849 = vpop.f32.mrb[0].mxu0
        %v1850 = vadd.f32 0.0, %v1849
        %v1851 = vpop.f32.mrb[0].mxu0
        %1852 = vdwg.mxu0
        %v1853 = vadd.f32 %v1774, %v1850
        %v1854 = vld [vmem:[%s13 + $0x20] sm:$0xff]
        %v1855 = vld [vmem:[%s13 + $0x28] sm:$0xff]
        %v1856 = vld [vmem:[%s13 + $0x30] sm:$0xff]
        %v1857 = vld [vmem:[%s13 + $0x38] sm:$0xff]
        %v1858 = vrot.slane %v628, 1
        %v1859 = vsel %vm1779, %v1858, 0
        %1861 = vmatprep.subr.mxu0 0.0
        %1862 = vmatpush1.msra.mxu0 %v1854
        %1863 = vmatprep.subr.mxu0 0.0
        %1864 = vmatpush1.msra.mxu0 %v1855
        %1865 = vmatprep.subr.mxu0 0.0
        %1866 = vmatpush1.msra.mxu0 %v1856
        %1867 = vmatprep.subr.mxu0 0.0
        %1868 = vmatpush1.msra.mxu0 %v1857
        %1869 = vmatprep.subr.mxu0 0.0
        %1870 = vmatpush1.msra.mxu0 0.0
        %1871 = vmatprep.subr.mxu0 0.0
        %1872 = vmatpush1.msra.mxu0 0.0
        %1873 = vmatprep.subr.mxu0 0.0
        %1874 = vmatpush1.msra.mxu0 0.0
        %1875 = vmatprep.subr.mxu0 0.0
        %1876 = vmatpush1.msra.mxu0 0.0
        %1877 = vmatprep.subr.mxu0 0.0
        %1878 = vmatpush1.msra.mxu0 0.0
        %1879 = vmatprep.subr.mxu0 0.0
        %1880 = vmatpush1.msra.mxu0 0.0
        %1881 = vmatprep.subr.mxu0 0.0
        %1882 = vmatpush1.msra.mxu0 0.0
        %1883 = vmatprep.subr.mxu0 0.0
        %1884 = vmatpush1.msra.mxu0 0.0
        %1885 = vmatprep.subr.mxu0 0.0
        %1886 = vmatpush1.msra.mxu0 0.0
        %1887 = vmatprep.subr.mxu0 0.0
        %1888 = vmatpush1.msra.mxu0 0.0
        %1889 = vmatprep.subr.mxu0 0.0
        %1890 = vmatpush1.msra.mxu0 0.0
        %1891 = vmatprep.subr.mxu0 0.0
        %1892 = vmatpush1.msra.mxu0 0.0
        %1893 = vmatprep.subr.mxu0 0.0
        %1894 = vmatpush1.msra.mxu0 0.0
        %1895 = vmatprep.subr.mxu0 0.0
        %1896 = vmatpush1.msra.mxu0 0.0
        %1897 = vmatprep.subr.mxu0 0.0
        %1898 = vmatpush1.msra.mxu0 0.0
        %1899 = vmatprep.subr.mxu0 0.0
        %1900 = vmatpush1.msra.mxu0 0.0
        %1901 = vmatprep.subr.mxu0 0.0
        %1902 = vmatpush1.msra.mxu0 0.0
        %1903 = vmatprep.subr.mxu0 0.0
        %1904 = vmatpush1.msra.mxu0 0.0
        %1905 = vmatprep.subr.mxu0 0.0
        %1906 = vmatpush1.msra.mxu0 0.0
        %1907 = vmatprep.subr.mxu0 0.0
        %1908 = vmatpush1.msra.mxu0 0.0
        %1909 = vmatprep.subr.mxu0 0.0
        %1910 = vmatpush1.msra.mxu0 0.0
        %1911 = vmatprep.subr.mxu0 0.0
        %1912 = vmatpush1.msra.mxu0 0.0
        %1913 = vmatprep.subr.mxu0 0.0
        %1914 = vmatpush1.msra.mxu0 0.0
        %1915 = vmatprep.subr.mxu0 0.0
        %1916 = vmatpush1.msra.mxu0 0.0
        %1917 = vmatprep.subr.mxu0 0.0
        %1918 = vmatpush1.msra.mxu0 0.0
        %1919 = vmatprep.subr.mxu0 0.0
        %1920 = vmatpush1.msra.mxu0 0.0
        %1921 = vmatprep.subr.mxu0 0.0
        %1922 = vmatpush1.msra.mxu0 0.0
        %1923 = vmatprep.subr.mxu0 0.0
        %1924 = vmatpush1.msra.mxu0 0.0
        %1925 = vmatprep.mubr.f32.mxu0 0.0
        %1926 = vmatmul.mubr.f32.gmra.mrb[0].mxu0 %v1859
        %v1927 = vpop.f32.mrb[0].mxu0
        %v1928 = vadd.f32 0.0, %v1927
        %v1929 = vpop.f32.mrb[0].mxu0
        %1930 = vdwg.mxu0
        %v1931 = vadd.f32 %v1853, %v1928
        %v1932 = vld [vmem:[%s13 + $0x40] sm:$0xff]
        %v1933 = vld [vmem:[%s13 + $0x48] sm:$0xff]
        %v1934 = vld [vmem:[%s13 + $0x50] sm:$0xff]
        %v1935 = vld [vmem:[%s13 + $0x58] sm:$0xff]
        %v1936 = vrot.slane %v628, 2
        %v1937 = vsel %vm1779, %v1936, 0
        %1939 = vmatprep.subr.mxu0 0.0
        %1940 = vmatpush1.msra.mxu0 %v1932
        %1941 = vmatprep.subr.mxu0 0.0
        %1942 = vmatpush1.msra.mxu0 %v1933
        %1943 = vmatprep.subr.mxu0 0.0
        %1944 = vmatpush1.msra.mxu0 %v1934
        %1945 = vmatprep.subr.mxu0 0.0
        %1946 = vmatpush1.msra.mxu0 %v1935
        %1947 = vmatprep.subr.mxu0 0.0
        %1948 = vmatpush1.msra.mxu0 0.0
        %1949 = vmatprep.subr.mxu0 0.0
        %1950 = vmatpush1.msra.mxu0 0.0
        %1951 = vmatprep.subr.mxu0 0.0
        %1952 = vmatpush1.msra.mxu0 0.0
        %1953 = vmatprep.subr.mxu0 0.0
        %1954 = vmatpush1.msra.mxu0 0.0
        %1955 = vmatprep.subr.mxu0 0.0
        %1956 = vmatpush1.msra.mxu0 0.0
        %1957 = vmatprep.subr.mxu0 0.0
        %1958 = vmatpush1.msra.mxu0 0.0
        %1959 = vmatprep.subr.mxu0 0.0
        %1960 = vmatpush1.msra.mxu0 0.0
        %1961 = vmatprep.subr.mxu0 0.0
        %1962 = vmatpush1.msra.mxu0 0.0
        %1963 = vmatprep.subr.mxu0 0.0
        %1964 = vmatpush1.msra.mxu0 0.0
        %1965 = vmatprep.subr.mxu0 0.0
        %1966 = vmatpush1.msra.mxu0 0.0
        %1967 = vmatprep.subr.mxu0 0.0
        %1968 = vmatpush1.msra.mxu0 0.0
        %1969 = vmatprep.subr.mxu0 0.0
        %1970 = vmatpush1.msra.mxu0 0.0
        %1971 = vmatprep.subr.mxu0 0.0
        %1972 = vmatpush1.msra.mxu0 0.0
        %1973 = vmatprep.subr.mxu0 0.0
        %1974 = vmatpush1.msra.mxu0 0.0
        %1975 = vmatprep.subr.mxu0 0.0
        %1976 = vmatpush1.msra.mxu0 0.0
        %1977 = vmatprep.subr.mxu0 0.0
        %1978 = vmatpush1.msra.mxu0 0.0
        %1979 = vmatprep.subr.mxu0 0.0
        %1980 = vmatpush1.msra.mxu0 0.0
        %1981 = vmatprep.subr.mxu0 0.0
        %1982 = vmatpush1.msra.mxu0 0.0
        %1983 = vmatprep.subr.mxu0 0.0
        %1984 = vmatpush1.msra.mxu0 0.0
        %1985 = vmatprep.subr.mxu0 0.0
        %1986 = vmatpush1.msra.mxu0 0.0
        %1987 = vmatprep.subr.mxu0 0.0
        %1988 = vmatpush1.msra.mxu0 0.0
        %1989 = vmatprep.subr.mxu0 0.0
        %1990 = vmatpush1.msra.mxu0 0.0
        %1991 = vmatprep.subr.mxu0 0.0
        %1992 = vmatpush1.msra.mxu0 0.0
        %1993 = vmatprep.subr.mxu0 0.0
        %1994 = vmatpush1.msra.mxu0 0.0
        %1995 = vmatprep.subr.mxu0 0.0
        %1996 = vmatpush1.msra.mxu0 0.0
        %1997 = vmatprep.subr.mxu0 0.0
        %1998 = vmatpush1.msra.mxu0 0.0
        %1999 = vmatprep.subr.mxu0 0.0
        %2000 = vmatpush1.msra.mxu0 0.0
        %2001 = vmatprep.subr.mxu0 0.0
        %2002 = vmatpush1.msra.mxu0 0.0
        %2003 = vmatprep.mubr.f32.mxu0 0.0
        %2004 = vmatmul.mubr.f32.gmra.mrb[0].mxu0 %v1937
        %v2005 = vpop.f32.mrb[0].mxu0
        %v2006 = vadd.f32 0.0, %v2005
        %v2007 = vpop.f32.mrb[0].mxu0
        %2008 = vdwg.mxu0
        %v2009 = vadd.f32 %v1931, %v2006
        %v2010 = vld [vmem:[%s13 + $0x60] sm:$0xff]
        %v2011 = vld [vmem:[%s13 + $0x68] sm:$0xff]
        %v2012 = vld [vmem:[%s13 + $0x70] sm:$0xff]
        %v2013 = vld [vmem:[%s13 + $0x78] sm:$0xff]
        %v2014 = vrot.slane %v628, 3
        %v2015 = vsel %vm1779, %v2014, 0
        %2017 = vmatprep.subr.mxu0 0.0
        %2018 = vmatpush1.msra.mxu0 %v2010
        %2019 = vmatprep.subr.mxu0 0.0
        %2020 = vmatpush1.msra.mxu0 %v2011
        %2021 = vmatprep.subr.mxu0 0.0
        %2022 = vmatpush1.msra.mxu0 %v2012
        %2023 = vmatprep.subr.mxu0 0.0
        %2024 = vmatpush1.msra.mxu0 %v2013
        %2025 = vmatprep.subr.mxu0 0.0
        %2026 = vmatpush1.msra.mxu0 0.0
        %2027 = vmatprep.subr.mxu0 0.0
        %2028 = vmatpush1.msra.mxu0 0.0
        %2029 = vmatprep.subr.mxu0 0.0
        %2030 = vmatpush1.msra.mxu0 0.0
        %2031 = vmatprep.subr.mxu0 0.0
        %2032 = vmatpush1.msra.mxu0 0.0
        %2033 = vmatprep.subr.mxu0 0.0
        %2034 = vmatpush1.msra.mxu0 0.0
        %2035 = vmatprep.subr.mxu0 0.0
        %2036 = vmatpush1.msra.mxu0 0.0
        %2037 = vmatprep.subr.mxu0 0.0
        %2038 = vmatpush1.msra.mxu0 0.0
        %2039 = vmatprep.subr.mxu0 0.0
        %2040 = vmatpush1.msra.mxu0 0.0
        %2041 = vmatprep.subr.mxu0 0.0
        %2042 = vmatpush1.msra.mxu0 0.0
        %2043 = vmatprep.subr.mxu0 0.0
        %2044 = vmatpush1.msra.mxu0 0.0
        %2045 = vmatprep.subr.mxu0 0.0
        %2046 = vmatpush1.msra.mxu0 0.0
        %2047 = vmatprep.subr.mxu0 0.0
        %2048 = vmatpush1.msra.mxu0 0.0
        %2049 = vmatprep.subr.mxu0 0.0
        %2050 = vmatpush1.msra.mxu0 0.0
        %2051 = vmatprep.subr.mxu0 0.0
        %2052 = vmatpush1.msra.mxu0 0.0
        %2053 = vmatprep.subr.mxu0 0.0
        %2054 = vmatpush1.msra.mxu0 0.0
        %2055 = vmatprep.subr.mxu0 0.0
        %2056 = vmatpush1.msra.mxu0 0.0
        %2057 = vmatprep.subr.mxu0 0.0
        %2058 = vmatpush1.msra.mxu0 0.0
        %2059 = vmatprep.subr.mxu0 0.0
        %2060 = vmatpush1.msra.mxu0 0.0
        %2061 = vmatprep.subr.mxu0 0.0
        %2062 = vmatpush1.msra.mxu0 0.0
        %2063 = vmatprep.subr.mxu0 0.0
        %2064 = vmatpush1.msra.mxu0 0.0
        %2065 = vmatprep.subr.mxu0 0.0
        %2066 = vmatpush1.msra.mxu0 0.0
        %2067 = vmatprep.subr.mxu0 0.0
        %2068 = vmatpush1.msra.mxu0 0.0
        %2069 = vmatprep.subr.mxu0 0.0
        %2070 = vmatpush1.msra.mxu0 0.0
        %2071 = vmatprep.subr.mxu0 0.0
        %2072 = vmatpush1.msra.mxu0 0.0
        %2073 = vmatprep.subr.mxu0 0.0
        %2074 = vmatpush1.msra.mxu0 0.0
        %2075 = vmatprep.subr.mxu0 0.0
        %2076 = vmatpush1.msra.mxu0 0.0
        %2077 = vmatprep.subr.mxu0 0.0
        %2078 = vmatpush1.msra.mxu0 0.0
        %2079 = vmatprep.subr.mxu0 0.0
        %2080 = vmatpush1.msra.mxu0 0.0
        %2081 = vmatprep.mubr.f32.mxu0 0.0
        %2082 = vmatmul.mubr.f32.gmra.mrb[0].mxu0 %v2015
        %v2083 = vpop.f32.mrb[0].mxu0
        %v2084 = vadd.f32 0.0, %v2083
        %v2085 = vpop.f32.mrb[0].mxu0
        %2086 = vdwg.mxu0
        %v2087 = vadd.f32 %v2009, %v2084
        %v2088 = vld [vmem:[%s13 + $0x80] sm:$0xff]
        %v2089 = vld [vmem:[%s13 + $0x88] sm:$0xff]
        %v2090 = vld [vmem:[%s13 + $0x90] sm:$0xff]
        %v2091 = vld [vmem:[%s13 + $0x98] sm:$0xff]
        %v2092 = vrot.slane %v628, 4
        %v2093 = vsel %vm1779, %v2092, 0
        %2095 = vmatprep.subr.mxu0 0.0
        %2096 = vmatpush1.msra.mxu0 %v2088
        %2097 = vmatprep.subr.mxu0 0.0
        %2098 = vmatpush1.msra.mxu0 %v2089
        %2099 = vmatprep.subr.mxu0 0.0
        %2100 = vmatpush1.msra.mxu0 %v2090
        %2101 = vmatprep.subr.mxu0 0.0
        %2102 = vmatpush1.msra.mxu0 %v2091
        %2103 = vmatprep.subr.mxu0 0.0
        %2104 = vmatpush1.msra.mxu0 0.0
        %2105 = vmatprep.subr.mxu0 0.0
        %2106 = vmatpush1.msra.mxu0 0.0
        %2107 = vmatprep.subr.mxu0 0.0
        %2108 = vmatpush1.msra.mxu0 0.0
        %2109 = vmatprep.subr.mxu0 0.0
        %2110 = vmatpush1.msra.mxu0 0.0
        %2111 = vmatprep.subr.mxu0 0.0
        %2112 = vmatpush1.msra.mxu0 0.0
        %2113 = vmatprep.subr.mxu0 0.0
        %2114 = vmatpush1.msra.mxu0 0.0
        %2115 = vmatprep.subr.mxu0 0.0
        %2116 = vmatpush1.msra.mxu0 0.0
        %2117 = vmatprep.subr.mxu0 0.0
        %2118 = vmatpush1.msra.mxu0 0.0
        %2119 = vmatprep.subr.mxu0 0.0
        %2120 = vmatpush1.msra.mxu0 0.0
        %2121 = vmatprep.subr.mxu0 0.0
        %2122 = vmatpush1.msra.mxu0 0.0
        %2123 = vmatprep.subr.mxu0 0.0
        %2124 = vmatpush1.msra.mxu0 0.0
        %2125 = vmatprep.subr.mxu0 0.0
        %2126 = vmatpush1.msra.mxu0 0.0
        %2127 = vmatprep.subr.mxu0 0.0
        %2128 = vmatpush1.msra.mxu0 0.0
        %2129 = vmatprep.subr.mxu0 0.0
        %2130 = vmatpush1.msra.mxu0 0.0
        %2131 = vmatprep.subr.mxu0 0.0
        %2132 = vmatpush1.msra.mxu0 0.0
        %2133 = vmatprep.subr.mxu0 0.0
        %2134 = vmatpush1.msra.mxu0 0.0
        %2135 = vmatprep.subr.mxu0 0.0
        %2136 = vmatpush1.msra.mxu0 0.0
        %2137 = vmatprep.subr.mxu0 0.0
        %2138 = vmatpush1.msra.mxu0 0.0
        %2139 = vmatprep.subr.mxu0 0.0
        %2140 = vmatpush1.msra.mxu0 0.0
        %2141 = vmatprep.subr.mxu0 0.0
        %2142 = vmatpush1.msra.mxu0 0.0
        %2143 = vmatprep.subr.mxu0 0.0
        %2144 = vmatpush1.msra.mxu0 0.0
        %2145 = vmatprep.subr.mxu0 0.0
        %2146 = vmatpush1.msra.mxu0 0.0
        %2147 = vmatprep.subr.mxu0 0.0
        %2148 = vmatpush1.msra.mxu0 0.0
        %2149 = vmatprep.subr.mxu0 0.0
        %2150 = vmatpush1.msra.mxu0 0.0
        %2151 = vmatprep.subr.mxu0 0.0
        %2152 = vmatpush1.msra.mxu0 0.0
        %2153 = vmatprep.subr.mxu0 0.0
        %2154 = vmatpush1.msra.mxu0 0.0
        %2155 = vmatprep.subr.mxu0 0.0
        %2156 = vmatpush1.msra.mxu0 0.0
        %2157 = vmatprep.subr.mxu0 0.0
        %2158 = vmatpush1.msra.mxu0 0.0
        %2159 = vmatprep.mubr.f32.mxu0 0.0
        %2160 = vmatmul.mubr.f32.gmra.mrb[0].mxu0 %v2093
        %v2161 = vpop.f32.mrb[0].mxu0
        %v2162 = vadd.f32 0.0, %v2161
        %v2163 = vpop.f32.mrb[0].mxu0
        %2164 = vdwg.mxu0
        %v2165 = vadd.f32 %v2087, %v2162
        %v2166 = vld [vmem:[%s13 + $0xa0] sm:$0xff]
        %v2167 = vld [vmem:[%s13 + $0xa8] sm:$0xff]
        %v2168 = vld [vmem:[%s13 + $0xb0] sm:$0xff]
        %v2169 = vld [vmem:[%s13 + $0xb8] sm:$0xff]
        %v2170 = vrot.slane %v628, 5
        %v2171 = vsel %vm1779, %v2170, 0
        %2173 = vmatprep.subr.mxu0 0.0
        %2174 = vmatpush1.msra.mxu0 %v2166
        %2175 = vmatprep.subr.mxu0 0.0
        %2176 = vmatpush1.msra.mxu0 %v2167
        %2177 = vmatprep.subr.mxu0 0.0
        %2178 = vmatpush1.msra.mxu0 %v2168
        %2179 = vmatprep.subr.mxu0 0.0
        %2180 = vmatpush1.msra.mxu0 %v2169
        %2181 = vmatprep.subr.mxu0 0.0
        %2182 = vmatpush1.msra.mxu0 0.0
        %2183 = vmatprep.subr.mxu0 0.0
        %2184 = vmatpush1.msra.mxu0 0.0
        %2185 = vmatprep.subr.mxu0 0.0
        %2186 = vmatpush1.msra.mxu0 0.0
        %2187 = vmatprep.subr.mxu0 0.0
        %2188 = vmatpush1.msra.mxu0 0.0
        %2189 = vmatprep.subr.mxu0 0.0
        %2190 = vmatpush1.msra.mxu0 0.0
        %2191 = vmatprep.subr.mxu0 0.0
        %2192 = vmatpush1.msra.mxu0 0.0
        %2193 = vmatprep.subr.mxu0 0.0
        %2194 = vmatpush1.msra.mxu0 0.0
        %2195 = vmatprep.subr.mxu0 0.0
        %2196 = vmatpush1.msra.mxu0 0.0
        %2197 = vmatprep.subr.mxu0 0.0
        %2198 = vmatpush1.msra.mxu0 0.0
        %2199 = vmatprep.subr.mxu0 0.0
        %2200 = vmatpush1.msra.mxu0 0.0
        %2201 = vmatprep.subr.mxu0 0.0
        %2202 = vmatpush1.msra.mxu0 0.0
        %2203 = vmatprep.subr.mxu0 0.0
        %2204 = vmatpush1.msra.mxu0 0.0
        %2205 = vmatprep.subr.mxu0 0.0
        %2206 = vmatpush1.msra.mxu0 0.0
        %2207 = vmatprep.subr.mxu0 0.0
        %2208 = vmatpush1.msra.mxu0 0.0
        %2209 = vmatprep.subr.mxu0 0.0
        %2210 = vmatpush1.msra.mxu0 0.0
        %2211 = vmatprep.subr.mxu0 0.0
        %2212 = vmatpush1.msra.mxu0 0.0
        %2213 = vmatprep.subr.mxu0 0.0
        %2214 = vmatpush1.msra.mxu0 0.0
        %2215 = vmatprep.subr.mxu0 0.0
        %2216 = vmatpush1.msra.mxu0 0.0
        %2217 = vmatprep.subr.mxu0 0.0
        %2218 = vmatpush1.msra.mxu0 0.0
        %2219 = vmatprep.subr.mxu0 0.0
        %2220 = vmatpush1.msra.mxu0 0.0
        %2221 = vmatprep.subr.mxu0 0.0
        %2222 = vmatpush1.msra.mxu0 0.0
        %2223 = vmatprep.subr.mxu0 0.0
        %2224 = vmatpush1.msra.mxu0 0.0
        %2225 = vmatprep.subr.mxu0 0.0
        %2226 = vmatpush1.msra.mxu0 0.0
        %2227 = vmatprep.subr.mxu0 0.0
        %2228 = vmatpush1.msra.mxu0 0.0
        %2229 = vmatprep.subr.mxu0 0.0
        %2230 = vmatpush1.msra.mxu0 0.0
        %2231 = vmatprep.subr.mxu0 0.0
        %2232 = vmatpush1.msra.mxu0 0.0
        %2233 = vmatprep.subr.mxu0 0.0
        %2234 = vmatpush1.msra.mxu0 0.0
        %2235 = vmatprep.subr.mxu0 0.0
        %2236 = vmatpush1.msra.mxu0 0.0
        %2237 = vmatprep.mubr.f32.mxu0 0.0
        %2238 = vmatmul.mubr.f32.gmra.mrb[0].mxu0 %v2171
        %v2239 = vpop.f32.mrb[0].mxu0
        %v2240 = vadd.f32 0.0, %v2239
        %v2241 = vpop.f32.mrb[0].mxu0
        %2242 = vdwg.mxu0
        %v2243 = vadd.f32 %v2165, %v2240
        %v2244 = vld [vmem:[%s13 + $0xc0] sm:$0xff]
        %v2245 = vld [vmem:[%s13 + $0xc8] sm:$0xff]
        %v2246 = vld [vmem:[%s13 + $0xd0] sm:$0xff]
        %v2247 = vld [vmem:[%s13 + $0xd8] sm:$0xff]
        %v2248 = vrot.slane %v628, 6
        %v2249 = vsel %vm1779, %v2248, 0
        %2251 = vmatprep.subr.mxu0 0.0
        %2252 = vmatpush1.msra.mxu0 %v2244
        %2253 = vmatprep.subr.mxu0 0.0
        %2254 = vmatpush1.msra.mxu0 %v2245
        %2255 = vmatprep.subr.mxu0 0.0
        %2256 = vmatpush1.msra.mxu0 %v2246
        %2257 = vmatprep.subr.mxu0 0.0
        %2258 = vmatpush1.msra.mxu0 %v2247
        %2259 = vmatprep.subr.mxu0 0.0
        %2260 = vmatpush1.msra.mxu0 0.0
        %2261 = vmatprep.subr.mxu0 0.0
        %2262 = vmatpush1.msra.mxu0 0.0
        %2263 = vmatprep.subr.mxu0 0.0
        %2264 = vmatpush1.msra.mxu0 0.0
        %2265 = vmatprep.subr.mxu0 0.0
        %2266 = vmatpush1.msra.mxu0 0.0
        %2267 = vmatprep.subr.mxu0 0.0
        %2268 = vmatpush1.msra.mxu0 0.0
        %2269 = vmatprep.subr.mxu0 0.0
        %2270 = vmatpush1.msra.mxu0 0.0
        %2271 = vmatprep.subr.mxu0 0.0
        %2272 = vmatpush1.msra.mxu0 0.0
        %2273 = vmatprep.subr.mxu0 0.0
        %2274 = vmatpush1.msra.mxu0 0.0
        %2275 = vmatprep.subr.mxu0 0.0
        %2276 = vmatpush1.msra.mxu0 0.0
        %2277 = vmatprep.subr.mxu0 0.0
        %2278 = vmatpush1.msra.mxu0 0.0
        %2279 = vmatprep.subr.mxu0 0.0
        %2280 = vmatpush1.msra.mxu0 0.0
        %2281 = vmatprep.subr.mxu0 0.0
        %2282 = vmatpush1.msra.mxu0 0.0
        %2283 = vmatprep.subr.mxu0 0.0
        %2284 = vmatpush1.msra.mxu0 0.0
        %2285 = vmatprep.subr.mxu0 0.0
        %2286 = vmatpush1.msra.mxu0 0.0
        %2287 = vmatprep.subr.mxu0 0.0
        %2288 = vmatpush1.msra.mxu0 0.0
        %2289 = vmatprep.subr.mxu0 0.0
        %2290 = vmatpush1.msra.mxu0 0.0
        %2291 = vmatprep.subr.mxu0 0.0
        %2292 = vmatpush1.msra.mxu0 0.0
        %2293 = vmatprep.subr.mxu0 0.0
        %2294 = vmatpush1.msra.mxu0 0.0
        %2295 = vmatprep.subr.mxu0 0.0
        %2296 = vmatpush1.msra.mxu0 0.0
        %2297 = vmatprep.subr.mxu0 0.0
        %2298 = vmatpush1.msra.mxu0 0.0
        %2299 = vmatprep.subr.mxu0 0.0
        %2300 = vmatpush1.msra.mxu0 0.0
        %2301 = vmatprep.subr.mxu0 0.0
        %2302 = vmatpush1.msra.mxu0 0.0
        %2303 = vmatprep.subr.mxu0 0.0
        %2304 = vmatpush1.msra.mxu0 0.0
        %2305 = vmatprep.subr.mxu0 0.0
        %2306 = vmatpush1.msra.mxu0 0.0
        %2307 = vmatprep.subr.mxu0 0.0
        %2308 = vmatpush1.msra.mxu0 0.0
        %2309 = vmatprep.subr.mxu0 0.0
        %2310 = vmatpush1.msra.mxu0 0.0
        %2311 = vmatprep.subr.mxu0 0.0
        %2312 = vmatpush1.msra.mxu0 0.0
        %2313 = vmatprep.subr.mxu0 0.0
        %2314 = vmatpush1.msra.mxu0 0.0
        %2315 = vmatprep.mubr.f32.mxu0 0.0
        %2316 = vmatmul.mubr.f32.gmra.mrb[0].mxu0 %v2249
        %v2317 = vpop.f32.mrb[0].mxu0
        %v2318 = vadd.f32 0.0, %v2317
        %v2319 = vpop.f32.mrb[0].mxu0
        %2320 = vdwg.mxu0
        %v2321 = vadd.f32 %v2243, %v2318
        %v2322 = vld [vmem:[%s13 + $0xe0] sm:$0xff]
        %v2323 = vld [vmem:[%s13 + $0xe8] sm:$0xff]
        %v2324 = vld [vmem:[%s13 + $0xf0] sm:$0xff]
        %v2325 = vld [vmem:[%s13 + $0xf8] sm:$0xff]
        %v2326 = vrot.slane %v628, 7
        %v2327 = vsel %vm1779, %v2326, 0
        %2329 = vmatprep.subr.mxu0 0.0
        %2330 = vmatpush1.msra.mxu0 %v2322
        %2331 = vmatprep.subr.mxu0 0.0
        %2332 = vmatpush1.msra.mxu0 %v2323
        %2333 = vmatprep.subr.mxu0 0.0
        %2334 = vmatpush1.msra.mxu0 %v2324
        %2335 = vmatprep.subr.mxu0 0.0
        %2336 = vmatpush1.msra.mxu0 %v2325
        %2337 = vmatprep.subr.mxu0 0.0
        %2338 = vmatpush1.msra.mxu0 0.0
        %2339 = vmatprep.subr.mxu0 0.0
        %2340 = vmatpush1.msra.mxu0 0.0
        %2341 = vmatprep.subr.mxu0 0.0
        %2342 = vmatpush1.msra.mxu0 0.0
        %2343 = vmatprep.subr.mxu0 0.0
        %2344 = vmatpush1.msra.mxu0 0.0
        %2345 = vmatprep.subr.mxu0 0.0
        %2346 = vmatpush1.msra.mxu0 0.0
        %2347 = vmatprep.subr.mxu0 0.0
        %2348 = vmatpush1.msra.mxu0 0.0
        %2349 = vmatprep.subr.mxu0 0.0
        %2350 = vmatpush1.msra.mxu0 0.0
        %2351 = vmatprep.subr.mxu0 0.0
        %2352 = vmatpush1.msra.mxu0 0.0
        %2353 = vmatprep.subr.mxu0 0.0
        %2354 = vmatpush1.msra.mxu0 0.0
        %2355 = vmatprep.subr.mxu0 0.0
        %2356 = vmatpush1.msra.mxu0 0.0
        %2357 = vmatprep.subr.mxu0 0.0
        %2358 = vmatpush1.msra.mxu0 0.0
        %2359 = vmatprep.subr.mxu0 0.0
        %2360 = vmatpush1.msra.mxu0 0.0
        %2361 = vmatprep.subr.mxu0 0.0
        %2362 = vmatpush1.msra.mxu0 0.0
        %2363 = vmatprep.subr.mxu0 0.0
        %2364 = vmatpush1.msra.mxu0 0.0
        %2365 = vmatprep.subr.mxu0 0.0
        %2366 = vmatpush1.msra.mxu0 0.0
        %2367 = vmatprep.subr.mxu0 0.0
        %2368 = vmatpush1.msra.mxu0 0.0
        %2369 = vmatprep.subr.mxu0 0.0
        %2370 = vmatpush1.msra.mxu0 0.0
        %2371 = vmatprep.subr.mxu0 0.0
        %2372 = vmatpush1.msra.mxu0 0.0
        %2373 = vmatprep.subr.mxu0 0.0
        %2374 = vmatpush1.msra.mxu0 0.0
        %2375 = vmatprep.subr.mxu0 0.0
        %2376 = vmatpush1.msra.mxu0 0.0
        %2377 = vmatprep.subr.mxu0 0.0
        %2378 = vmatpush1.msra.mxu0 0.0
        %2379 = vmatprep.subr.mxu0 0.0
        %2380 = vmatpush1.msra.mxu0 0.0
        %2381 = vmatprep.subr.mxu0 0.0
        %2382 = vmatpush1.msra.mxu0 0.0
        %2383 = vmatprep.subr.mxu0 0.0
        %2384 = vmatpush1.msra.mxu0 0.0
        %2385 = vmatprep.subr.mxu0 0.0
        %2386 = vmatpush1.msra.mxu0 0.0
        %2387 = vmatprep.subr.mxu0 0.0
        %2388 = vmatpush1.msra.mxu0 0.0
        %2389 = vmatprep.subr.mxu0 0.0
        %2390 = vmatpush1.msra.mxu0 0.0
        %2391 = vmatprep.subr.mxu0 0.0
        %2392 = vmatpush1.msra.mxu0 0.0
        %2393 = vmatprep.mubr.f32.mxu0 0.0
        %2394 = vmatmul.mubr.f32.gmra.mrb[0].mxu0 %v2327
        %v2395 = vpop.f32.mrb[0].mxu0
        %v2396 = vadd.f32 0.0, %v2395
        %v2397 = vpop.f32.mrb[0].mxu0
        %2398 = vdwg.mxu0
        %v2399 = vadd.f32 %v2321, %v2396
        %2400 = vst [vmem:[%s560] sm:$0x1] %v2399
        %s2401 = sand.u32 %s361, 1
        %s2402 = scalar_lea.sflag [#allocation4], %s2401
        %s2403 = sand.u32 %s361, 1
        %s2404 = scalar_lea.vmem [#allocation13], %s2403
        // Predicated region
        $region112: #{model_forward.1} parent=79 // pred_check
          %p2405 = pneg %p371
        $region113: #{model_forward.1} parent=79 // pred_check_branch
          %2407 = sbr.rel (%p2405) target = $region115
        $region114: #{model_forward.1} parent=79 // pred_region
          %s2409 = ssub.s32 16, 16
          %2410 = vsyncadd %s2402, %s2409
          %s2411 = smul.addr %s33, 16
          %s2412 = scalar_lea.hbm %s15, %s2411
          %s2414 = sshll.u32 %s2404, 4
          %s2415 = int_to_ptr.vmem [resolvable:$true] %s2414
          %2417 = dma.vmem_to_hbm [thread:$0]  %s2415, 16, %s2412, %s2402
        $region115: #{model_forward.1} parent=79 // pred_fallthru
          _
      $region80: #{model_forward.1} parent=5 // pred_fallthru
        _
      %p2418 = scmp.le.s32.totalorder 2, %s28
      // Predicated region
      $region116: #{model_forward.1} parent=5 // pred_check
        %p2419 = pneg %p2418
      $region117: #{model_forward.1} parent=5 // pred_check_branch
        %2421 = sbr.rel (%p2419) target = $region119
      $region118: #{model_forward.1} parent=5 // pred_region
        %s2422 = ssub.s32 %s28, 2
        // Predicated region
        $region120: #{model_forward.1} parent=118 // pred_check
          %p2423 = pneg %p377
        $region121: #{model_forward.1} parent=118 // pred_check_branch
          %2425 = sbr.rel (%p2423) target = $region123
        $region122: #{model_forward.1} parent=118 // pred_region
          %s2426 = sand.u32 %s362, 1
          %s2427 = scalar_lea.sflag [#allocation4], %s2426
          %s2428 = sand.u32 %s362, 1
          %s2429 = scalar_lea.vmem [#allocation13], %s2428
          %2430 = dma.done %s2427, 16
        $region123: #{model_forward.1} parent=118 // pred_fallthru
          _
      $region119: #{model_forward.1} parent=5 // pred_fallthru
        _
    $region6: #{model_forward.1} parent=1 // loop_footer
      %s32 = sadd.s32 1, %s28
    $region7: #{model_forward.1} parent=1 // loop_footer_branch
      %27 = sbr.rel target = $region3
    $region8: #{model_forward.1} parent=1 // loop_exit
      _
    %2431 = vsyncpa [#allocation3], 1
    %s2432 = scalar_lea.sflag [#allocation3], 1
    %2433 = vsyncpa %s2432, 1
    %2434 = vsyncpa [#allocation6], 1
    %2435 = vsyncpa [#allocation9], 1
    %2436 = vsyncpa [#allocation12], 1
    %2437 = vsyncpa [#allocation4], 1
    %s2438 = scalar_lea.sflag [#allocation4], 1
    %2439 = vsyncpa %s2438, 1

</llo_original>
